<compile_context>
chip_gen: v7x
topology: tpu7x:2x2x1
jax: 0.10.0
libtpu: 0.0.40
codegen_flags: <defaults>
</compile_context>

<pallas_src>
import functools

import jax
import jax.numpy as jnp
from jax.experimental import pallas as pl
from jax.experimental.pallas import tpu as pltpu

KERNEL_SIZE = 11
SIGMA = 1.5
C1 = 0.01 ** 2
C2 = 0.03 ** 2


# ----------------------------------------------------------------------------
# Deterministic parameter setup (equivalent to SSIMLoss._create_gaussian_kernel,
# F.avg_pool2d(2) and F.interpolate(bilinear, align_corners=False))
# ----------------------------------------------------------------------------
def gaussian_1d(kernel_size: int = KERNEL_SIZE, sigma: float = SIGMA) -> jnp.ndarray:
    start = (1 - kernel_size) / 2
    coords = jnp.arange(start, start + kernel_size, dtype=jnp.float32)
    k = jnp.exp(-((coords / sigma) ** 2) / 2.0)
    return k / jnp.sum(k)


def band_matrix(n: int, k1: jnp.ndarray, kernel_size: int = KERNEL_SIZE) -> jnp.ndarray:
    """Banded matrix B with B[i, j] = k1[j - i + pad] (zero outside the band).

    Left-multiplying a plane by B blurs along rows with zero padding;
    right-multiplying blurs along columns (the gaussian is symmetric).  This
    reproduces F.conv2d(padding=k//2, groups=C) semantics exactly.
    """
    pad = kernel_size // 2
    i = jnp.arange(n)[:, None]
    j = jnp.arange(n)[None, :]
    d = j - i + pad
    valid = (d >= 0) & (d < kernel_size)
    return jnp.where(valid, k1[jnp.clip(d, 0, kernel_size - 1)], 0.0).astype(jnp.float32)


def bilinear_matrix(out_size: int, in_size: int) -> jnp.ndarray:
    """Row-interpolation matrix for F.interpolate(mode='bilinear', align_corners=False)."""
    if out_size == in_size:
        return jnp.eye(out_size, dtype=jnp.float32)
    j = jnp.arange(out_size, dtype=jnp.float32)
    src = (j + 0.5) * (in_size / out_size) - 0.5
    src = jnp.clip(src, 0.0, in_size - 1)
    i0 = jnp.floor(src).astype(jnp.int32)
    i1 = jnp.minimum(i0 + 1, in_size - 1)
    lam = src - i0.astype(jnp.float32)
    r = jnp.arange(out_size)
    m = jnp.zeros((out_size, in_size), dtype=jnp.float32)
    m = m.at[r, i0].add(1.0 - lam)
    m = m.at[r, i1].add(lam)
    return m


def avg_pool_matrix(in_size: int) -> jnp.ndarray:
    """(in//2, in) matrix averaging adjacent index pairs (F.avg_pool2d(2) per axis)."""
    out = in_size // 2
    i = jnp.arange(out)
    m = jnp.zeros((out, in_size), dtype=jnp.float32)
    m = m.at[i, 2 * i].set(0.5)
    m = m.at[i, 2 * i + 1].set(0.5)
    return m


# ----------------------------------------------------------------------------
# Fused MS-SSIM kernel: one grid step == one (B*C) plane, all scales in-kernel
# ----------------------------------------------------------------------------
def _blur5(x, y, rh, rw):
    """Gaussian-blurred moments ux, uy, uxx, uyy, uxy of one (h, w) plane."""
    h = x.shape[0]
    ops = (x, y, x * x, y * y, x * y)
    if h % 8 == 0:
        # Fused column blur: single (5h, w) @ (w, w) MXU matmul for all five
        # operands, then five sublane-aligned row-blur matmuls.
        s = jnp.concatenate(ops, axis=0)
        u = jnp.dot(s, rw, preferred_element_type=jnp.float32)
        return tuple(
            jnp.dot(rh, u[f * h:(f + 1) * h, :], preferred_element_type=jnp.float32)
            for f in range(5)
        )
    # Tiny coarse scales (h not a multiple of 8): per-operand blurs.
    return tuple(
        jnp.dot(rh, jnp.dot(op, rw, preferred_element_type=jnp.float32),
                preferred_element_type=jnp.float32)
        for op in ops
    )


def _make_msssim_kernel(num_scales: int):
    def kernel(x_ref, y_ref, *rest):
        out_ref = rest[-1]
        w_it = iter(rest[:-1])

        x = x_ref[0]  # (H, W) of the current plane
        y = y_ref[0]

        cs_acc = None
        l_map = None
        for s in range(num_scales):
            rh = next(w_it)[...]
            rw = next(w_it)[...]

            ux, uy, uxx, uyy, uxy = _blur5(x, y, rh, rw)
            vx = uxx - ux * ux
            vy = uyy - uy * uy
            vxy = uxy - ux * uy
            # Exact f32 division (matches PyTorch; avoids approx-reciprocal error
            # flagged in review, especially on the l_map that scales the output).
            cs = (2.0 * vxy + C2) / (vx + vy + C2)

            if s == 0:
                l_map = (2.0 * ux * uy + C1) / (ux * ux + uy * uy + C1)
                cs_acc = cs
            else:
                uh = next(w_it)[...]   # (H, h_s)
                uwt = next(w_it)[...]  # (w_s, W)
                cs_up = jnp.dot(
                    jnp.dot(uh, cs, preferred_element_type=jnp.float32),
                    uwt, preferred_element_type=jnp.float32)
                cs_acc = cs_acc + cs_up

            if s < num_scales - 1:
                ph = next(w_it)[...]   # (h//2, h)
                pwt = next(w_it)[...]  # (w, w//2)
                x = jnp.dot(jnp.dot(ph, x, preferred_element_type=jnp.float32),
                            pwt, preferred_element_type=jnp.float32)
                y = jnp.dot(jnp.dot(ph, y, preferred_element_type=jnp.float32),
                            pwt, preferred_element_type=jnp.float32)

        msssim = (cs_acc * (1.0 / num_scales)) * l_map
        out_ref[0] = (1.0 - msssim).astype(out_ref.dtype)

    return kernel


# ----------------------------------------------------------------------------
# MSSSIM.forward
# ----------------------------------------------------------------------------
@functools.partial(jax.jit, static_argnames=("num_scales", "as_loss"))
def msssim_forward(img_1: jnp.ndarray, img_2: jnp.ndarray,
                   num_scales: int = 4, as_loss: bool = False) -> jnp.ndarray:
    B, C, H, W = img_1.shape
    n = B * C

    x = img_1.astype(jnp.float32).reshape(n, H, W)
    y = img_2.astype(jnp.float32).reshape(n, H, W)

    k1 = gaussian_1d()

    # Per-scale weight matrices, in exactly the order the kernel consumes them.
    weights = []
    h, w = H, W
    flops = 0
    for s in range(num_scales):
        weights.append(band_matrix(h, k1))             # rh_s   (h, h)
        weights.append(band_matrix(w, k1))             # rw_s   (w, w)
        flops += 2 * (5 * h) * w * w                   # fused column blurs
        flops += 5 * 2 * h * h * w                     # row blurs
        if s > 0:
            weights.append(bilinear_matrix(H, h))      # uh_s   (H, h)
            weights.append(bilinear_matrix(W, w).T)    # uwt_s  (w, W)
            flops += 2 * H * h * w + 2 * H * w * W
        if s < num_scales - 1:
            weights.append(avg_pool_matrix(h))         # ph_s   (h//2, h)
            weights.append(avg_pool_matrix(w).T)       # pwt_s  (w, w//2)
            flops += 2 * (2 * (h // 2) * h * w + 2 * (h // 2) * w * (w // 2))
            h, w = h // 2, w // 2
    flops *= n
    bytes_accessed = (3 * n * H * W + sum(int(wt.size) for wt in weights)) * 4

    plane_spec = pl.BlockSpec((1, H, W), lambda i: (i, 0, 0))
    weight_specs = [pl.BlockSpec(wt.shape, lambda i: (0, 0)) for wt in weights]

    one_minus = pl.pallas_call(
        _make_msssim_kernel(num_scales),
        out_shape=jax.ShapeDtypeStruct((n, H, W), jnp.float32),
        grid_spec=pltpu.PrefetchScalarGridSpec(
            num_scalar_prefetch=0,
            grid=(n,),
            in_specs=[plane_spec, plane_spec] + weight_specs,
            out_specs=pl.BlockSpec((1, H, W), lambda i: (i, 0, 0)),
        ),
        compiler_params=pltpu.CompilerParams(
            dimension_semantics=("parallel",),
            vmem_limit_bytes=32 * 1024 * 1024,
        ),
        cost_estimate=pl.CostEstimate(
            flops=flops, transcendentals=0, bytes_accessed=bytes_accessed),
    )(x, y, *weights)

    per_plane = one_minus.reshape(B, C, H, W)          # 1 - msssim_map
    if as_loss:
        return jnp.mean(per_plane)
    # mean over channel axis, keep a singleton channel dim -> (B, 1, H, W)
    return jnp.mean(per_plane, axis=1, keepdims=True)


if __name__ == "__main__":
    # SSIMLoss builds its gaussian kernel with groups=3, so channels must be 3.
    B, C, H, W = 2, 3, 32, 32
    key = jax.random.PRNGKey(0)
    k1, k2 = jax.random.split(key)
    img_1 = jax.random.uniform(k1, (B, C, H, W), dtype=jnp.float32)
    img_2 = jax.random.uniform(k2, (B, C, H, W), dtype=jnp.float32)

    out = msssim_forward(img_1, img_2, num_scales=4, as_loss=False)
    out = jax.block_until_ready(out)

    assert out.shape == (B, 1, H, W), out.shape
    assert bool(jnp.all(jnp.isfinite(out)))

    loss = jax.block_until_ready(msssim_forward(img_1, img_2, num_scales=4, as_loss=True))
    assert loss.shape == (), loss.shape
    assert bool(jnp.isfinite(loss))

    print("KERNEL_OK")
</pallas_src>

<mosaic_0001>
module attributes {stable_mosaic.version = 11 : i64} {
  func.func private @main(%arg0: i32) attributes {dimension_semantics = [#tpu.dimension_semantics<core_parallel>], iteration_bounds = array<i64: 2>, tpu.core_type = #tpu.core_type<sc_scalar_subcore>, window_params = []} {
    return
  }
}

module attributes {stable_mosaic.version = 11 : i64} {
  func.func private @main(%arg0: i32) attributes {dimension_semantics = [#tpu.dimension_semantics<core_parallel>], iteration_bounds = array<i64: 2>, tpu.core_type = #tpu.core_type<sc_scalar_subcore>, window_params = []} {
    return
  }
}

module attributes {stable_mosaic.version = 11 : i64} {
  func.func @kernel(%arg0: i32, %arg1: memref<1x32x32xf32, #tpu.memory_space<vmem>>, %arg2: memref<1x32x32xf32, #tpu.memory_space<vmem>>, %arg3: memref<32x32xf32, #tpu.memory_space<vmem>>, %arg4: memref<32x32xf32, #tpu.memory_space<vmem>>, %arg5: memref<16x32xf32, #tpu.memory_space<vmem>>, %arg6: memref<32x16xf32, #tpu.memory_space<vmem>>, %arg7: memref<16x16xf32, #tpu.memory_space<vmem>>, %arg8: memref<16x16xf32, #tpu.memory_space<vmem>>, %arg9: memref<32x16xf32, #tpu.memory_space<vmem>>, %arg10: memref<16x32xf32, #tpu.memory_space<vmem>>, %arg11: memref<8x16xf32, #tpu.memory_space<vmem>>, %arg12: memref<16x8xf32, #tpu.memory_space<vmem>>, %arg13: memref<8x8xf32, #tpu.memory_space<vmem>>, %arg14: memref<8x8xf32, #tpu.memory_space<vmem>>, %arg15: memref<32x8xf32, #tpu.memory_space<vmem>>, %arg16: memref<8x32xf32, #tpu.memory_space<vmem>>, %arg17: memref<4x8xf32, #tpu.memory_space<vmem>>, %arg18: memref<8x4xf32, #tpu.memory_space<vmem>>, %arg19: memref<4x4xf32, #tpu.memory_space<vmem>>, %arg20: memref<4x4xf32, #tpu.memory_space<vmem>>, %arg21: memref<32x4xf32, #tpu.memory_space<vmem>>, %arg22: memref<4x32xf32, #tpu.memory_space<vmem>>, %arg23: memref<1x32x32xf32, #tpu.memory_space<vmem>>) attributes {dimension_semantics = [#tpu.dimension_semantics<parallel>], iteration_bounds = array<i64: 6>, scalar_prefetch = 0 : i64, scratch_operands = 0 : i64, tpu.core_type = #tpu.core_type<tc>, window_params = [{transform_indices = @transform_0, window_bounds = array<i64: 1, 32, 32>}, {transform_indices = @transform_1, window_bounds = array<i64: 1, 32, 32>}, {pipeline_mode = #tpu.pipeline_mode<synchronous>, transform_indices = @transform_2, window_bounds = array<i64: 32, 32>}, {pipeline_mode = #tpu.pipeline_mode<synchronous>, transform_indices = @transform_3, window_bounds = array<i64: 32, 32>}, {pipeline_mode = #tpu.pipeline_mode<synchronous>, transform_indices = @transform_4, window_bounds = array<i64: 16, 32>}, {pipeline_mode = #tpu.pipeline_mode<synchronous>, transform_indices = @transform_5, window_bounds = array<i64: 32, 16>}, {pipeline_mode = #tpu.pipeline_mode<synchronous>, transform_indices = @transform_6, window_bounds = array<i64: 16, 16>}, {pipeline_mode = #tpu.pipeline_mode<synchronous>, transform_indices = @transform_7, window_bounds = array<i64: 16, 16>}, {pipeline_mode = #tpu.pipeline_mode<synchronous>, transform_indices = @transform_8, window_bounds = array<i64: 32, 16>}, {pipeline_mode = #tpu.pipeline_mode<synchronous>, transform_indices = @transform_9, window_bounds = array<i64: 16, 32>}, {pipeline_mode = #tpu.pipeline_mode<synchronous>, transform_indices = @transform_10, window_bounds = array<i64: 8, 16>}, {pipeline_mode = #tpu.pipeline_mode<synchronous>, transform_indices = @transform_11, window_bounds = array<i64: 16, 8>}, {pipeline_mode = #tpu.pipeline_mode<synchronous>, transform_indices = @transform_12, window_bounds = array<i64: 8, 8>}, {pipeline_mode = #tpu.pipeline_mode<synchronous>, transform_indices = @transform_13, window_bounds = array<i64: 8, 8>}, {pipeline_mode = #tpu.pipeline_mode<synchronous>, transform_indices = @transform_14, window_bounds = array<i64: 32, 8>}, {pipeline_mode = #tpu.pipeline_mode<synchronous>, transform_indices = @transform_15, window_bounds = array<i64: 8, 32>}, {pipeline_mode = #tpu.pipeline_mode<synchronous>, transform_indices = @transform_16, window_bounds = array<i64: 4, 8>}, {pipeline_mode = #tpu.pipeline_mode<synchronous>, transform_indices = @transform_17, window_bounds = array<i64: 8, 4>}, {pipeline_mode = #tpu.pipeline_mode<synchronous>, transform_indices = @transform_18, window_bounds = array<i64: 4, 4>}, {pipeline_mode = #tpu.pipeline_mode<synchronous>, transform_indices = @transform_19, window_bounds = array<i64: 4, 4>}, {pipeline_mode = #tpu.pipeline_mode<synchronous>, transform_indices = @transform_20, window_bounds = array<i64: 32, 4>}, {pipeline_mode = #tpu.pipeline_mode<synchronous>, transform_indices = @transform_21, window_bounds = array<i64: 4, 32>}, {transform_indices = @transform_22, window_bounds = array<i64: 1, 32, 32>}]} {
    %c0 = arith.constant 0 : index
    %c0_0 = arith.constant 0 : index
    %c0_1 = arith.constant 0 : index
    %0 = vector.load %arg1[%c0, %c0_0, %c0_1] : memref<1x32x32xf32, #tpu.memory_space<vmem>>, vector<1x32x32xf32>
    %1 = vector.shape_cast %0 : vector<1x32x32xf32> to vector<32x32xf32>
    %c0_2 = arith.constant 0 : index
    %c0_3 = arith.constant 0 : index
    %c0_4 = arith.constant 0 : index
    %2 = vector.load %arg2[%c0_2, %c0_3, %c0_4] : memref<1x32x32xf32, #tpu.memory_space<vmem>>, vector<1x32x32xf32>
    %3 = vector.shape_cast %2 : vector<1x32x32xf32> to vector<32x32xf32>
    %c0_5 = arith.constant 0 : index
    %c0_6 = arith.constant 0 : index
    %4 = vector.load %arg3[%c0_5, %c0_6] : memref<32x32xf32, #tpu.memory_space<vmem>>, vector<32x32xf32>
    %c0_7 = arith.constant 0 : index
    %c0_8 = arith.constant 0 : index
    %5 = vector.load %arg4[%c0_7, %c0_8] : memref<32x32xf32, #tpu.memory_space<vmem>>, vector<32x32xf32>
    %6 = arith.mulf %1, %1 : vector<32x32xf32>
    %7 = arith.mulf %3, %3 : vector<32x32xf32>
    %8 = arith.mulf %1, %3 : vector<32x32xf32>
    %9 = tpu.concatenate %1, %3, %6, %7, %8 in 0 : vector<32x32xf32>, vector<32x32xf32>, vector<32x32xf32>, vector<32x32xf32>, vector<32x32xf32> -> vector<160x32xf32>
    %cst = arith.constant dense<0.000000e+00> : vector<160x32xf32>
    %10 = tpu.matmul %9, %5, %cst {dimension_numbers = #tpu.dot_dimension_numbers<[1], [0], [0], [1], [0, 0, 1, 1], [], []>} : vector<160x32xf32>, vector<32x32xf32>, vector<160x32xf32> -> vector<160x32xf32>
    %11 = vector.extract_strided_slice %10 {offsets = [0, 0], sizes = [32, 32], strides = [1, 1]} : vector<160x32xf32> to vector<32x32xf32>
    %cst_9 = arith.constant dense<0.000000e+00> : vector<32x32xf32>
    %12 = tpu.matmul %4, %11, %cst_9 {dimension_numbers = #tpu.dot_dimension_numbers<[1], [0], [0], [1], [0, 0, 1, 1], [], []>} : vector<32x32xf32>, vector<32x32xf32>, vector<32x32xf32> -> vector<32x32xf32>
    %13 = vector.extract_strided_slice %10 {offsets = [32, 0], sizes = [32, 32], strides = [1, 1]} : vector<160x32xf32> to vector<32x32xf32>
    %cst_10 = arith.constant dense<0.000000e+00> : vector<32x32xf32>
    %14 = tpu.matmul %4, %13, %cst_10 {dimension_numbers = #tpu.dot_dimension_numbers<[1], [0], [0], [1], [0, 0, 1, 1], [], []>} : vector<32x32xf32>, vector<32x32xf32>, vector<32x32xf32> -> vector<32x32xf32>
    %15 = vector.extract_strided_slice %10 {offsets = [64, 0], sizes = [32, 32], strides = [1, 1]} : vector<160x32xf32> to vector<32x32xf32>
    %cst_11 = arith.constant dense<0.000000e+00> : vector<32x32xf32>
    %16 = tpu.matmul %4, %15, %cst_11 {dimension_numbers = #tpu.dot_dimension_numbers<[1], [0], [0], [1], [0, 0, 1, 1], [], []>} : vector<32x32xf32>, vector<32x32xf32>, vector<32x32xf32> -> vector<32x32xf32>
    %17 = vector.extract_strided_slice %10 {offsets = [96, 0], sizes = [32, 32], strides = [1, 1]} : vector<160x32xf32> to vector<32x32xf32>
    %cst_12 = arith.constant dense<0.000000e+00> : vector<32x32xf32>
    %18 = tpu.matmul %4, %17, %cst_12 {dimension_numbers = #tpu.dot_dimension_numbers<[1], [0], [0], [1], [0, 0, 1, 1], [], []>} : vector<32x32xf32>, vector<32x32xf32>, vector<32x32xf32> -> vector<32x32xf32>
    %19 = vector.extract_strided_slice %10 {offsets = [128, 0], sizes = [32, 32], strides = [1, 1]} : vector<160x32xf32> to vector<32x32xf32>
    %cst_13 = arith.constant dense<0.000000e+00> : vector<32x32xf32>
    %20 = tpu.matmul %4, %19, %cst_13 {dimension_numbers = #tpu.dot_dimension_numbers<[1], [0], [0], [1], [0, 0, 1, 1], [], []>} : vector<32x32xf32>, vector<32x32xf32>, vector<32x32xf32> -> vector<32x32xf32>
    %21 = arith.mulf %12, %12 : vector<32x32xf32>
    %22 = arith.subf %16, %21 : vector<32x32xf32>
    %23 = arith.mulf %14, %14 : vector<32x32xf32>
    %24 = arith.subf %18, %23 : vector<32x32xf32>
    %25 = arith.mulf %12, %14 : vector<32x32xf32>
    %26 = arith.subf %20, %25 : vector<32x32xf32>
    %cst_14 = arith.constant 2.000000e+00 : f32
    %27 = vector.broadcast %cst_14 : f32 to vector<32x32xf32>
    %28 = arith.mulf %27, %26 : vector<32x32xf32>
    %cst_15 = arith.constant 8.99999984E-4 : f32
    %29 = vector.broadcast %cst_15 : f32 to vector<32x32xf32>
    %30 = arith.addf %28, %29 : vector<32x32xf32>
    %31 = arith.addf %22, %24 : vector<32x32xf32>
    %cst_16 = arith.constant 8.99999984E-4 : f32
    %32 = vector.broadcast %cst_16 : f32 to vector<32x32xf32>
    %33 = arith.addf %31, %32 : vector<32x32xf32>
    %34 = arith.divf %30, %33 : vector<32x32xf32>
    %cst_17 = arith.constant 2.000000e+00 : f32
    %35 = vector.broadcast %cst_17 : f32 to vector<32x32xf32>
    %36 = arith.mulf %35, %12 : vector<32x32xf32>
    %37 = arith.mulf %36, %14 : vector<32x32xf32>
    %cst_18 = arith.constant 9.99999974E-5 : f32
    %38 = vector.broadcast %cst_18 : f32 to vector<32x32xf32>
    %39 = arith.addf %37, %38 : vector<32x32xf32>
    %40 = arith.mulf %12, %12 : vector<32x32xf32>
    %41 = arith.mulf %14, %14 : vector<32x32xf32>
    %42 = arith.addf %40, %41 : vector<32x32xf32>
    %cst_19 = arith.constant 9.99999974E-5 : f32
    %43 = vector.broadcast %cst_19 : f32 to vector<32x32xf32>
    %44 = arith.addf %42, %43 : vector<32x32xf32>
    %45 = arith.divf %39, %44 : vector<32x32xf32>
    %c0_20 = arith.constant 0 : index
    %c0_21 = arith.constant 0 : index
    %46 = vector.load %arg5[%c0_20, %c0_21] : memref<16x32xf32, #tpu.memory_space<vmem>>, vector<16x32xf32>
    %c0_22 = arith.constant 0 : index
    %c0_23 = arith.constant 0 : index
    %47 = vector.load %arg6[%c0_22, %c0_23] : memref<32x16xf32, #tpu.memory_space<vmem>>, vector<32x16xf32>
    %cst_24 = arith.constant dense<0.000000e+00> : vector<16x32xf32>
    %48 = tpu.matmul %46, %1, %cst_24 {dimension_numbers = #tpu.dot_dimension_numbers<[1], [0], [0], [1], [0, 0, 1, 1], [], []>} : vector<16x32xf32>, vector<32x32xf32>, vector<16x32xf32> -> vector<16x32xf32>
    %cst_25 = arith.constant dense<0.000000e+00> : vector<16x16xf32>
    %49 = tpu.matmul %48, %47, %cst_25 {dimension_numbers = #tpu.dot_dimension_numbers<[1], [0], [0], [1], [0, 0, 1, 1], [], []>} : vector<16x32xf32>, vector<32x16xf32>, vector<16x16xf32> -> vector<16x16xf32>
    %cst_26 = arith.constant dense<0.000000e+00> : vector<16x32xf32>
    %50 = tpu.matmul %46, %3, %cst_26 {dimension_numbers = #tpu.dot_dimension_numbers<[1], [0], [0], [1], [0, 0, 1, 1], [], []>} : vector<16x32xf32>, vector<32x32xf32>, vector<16x32xf32> -> vector<16x32xf32>
    %cst_27 = arith.constant dense<0.000000e+00> : vector<16x16xf32>
    %51 = tpu.matmul %50, %47, %cst_27 {dimension_numbers = #tpu.dot_dimension_numbers<[1], [0], [0], [1], [0, 0, 1, 1], [], []>} : vector<16x32xf32>, vector<32x16xf32>, vector<16x16xf32> -> vector<16x16xf32>
    %c0_28 = arith.constant 0 : index
    %c0_29 = arith.constant 0 : index
    %52 = vector.load %arg7[%c0_28, %c0_29] : memref<16x16xf32, #tpu.memory_space<vmem>>, vector<16x16xf32>
    %c0_30 = arith.constant 0 : index
    %c0_31 = arith.constant 0 : index
    %53 = vector.load %arg8[%c0_30, %c0_31] : memref<16x16xf32, #tpu.memory_space<vmem>>, vector<16x16xf32>
    %54 = arith.mulf %49, %49 : vector<16x16xf32>
    %55 = arith.mulf %51, %51 : vector<16x16xf32>
    %56 = arith.mulf %49, %51 : vector<16x16xf32>
    %57 = tpu.concatenate %49, %51, %54, %55, %56 in 0 : vector<16x16xf32>, vector<16x16xf32>, vector<16x16xf32>, vector<16x16xf32>, vector<16x16xf32> -> vector<80x16xf32>
    %cst_32 = arith.constant dense<0.000000e+00> : vector<80x16xf32>
    %58 = tpu.matmul %57, %53, %cst_32 {dimension_numbers = #tpu.dot_dimension_numbers<[1], [0], [0], [1], [0, 0, 1, 1], [], []>} : vector<80x16xf32>, vector<16x16xf32>, vector<80x16xf32> -> vector<80x16xf32>
    %59 = vector.extract_strided_slice %58 {offsets = [0, 0], sizes = [16, 16], strides = [1, 1]} : vector<80x16xf32> to vector<16x16xf32>
    %cst_33 = arith.constant dense<0.000000e+00> : vector<16x16xf32>
    %60 = tpu.matmul %52, %59, %cst_33 {dimension_numbers = #tpu.dot_dimension_numbers<[1], [0], [0], [1], [0, 0, 1, 1], [], []>} : vector<16x16xf32>, vector<16x16xf32>, vector<16x16xf32> -> vector<16x16xf32>
    %61 = vector.extract_strided_slice %58 {offsets = [16, 0], sizes = [16, 16], strides = [1, 1]} : vector<80x16xf32> to vector<16x16xf32>
    %cst_34 = arith.constant dense<0.000000e+00> : vector<16x16xf32>
    %62 = tpu.matmul %52, %61, %cst_34 {dimension_numbers = #tpu.dot_dimension_numbers<[1], [0], [0], [1], [0, 0, 1, 1], [], []>} : vector<16x16xf32>, vector<16x16xf32>, vector<16x16xf32> -> vector<16x16xf32>
    %63 = vector.extract_strided_slice %58 {offsets = [32, 0], sizes = [16, 16], strides = [1, 1]} : vector<80x16xf32> to vector<16x16xf32>
    %cst_35 = arith.constant dense<0.000000e+00> : vector<16x16xf32>
    %64 = tpu.matmul %52, %63, %cst_35 {dimension_numbers = #tpu.dot_dimension_numbers<[1], [0], [0], [1], [0, 0, 1, 1], [], []>} : vector<16x16xf32>, vector<16x16xf32>, vector<16x16xf32> -> vector<16x16xf32>
    %65 = vector.extract_strided_slice %58 {offsets = [48, 0], sizes = [16, 16], strides = [1, 1]} : vector<80x16xf32> to vector<16x16xf32>
    %cst_36 = arith.constant dense<0.000000e+00> : vector<16x16xf32>
    %66 = tpu.matmul %52, %65, %cst_36 {dimension_numbers = #tpu.dot_dimension_numbers<[1], [0], [0], [1], [0, 0, 1, 1], [], []>} : vector<16x16xf32>, vector<16x16xf32>, vector<16x16xf32> -> vector<16x16xf32>
    %67 = vector.extract_strided_slice %58 {offsets = [64, 0], sizes = [16, 16], strides = [1, 1]} : vector<80x16xf32> to vector<16x16xf32>
    %cst_37 = arith.constant dense<0.000000e+00> : vector<16x16xf32>
    %68 = tpu.matmul %52, %67, %cst_37 {dimension_numbers = #tpu.dot_dimension_numbers<[1], [0], [0], [1], [0, 0, 1, 1], [], []>} : vector<16x16xf32>, vector<16x16xf32>, vector<16x16xf32> -> vector<16x16xf32>
    %69 = arith.mulf %60, %60 : vector<16x16xf32>
    %70 = arith.subf %64, %69 : vector<16x16xf32>
    %71 = arith.mulf %62, %62 : vector<16x16xf32>
    %72 = arith.subf %66, %71 : vector<16x16xf32>
    %73 = arith.mulf %60, %62 : vector<16x16xf32>
    %74 = arith.subf %68, %73 : vector<16x16xf32>
    %cst_38 = arith.constant 2.000000e+00 : f32
    %75 = vector.broadcast %cst_38 : f32 to vector<16x16xf32>
    %76 = arith.mulf %75, %74 : vector<16x16xf32>
    %cst_39 = arith.constant 8.99999984E-4 : f32
    %77 = vector.broadcast %cst_39 : f32 to vector<16x16xf32>
    %78 = arith.addf %76, %77 : vector<16x16xf32>
    %79 = arith.addf %70, %72 : vector<16x16xf32>
    %cst_40 = arith.constant 8.99999984E-4 : f32
    %80 = vector.broadcast %cst_40 : f32 to vector<16x16xf32>
    %81 = arith.addf %79, %80 : vector<16x16xf32>
    %82 = arith.divf %78, %81 : vector<16x16xf32>
    %c0_41 = arith.constant 0 : index
    %c0_42 = arith.constant 0 : index
    %83 = vector.load %arg9[%c0_41, %c0_42] : memref<32x16xf32, #tpu.memory_space<vmem>>, vector<32x16xf32>
    %c0_43 = arith.constant 0 : index
    %c0_44 = arith.constant 0 : index
    %84 = vector.load %arg10[%c0_43, %c0_44] : memref<16x32xf32, #tpu.memory_space<vmem>>, vector<16x32xf32>
    %cst_45 = arith.constant dense<0.000000e+00> : vector<32x16xf32>
    %85 = tpu.matmul %83, %82, %cst_45 {dimension_numbers = #tpu.dot_dimension_numbers<[1], [0], [0], [1], [0, 0, 1, 1], [], []>} : vector<32x16xf32>, vector<16x16xf32>, vector<32x16xf32> -> vector<32x16xf32>
    %cst_46 = arith.constant dense<0.000000e+00> : vector<32x32xf32>
    %86 = tpu.matmul %85, %84, %cst_46 {dimension_numbers = #tpu.dot_dimension_numbers<[1], [0], [0], [1], [0, 0, 1, 1], [], []>} : vector<32x16xf32>, vector<16x32xf32>, vector<32x32xf32> -> vector<32x32xf32>
    %87 = arith.addf %34, %86 : vector<32x32xf32>
    %c0_47 = arith.constant 0 : index
    %c0_48 = arith.constant 0 : index
    %88 = vector.load %arg11[%c0_47, %c0_48] : memref<8x16xf32, #tpu.memory_space<vmem>>, vector<8x16xf32>
    %c0_49 = arith.constant 0 : index
    %c0_50 = arith.constant 0 : index
    %89 = vector.load %arg12[%c0_49, %c0_50] : memref<16x8xf32, #tpu.memory_space<vmem>>, vector<16x8xf32>
    %cst_51 = arith.constant dense<0.000000e+00> : vector<8x16xf32>
    %90 = tpu.matmul %88, %49, %cst_51 {dimension_numbers = #tpu.dot_dimension_numbers<[1], [0], [0], [1], [0, 0, 1, 1], [], []>} : vector<8x16xf32>, vector<16x16xf32>, vector<8x16xf32> -> vector<8x16xf32>
    %cst_52 = arith.constant dense<0.000000e+00> : vector<8x8xf32>
    %91 = tpu.matmul %90, %89, %cst_52 {dimension_numbers = #tpu.dot_dimension_numbers<[1], [0], [0], [1], [0, 0, 1, 1], [], []>} : vector<8x16xf32>, vector<16x8xf32>, vector<8x8xf32> -> vector<8x8xf32>
    %cst_53 = arith.constant dense<0.000000e+00> : vector<8x16xf32>
    %92 = tpu.matmul %88, %51, %cst_53 {dimension_numbers = #tpu.dot_dimension_numbers<[1], [0], [0], [1], [0, 0, 1, 1], [], []>} : vector<8x16xf32>, vector<16x16xf32>, vector<8x16xf32> -> vector<8x16xf32>
    %cst_54 = arith.constant dense<0.000000e+00> : vector<8x8xf32>
    %93 = tpu.matmul %92, %89, %cst_54 {dimension_numbers = #tpu.dot_dimension_numbers<[1], [0], [0], [1], [0, 0, 1, 1], [], []>} : vector<8x16xf32>, vector<16x8xf32>, vector<8x8xf32> -> vector<8x8xf32>
    %c0_55 = arith.constant 0 : index
    %c0_56 = arith.constant 0 : index
    %94 = vector.load %arg13[%c0_55, %c0_56] : memref<8x8xf32, #tpu.memory_space<vmem>>, vector<8x8xf32>
    %c0_57 = arith.constant 0 : index
    %c0_58 = arith.constant 0 : index
    %95 = vector.load %arg14[%c0_57, %c0_58] : memref<8x8xf32, #tpu.memory_space<vmem>>, vector<8x8xf32>
    %96 = arith.mulf %91, %91 : vector<8x8xf32>
    %97 = arith.mulf %93, %93 : vector<8x8xf32>
    %98 = arith.mulf %91, %93 : vector<8x8xf32>
    %99 = tpu.concatenate %91, %93, %96, %97, %98 in 0 : vector<8x8xf32>, vector<8x8xf32>, vector<8x8xf32>, vector<8x8xf32>, vector<8x8xf32> -> vector<40x8xf32>
    %cst_59 = arith.constant dense<0.000000e+00> : vector<40x8xf32>
    %100 = tpu.matmul %99, %95, %cst_59 {dimension_numbers = #tpu.dot_dimension_numbers<[1], [0], [0], [1], [0, 0, 1, 1], [], []>} : vector<40x8xf32>, vector<8x8xf32>, vector<40x8xf32> -> vector<40x8xf32>
    %101 = vector.extract_strided_slice %100 {offsets = [0, 0], sizes = [8, 8], strides = [1, 1]} : vector<40x8xf32> to vector<8x8xf32>
    %cst_60 = arith.constant dense<0.000000e+00> : vector<8x8xf32>
    %102 = tpu.matmul %94, %101, %cst_60 {dimension_numbers = #tpu.dot_dimension_numbers<[1], [0], [0], [1], [0, 0, 1, 1], [], []>} : vector<8x8xf32>, vector<8x8xf32>, vector<8x8xf32> -> vector<8x8xf32>
    %103 = vector.extract_strided_slice %100 {offsets = [8, 0], sizes = [8, 8], strides = [1, 1]} : vector<40x8xf32> to vector<8x8xf32>
    %cst_61 = arith.constant dense<0.000000e+00> : vector<8x8xf32>
    %104 = tpu.matmul %94, %103, %cst_61 {dimension_numbers = #tpu.dot_dimension_numbers<[1], [0], [0], [1], [0, 0, 1, 1], [], []>} : vector<8x8xf32>, vector<8x8xf32>, vector<8x8xf32> -> vector<8x8xf32>
    %105 = vector.extract_strided_slice %100 {offsets = [16, 0], sizes = [8, 8], strides = [1, 1]} : vector<40x8xf32> to vector<8x8xf32>
    %cst_62 = arith.constant dense<0.000000e+00> : vector<8x8xf32>
    %106 = tpu.matmul %94, %105, %cst_62 {dimension_numbers = #tpu.dot_dimension_numbers<[1], [0], [0], [1], [0, 0, 1, 1], [], []>} : vector<8x8xf32>, vector<8x8xf32>, vector<8x8xf32> -> vector<8x8xf32>
    %107 = vector.extract_strided_slice %100 {offsets = [24, 0], sizes = [8, 8], strides = [1, 1]} : vector<40x8xf32> to vector<8x8xf32>
    %cst_63 = arith.constant dense<0.000000e+00> : vector<8x8xf32>
    %108 = tpu.matmul %94, %107, %cst_63 {dimension_numbers = #tpu.dot_dimension_numbers<[1], [0], [0], [1], [0, 0, 1, 1], [], []>} : vector<8x8xf32>, vector<8x8xf32>, vector<8x8xf32> -> vector<8x8xf32>
    %109 = vector.extract_strided_slice %100 {offsets = [32, 0], sizes = [8, 8], strides = [1, 1]} : vector<40x8xf32> to vector<8x8xf32>
    %cst_64 = arith.constant dense<0.000000e+00> : vector<8x8xf32>
    %110 = tpu.matmul %94, %109, %cst_64 {dimension_numbers = #tpu.dot_dimension_numbers<[1], [0], [0], [1], [0, 0, 1, 1], [], []>} : vector<8x8xf32>, vector<8x8xf32>, vector<8x8xf32> -> vector<8x8xf32>
    %111 = arith.mulf %102, %102 : vector<8x8xf32>
    %112 = arith.subf %106, %111 : vector<8x8xf32>
    %113 = arith.mulf %104, %104 : vector<8x8xf32>
    %114 = arith.subf %108, %113 : vector<8x8xf32>
    %115 = arith.mulf %102, %104 : vector<8x8xf32>
    %116 = arith.subf %110, %115 : vector<8x8xf32>
    %cst_65 = arith.constant 2.000000e+00 : f32
    %117 = vector.broadcast %cst_65 : f32 to vector<8x8xf32>
    %118 = arith.mulf %117, %116 : vector<8x8xf32>
    %cst_66 = arith.constant 8.99999984E-4 : f32
    %119 = vector.broadcast %cst_66 : f32 to vector<8x8xf32>
    %120 = arith.addf %118, %119 : vector<8x8xf32>
    %121 = arith.addf %112, %114 : vector<8x8xf32>
    %cst_67 = arith.constant 8.99999984E-4 : f32
    %122 = vector.broadcast %cst_67 : f32 to vector<8x8xf32>
    %123 = arith.addf %121, %122 : vector<8x8xf32>
    %124 = arith.divf %120, %123 : vector<8x8xf32>
    %c0_68 = arith.constant 0 : index
    %c0_69 = arith.constant 0 : index
    %125 = vector.load %arg15[%c0_68, %c0_69] : memref<32x8xf32, #tpu.memory_space<vmem>>, vector<32x8xf32>
    %c0_70 = arith.constant 0 : index
    %c0_71 = arith.constant 0 : index
    %126 = vector.load %arg16[%c0_70, %c0_71] : memref<8x32xf32, #tpu.memory_space<vmem>>, vector<8x32xf32>
    %cst_72 = arith.constant dense<0.000000e+00> : vector<32x8xf32>
    %127 = tpu.matmul %125, %124, %cst_72 {dimension_numbers = #tpu.dot_dimension_numbers<[1], [0], [0], [1], [0, 0, 1, 1], [], []>} : vector<32x8xf32>, vector<8x8xf32>, vector<32x8xf32> -> vector<32x8xf32>
    %cst_73 = arith.constant dense<0.000000e+00> : vector<32x32xf32>
    %128 = tpu.matmul %127, %126, %cst_73 {dimension_numbers = #tpu.dot_dimension_numbers<[1], [0], [0], [1], [0, 0, 1, 1], [], []>} : vector<32x8xf32>, vector<8x32xf32>, vector<32x32xf32> -> vector<32x32xf32>
    %129 = arith.addf %87, %128 : vector<32x32xf32>
    %c0_74 = arith.constant 0 : index
    %c0_75 = arith.constant 0 : index
    %130 = vector.load %arg17[%c0_74, %c0_75] : memref<4x8xf32, #tpu.memory_space<vmem>>, vector<4x8xf32>
    %c0_76 = arith.constant 0 : index
    %c0_77 = arith.constant 0 : index
    %131 = vector.load %arg18[%c0_76, %c0_77] : memref<8x4xf32, #tpu.memory_space<vmem>>, vector<8x4xf32>
    %cst_78 = arith.constant dense<0.000000e+00> : vector<4x8xf32>
    %132 = tpu.matmul %130, %91, %cst_78 {dimension_numbers = #tpu.dot_dimension_numbers<[1], [0], [0], [1], [0, 0, 1, 1], [], []>} : vector<4x8xf32>, vector<8x8xf32>, vector<4x8xf32> -> vector<4x8xf32>
    %cst_79 = arith.constant dense<0.000000e+00> : vector<4x4xf32>
    %133 = tpu.matmul %132, %131, %cst_79 {dimension_numbers = #tpu.dot_dimension_numbers<[1], [0], [0], [1], [0, 0, 1, 1], [], []>} : vector<4x8xf32>, vector<8x4xf32>, vector<4x4xf32> -> vector<4x4xf32>
    %cst_80 = arith.constant dense<0.000000e+00> : vector<4x8xf32>
    %134 = tpu.matmul %130, %93, %cst_80 {dimension_numbers = #tpu.dot_dimension_numbers<[1], [0], [0], [1], [0, 0, 1, 1], [], []>} : vector<4x8xf32>, vector<8x8xf32>, vector<4x8xf32> -> vector<4x8xf32>
    %cst_81 = arith.constant dense<0.000000e+00> : vector<4x4xf32>
    %135 = tpu.matmul %134, %131, %cst_81 {dimension_numbers = #tpu.dot_dimension_numbers<[1], [0], [0], [1], [0, 0, 1, 1], [], []>} : vector<4x8xf32>, vector<8x4xf32>, vector<4x4xf32> -> vector<4x4xf32>
    %c0_82 = arith.constant 0 : index
    %c0_83 = arith.constant 0 : index
    %136 = vector.load %arg19[%c0_82, %c0_83] : memref<4x4xf32, #tpu.memory_space<vmem>>, vector<4x4xf32>
    %c0_84 = arith.constant 0 : index
    %c0_85 = arith.constant 0 : index
    %137 = vector.load %arg20[%c0_84, %c0_85] : memref<4x4xf32, #tpu.memory_space<vmem>>, vector<4x4xf32>
    %138 = arith.mulf %133, %133 : vector<4x4xf32>
    %139 = arith.mulf %135, %135 : vector<4x4xf32>
    %140 = arith.mulf %133, %135 : vector<4x4xf32>
    %cst_86 = arith.constant dense<0.000000e+00> : vector<4x4xf32>
    %141 = tpu.matmul %133, %137, %cst_86 {dimension_numbers = #tpu.dot_dimension_numbers<[1], [0], [0], [1], [0, 0, 1, 1], [], []>} : vector<4x4xf32>, vector<4x4xf32>, vector<4x4xf32> -> vector<4x4xf32>
    %cst_87 = arith.constant dense<0.000000e+00> : vector<4x4xf32>
    %142 = tpu.matmul %136, %141, %cst_87 {dimension_numbers = #tpu.dot_dimension_numbers<[1], [0], [0], [1], [0, 0, 1, 1], [], []>} : vector<4x4xf32>, vector<4x4xf32>, vector<4x4xf32> -> vector<4x4xf32>
    %cst_88 = arith.constant dense<0.000000e+00> : vector<4x4xf32>
    %143 = tpu.matmul %135, %137, %cst_88 {dimension_numbers = #tpu.dot_dimension_numbers<[1], [0], [0], [1], [0, 0, 1, 1], [], []>} : vector<4x4xf32>, vector<4x4xf32>, vector<4x4xf32> -> vector<4x4xf32>
    %cst_89 = arith.constant dense<0.000000e+00> : vector<4x4xf32>
    %144 = tpu.matmul %136, %143, %cst_89 {dimension_numbers = #tpu.dot_dimension_numbers<[1], [0], [0], [1], [0, 0, 1, 1], [], []>} : vector<4x4xf32>, vector<4x4xf32>, vector<4x4xf32> -> vector<4x4xf32>
    %cst_90 = arith.constant dense<0.000000e+00> : vector<4x4xf32>
    %145 = tpu.matmul %138, %137, %cst_90 {dimension_numbers = #tpu.dot_dimension_numbers<[1], [0], [0], [1], [0, 0, 1, 1], [], []>} : vector<4x4xf32>, vector<4x4xf32>, vector<4x4xf32> -> vector<4x4xf32>
    %cst_91 = arith.constant dense<0.000000e+00> : vector<4x4xf32>
    %146 = tpu.matmul %136, %145, %cst_91 {dimension_numbers = #tpu.dot_dimension_numbers<[1], [0], [0], [1], [0, 0, 1, 1], [], []>} : vector<4x4xf32>, vector<4x4xf32>, vector<4x4xf32> -> vector<4x4xf32>
    %cst_92 = arith.constant dense<0.000000e+00> : vector<4x4xf32>
    %147 = tpu.matmul %139, %137, %cst_92 {dimension_numbers = #tpu.dot_dimension_numbers<[1], [0], [0], [1], [0, 0, 1, 1], [], []>} : vector<4x4xf32>, vector<4x4xf32>, vector<4x4xf32> -> vector<4x4xf32>
    %cst_93 = arith.constant dense<0.000000e+00> : vector<4x4xf32>
    %148 = tpu.matmul %136, %147, %cst_93 {dimension_numbers = #tpu.dot_dimension_numbers<[1], [0], [0], [1], [0, 0, 1, 1], [], []>} : vector<4x4xf32>, vector<4x4xf32>, vector<4x4xf32> -> vector<4x4xf32>
    %cst_94 = arith.constant dense<0.000000e+00> : vector<4x4xf32>
    %149 = tpu.matmul %140, %137, %cst_94 {dimension_numbers = #tpu.dot_dimension_numbers<[1], [0], [0], [1], [0, 0, 1, 1], [], []>} : vector<4x4xf32>, vector<4x4xf32>, vector<4x4xf32> -> vector<4x4xf32>
    %cst_95 = arith.constant dense<0.000000e+00> : vector<4x4xf32>
    %150 = tpu.matmul %136, %149, %cst_95 {dimension_numbers = #tpu.dot_dimension_numbers<[1], [0], [0], [1], [0, 0, 1, 1], [], []>} : vector<4x4xf32>, vector<4x4xf32>, vector<4x4xf32> -> vector<4x4xf32>
    %151 = arith.mulf %142, %142 : vector<4x4xf32>
    %152 = arith.subf %146, %151 : vector<4x4xf32>
    %153 = arith.mulf %144, %144 : vector<4x4xf32>
    %154 = arith.subf %148, %153 : vector<4x4xf32>
    %155 = arith.mulf %142, %144 : vector<4x4xf32>
    %156 = arith.subf %150, %155 : vector<4x4xf32>
    %cst_96 = arith.constant 2.000000e+00 : f32
    %157 = vector.broadcast %cst_96 : f32 to vector<4x4xf32>
    %158 = arith.mulf %157, %156 : vector<4x4xf32>
    %cst_97 = arith.constant 8.99999984E-4 : f32
    %159 = vector.broadcast %cst_97 : f32 to vector<4x4xf32>
    %160 = arith.addf %158, %159 : vector<4x4xf32>
    %161 = arith.addf %152, %154 : vector<4x4xf32>
    %cst_98 = arith.constant 8.99999984E-4 : f32
    %162 = vector.broadcast %cst_98 : f32 to vector<4x4xf32>
    %163 = arith.addf %161, %162 : vector<4x4xf32>
    %164 = arith.divf %160, %163 : vector<4x4xf32>
    %c0_99 = arith.constant 0 : index
    %c0_100 = arith.constant 0 : index
    %165 = vector.load %arg21[%c0_99, %c0_100] : memref<32x4xf32, #tpu.memory_space<vmem>>, vector<32x4xf32>
    %c0_101 = arith.constant 0 : index
    %c0_102 = arith.constant 0 : index
    %166 = vector.load %arg22[%c0_101, %c0_102] : memref<4x32xf32, #tpu.memory_space<vmem>>, vector<4x32xf32>
    %cst_103 = arith.constant dense<0.000000e+00> : vector<32x4xf32>
    %167 = tpu.matmul %165, %164, %cst_103 {dimension_numbers = #tpu.dot_dimension_numbers<[1], [0], [0], [1], [0, 0, 1, 1], [], []>} : vector<32x4xf32>, vector<4x4xf32>, vector<32x4xf32> -> vector<32x4xf32>
    %cst_104 = arith.constant dense<0.000000e+00> : vector<32x32xf32>
    %168 = tpu.matmul %167, %166, %cst_104 {dimension_numbers = #tpu.dot_dimension_numbers<[1], [0], [0], [1], [0, 0, 1, 1], [], []>} : vector<32x4xf32>, vector<4x32xf32>, vector<32x32xf32> -> vector<32x32xf32>
    %169 = arith.addf %129, %168 : vector<32x32xf32>
    %cst_105 = arith.constant 2.500000e-01 : f32
    %170 = vector.broadcast %cst_105 : f32 to vector<32x32xf32>
    %171 = arith.mulf %169, %170 : vector<32x32xf32>
    %172 = arith.mulf %171, %45 : vector<32x32xf32>
    %cst_106 = arith.constant 1.000000e+00 : f32
    %173 = vector.broadcast %cst_106 : f32 to vector<32x32xf32>
    %174 = arith.subf %173, %172 : vector<32x32xf32>
    %c0_107 = arith.constant 0 : index
    %c0_108 = arith.constant 0 : index
    %c0_109 = arith.constant 0 : index
    %175 = vector.load %arg23[%c0_107, %c0_108, %c0_109] : memref<1x32x32xf32, #tpu.memory_space<vmem>>, vector<1x32x32xf32>
    %176 = vector.shape_cast %175 : vector<1x32x32xf32> to vector<32x32xf32>
    %177 = vector.shape_cast %174 : vector<32x32xf32> to vector<1x32x32xf32>
    tpu.vector_store %arg23[%c0_107, %c0_108, %c0_109], %177 {strides = array<i32>} : memref<1x32x32xf32, #tpu.memory_space<vmem>>, vector<1x32x32xf32>,
    return
  }
  func.func @transform_0(%arg0: i32) -> (i32, i32, i32) {
    %c0_i32 = arith.constant 0 : i32
    %c0_i32_0 = arith.constant 0 : i32
    %c0_i32_1 = arith.constant 0 : i32
    return %arg0, %c0_i32, %c0_i32_0 : i32, i32, i32
  }
  func.func @transform_1(%arg0: i32) -> (i32, i32, i32) {
    %c0_i32 = arith.constant 0 : i32
    %c0_i32_0 = arith.constant 0 : i32
    %c0_i32_1 = arith.constant 0 : i32
    return %arg0, %c0_i32, %c0_i32_0 : i32, i32, i32
  }
  func.func @transform_2(%arg0: i32) -> (i32, i32) {
    %c0_i32 = arith.constant 0 : i32
    %c0_i32_0 = arith.constant 0 : i32
    %c0_i32_1 = arith.constant 0 : i32
    return %c0_i32, %c0_i32_0 : i32, i32
  }
  func.func @transform_3(%arg0: i32) -> (i32, i32) {
    %c0_i32 = arith.constant 0 : i32
    %c0_i32_0 = arith.constant 0 : i32
    %c0_i32_1 = arith.constant 0 : i32
    return %c0_i32, %c0_i32_0 : i32, i32
  }
  func.func @transform_4(%arg0: i32) -> (i32, i32) {
    %c0_i32 = arith.constant 0 : i32
    %c0_i32_0 = arith.constant 0 : i32
    %c0_i32_1 = arith.constant 0 : i32
    return %c0_i32, %c0_i32_0 : i32, i32
  }
  func.func @transform_5(%arg0: i32) -> (i32, i32) {
    %c0_i32 = arith.constant 0 : i32
    %c0_i32_0 = arith.constant 0 : i32
    %c0_i32_1 = arith.constant 0 : i32
    return %c0_i32, %c0_i32_0 : i32, i32
  }
  func.func @transform_6(%arg0: i32) -> (i32, i32) {
    %c0_i32 = arith.constant 0 : i32
    %c0_i32_0 = arith.constant 0 : i32
    %c0_i32_1 = arith.constant 0 : i32
    return %c0_i32, %c0_i32_0 : i32, i32
  }
  func.func @transform_7(%arg0: i32) -> (i32, i32) {
    %c0_i32 = arith.constant 0 : i32
    %c0_i32_0 = arith.constant 0 : i32
    %c0_i32_1 = arith.constant 0 : i32
    return %c0_i32, %c0_i32_0 : i32, i32
  }
  func.func @transform_8(%arg0: i32) -> (i32, i32) {
    %c0_i32 = arith.constant 0 : i32
    %c0_i32_0 = arith.constant 0 : i32
    %c0_i32_1 = arith.constant 0 : i32
    return %c0_i32, %c0_i32_0 : i32, i32
  }
  func.func @transform_9(%arg0: i32) -> (i32, i32) {
    %c0_i32 = arith.constant 0 : i32
    %c0_i32_0 = arith.constant 0 : i32
    %c0_i32_1 = arith.constant 0 : i32
    return %c0_i32, %c0_i32_0 : i32, i32
  }
  func.func @transform_10(%arg0: i32) -> (i32, i32) {
    %c0_i32 = arith.constant 0 : i32
    %c0_i32_0 = arith.constant 0 : i32
    %c0_i32_1 = arith.constant 0 : i32
    return %c0_i32, %c0_i32_0 : i32, i32
  }
  func.func @transform_11(%arg0: i32) -> (i32, i32) {
    %c0_i32 = arith.constant 0 : i32
    %c0_i32_0 = arith.constant 0 : i32
    %c0_i32_1 = arith.constant 0 : i32
    return %c0_i32, %c0_i32_0 : i32, i32
  }
  func.func @transform_12(%arg0: i32) -> (i32, i32) {
    %c0_i32 = arith.constant 0 : i32
    %c0_i32_0 = arith.constant 0 : i32
    %c0_i32_1 = arith.constant 0 : i32
    return %c0_i32, %c0_i32_0 : i32, i32
  }
  func.func @transform_13(%arg0: i32) -> (i32, i32) {
    %c0_i32 = arith.constant 0 : i32
    %c0_i32_0 = arith.constant 0 : i32
    %c0_i32_1 = arith.constant 0 : i32
    return %c0_i32, %c0_i32_0 : i32, i32
  }
  func.func @transform_14(%arg0: i32) -> (i32, i32) {
    %c0_i32 = arith.constant 0 : i32
    %c0_i32_0 = arith.constant 0 : i32
    %c0_i32_1 = arith.constant 0 : i32
    return %c0_i32, %c0_i32_0 : i32, i32
  }
  func.func @transform_15(%arg0: i32) -> (i32, i32) {
    %c0_i32 = arith.constant 0 : i32
    %c0_i32_0 = arith.constant 0 : i32
    %c0_i32_1 = arith.constant 0 : i32
    return %c0_i32, %c0_i32_0 : i32, i32
  }
  func.func @transform_16(%arg0: i32) -> (i32, i32) {
    %c0_i32 = arith.constant 0 : i32
    %c0_i32_0 = arith.constant 0 : i32
    %c0_i32_1 = arith.constant 0 : i32
    return %c0_i32, %c0_i32_0 : i32, i32
  }
  func.func @transform_17(%arg0: i32) -> (i32, i32) {
    %c0_i32 = arith.constant 0 : i32
    %c0_i32_0 = arith.constant 0 : i32
    %c0_i32_1 = arith.constant 0 : i32
    return %c0_i32, %c0_i32_0 : i32, i32
  }
  func.func @transform_18(%arg0: i32) -> (i32, i32) {
    %c0_i32 = arith.constant 0 : i32
    %c0_i32_0 = arith.constant 0 : i32
    %c0_i32_1 = arith.constant 0 : i32
    return %c0_i32, %c0_i32_0 : i32, i32
  }
  func.func @transform_19(%arg0: i32) -> (i32, i32) {
    %c0_i32 = arith.constant 0 : i32
    %c0_i32_0 = arith.constant 0 : i32
    %c0_i32_1 = arith.constant 0 : i32
    return %c0_i32, %c0_i32_0 : i32, i32
  }
  func.func @transform_20(%arg0: i32) -> (i32, i32) {
    %c0_i32 = arith.constant 0 : i32
    %c0_i32_0 = arith.constant 0 : i32
    %c0_i32_1 = arith.constant 0 : i32
    return %c0_i32, %c0_i32_0 : i32, i32
  }
  func.func @transform_21(%arg0: i32) -> (i32, i32) {
    %c0_i32 = arith.constant 0 : i32
    %c0_i32_0 = arith.constant 0 : i32
    %c0_i32_1 = arith.constant 0 : i32
    return %c0_i32, %c0_i32_0 : i32, i32
  }
  func.func @transform_22(%arg0: i32) -> (i32, i32, i32) {
    %c0_i32 = arith.constant 0 : i32
    %c0_i32_0 = arith.constant 0 : i32
    %c0_i32_1 = arith.constant 0 : i32
    return %arg0, %c0_i32, %c0_i32_0 : i32, i32, i32
  }
}

</mosaic_0001>

<llo_original>
// kernel: msssim_forward.1
$region0: #{msssim_forward.1}
  #allocation0 [shape = 'u32[]', space=smem, size = 0x4, offset = 0x4, fixed_abs, tag = 'smem constant byte address 0x4 - core index']
  #allocation1 [shape = 'u32[144,128]{1,0:T(1,128)}', space=vmem, size = 0x12000, scoped, tag = 'internal scratch']
  %s0 = inlined_call_operand.vmem [shape: f32[6,32,32], index: 0, kind: input, shape index: {}]
  %s1 = inlined_call_operand.vmem [shape: f32[6,32,32], index: 1, kind: input, shape index: {}]
  %s2 = inlined_call_operand.vmem [shape: f32[32,32], index: 2, kind: input, shape index: {}, may-alias: {2,3}]
  %s3 = inlined_call_operand.vmem [shape: f32[32,32], index: 3, kind: input, shape index: {}, may-alias: {2,3}]
  %s4 = inlined_call_operand.vmem [shape: f32[16,32], index: 4, kind: input, shape index: {}]
  %s5 = inlined_call_operand.vmem [shape: f32[32,16], index: 5, kind: input, shape index: {}]
  %s6 = inlined_call_operand.vmem [shape: f32[16,16], index: 6, kind: input, shape index: {}, may-alias: {6,7}]
  %s7 = inlined_call_operand.vmem [shape: f32[16,16], index: 7, kind: input, shape index: {}, may-alias: {6,7}]
  %s8 = inlined_call_operand.vmem [shape: f32[32,16], index: 8, kind: input, shape index: {}]
  %s9 = inlined_call_operand.vmem [shape: f32[16,32], index: 9, kind: input, shape index: {}]
  %s10 = inlined_call_operand.vmem [shape: f32[8,16], index: 10, kind: input, shape index: {}]
  %s11 = inlined_call_operand.vmem [shape: f32[16,8], index: 11, kind: input, shape index: {}]
  %s12 = inlined_call_operand.vmem [shape: f32[8,8], index: 12, kind: input, shape index: {}, may-alias: {12,13}]
  %s13 = inlined_call_operand.vmem [shape: f32[8,8], index: 13, kind: input, shape index: {}, may-alias: {12,13}]
  %s14 = inlined_call_operand.vmem [shape: f32[32,8], index: 14, kind: input, shape index: {}]
  %s15 = inlined_call_operand.vmem [shape: f32[8,32], index: 15, kind: input, shape index: {}]
  %s16 = inlined_call_operand.vmem [shape: f32[4,8], index: 16, kind: input, shape index: {}]
  %s17 = inlined_call_operand.vmem [shape: f32[8,4], index: 17, kind: input, shape index: {}]
  %s18 = inlined_call_operand.vmem [shape: f32[4,4], index: 18, kind: input, shape index: {}, may-alias: {18,19}]
  %s19 = inlined_call_operand.vmem [shape: f32[4,4], index: 19, kind: input, shape index: {}, may-alias: {18,19}]
  %s20 = inlined_call_operand.vmem [shape: f32[32,4], index: 20, kind: input, shape index: {}]
  %s21 = inlined_call_operand.vmem [shape: f32[4,32], index: 21, kind: input, shape index: {}]
  %s22 = inlined_call_operand.vmem [shape: f32[6,32,32], index: 22, kind: output, shape index: {}]
  %s23 = sld [smem:[#allocation0]]
  $region121: #{msssim_forward.1} parent=0
    _
  %s25 = ssub.s32 1, %s23
  %s26 = scalar_select 0, %s25, %s23
  loop: start=0, step=1, limit=8
  $region2: #{msssim_forward.1} parent=0 // loop_pre_header
    _
  $region3: #{msssim_forward.1} parent=0 // loop_header
    %s28 = sphi 0, %s32
    %p29 = scmp.ge.s32.totalorder %s28, 8
    %s38 = sphi 0, %s40
    %s41 = sphi 0, %s38
    %s42 = sphi 0, %s41
    %s58 = sphi 0, %s42
    %s64 = sphi 0, %s66
    %s67 = sphi 0, %s64
    %s68 = sphi 0, %s67
    %s84 = sphi 0, %s68
    %s88 = sphi 0, %s88
    %s90 = sphi 0, %s88
    %s91 = sphi 0, %s90
    %s105 = sphi 0, %s91
    %s109 = sphi 0, %s109
    %s111 = sphi 0, %s109
    %s112 = sphi 0, %s111
    %s126 = sphi 0, %s112
    %s130 = sphi 0, %s130
    %s132 = sphi 0, %s130
    %s133 = sphi 0, %s132
    %s147 = sphi 0, %s133
    %s151 = sphi 0, %s151
    %s153 = sphi 0, %s151
    %s154 = sphi 0, %s153
    %s168 = sphi 0, %s154
    %s172 = sphi 0, %s172
    %s174 = sphi 0, %s172
    %s175 = sphi 0, %s174
    %s189 = sphi 0, %s175
    %s193 = sphi 0, %s193
    %s195 = sphi 0, %s193
    %s196 = sphi 0, %s195
    %s210 = sphi 0, %s196
    %s214 = sphi 0, %s214
    %s216 = sphi 0, %s214
    %s217 = sphi 0, %s216
    %s231 = sphi 0, %s217
    %s235 = sphi 0, %s235
    %s237 = sphi 0, %s235
    %s238 = sphi 0, %s237
    %s252 = sphi 0, %s238
    %s256 = sphi 0, %s256
    %s258 = sphi 0, %s256
    %s259 = sphi 0, %s258
    %s273 = sphi 0, %s259
    %s277 = sphi 0, %s277
    %s279 = sphi 0, %s277
    %s280 = sphi 0, %s279
    %s294 = sphi 0, %s280
    %s298 = sphi 0, %s298
    %s300 = sphi 0, %s298
    %s301 = sphi 0, %s300
    %s315 = sphi 0, %s301
    %s319 = sphi 0, %s319
    %s321 = sphi 0, %s319
    %s322 = sphi 0, %s321
    %s336 = sphi 0, %s322
    %s340 = sphi 0, %s340
    %s342 = sphi 0, %s340
    %s343 = sphi 0, %s342
    %s357 = sphi 0, %s343
    %s361 = sphi 0, %s361
    %s363 = sphi 0, %s361
    %s364 = sphi 0, %s363
    %s378 = sphi 0, %s364
    %s382 = sphi 0, %s382
    %s384 = sphi 0, %s382
    %s385 = sphi 0, %s384
    %s399 = sphi 0, %s385
    %s403 = sphi 0, %s403
    %s405 = sphi 0, %s403
    %s406 = sphi 0, %s405
    %s420 = sphi 0, %s406
    %s424 = sphi 0, %s424
    %s426 = sphi 0, %s424
    %s427 = sphi 0, %s426
    %s441 = sphi 0, %s427
    %s445 = sphi 0, %s445
    %s447 = sphi 0, %s445
    %s448 = sphi 0, %s447
    %s462 = sphi 0, %s448
    %s466 = sphi 0, %s466
    %s468 = sphi 0, %s466
    %s469 = sphi 0, %s468
    %s483 = sphi 0, %s469
    %s487 = sphi 0, %s487
    %s489 = sphi 0, %s487
    %s490 = sphi 0, %s489
    %s504 = sphi 0, %s490
    %s510 = sphi 0, %s512
    %s513 = sphi 0, %s510
    %s514 = sphi 0, %s513
    %s530 = sphi 0, %s514
  $region4: #{msssim_forward.1} parent=0 // loop_header_branch
    %31 = sbr.rel (%p29) target = $region8
  $region5: #{msssim_forward.1} parent=0 // loop_body
    %s33 = ssub.s32 %s28, 1
    %s34 = ssub.s32 %s28, 2
    %s35 = sadd.s32 %s28, 1
    %s36 = ssub.s32 %s28, %s35
    %p37 = scmp.eq.s32.totalorder %s36, 0
    %s39 = sadd.s32 %s38, 1
    %s40 = scalar_select %p37, %s38, %s39
    %p43 = pneg %p37
    %p44 = scmp.eq.s32.totalorder %s28, 5
    %p45 = por %p43, %p44
    %p46 = scmp.ne.s32.totalorder %s38, %s41
    %p47 = scmp.eq.s32.totalorder %s28, 0
    %p48 = por %p46, %p47
    %p49 = scmp.ne.s32.totalorder %s38, %s41
    %p50 = scmp.eq.s32.totalorder %s33, 5
    %p51 = por %p49, %p50
    %p52 = scmp.ne.s32.totalorder %s41, %s42
    %p53 = scmp.eq.s32.totalorder %s33, 0
    %p54 = por %p52, %p53
    %p55 = scmp.ne.s32.totalorder %s41, %s42
    %p56 = scmp.eq.s32.totalorder %s34, 5
    %p57 = por %p55, %p56
    %p59 = scmp.ne.s32.totalorder %s42, %s58
    %p60 = scmp.eq.s32.totalorder %s34, 0
    %p61 = por %p59, %p60
    %s62 = ssub.s32 %s28, %s35
    %p63 = scmp.eq.s32.totalorder %s62, 0
    %s65 = sadd.s32 %s64, 1
    %s66 = scalar_select %p63, %s64, %s65
    %p69 = pneg %p63
    %p70 = scmp.eq.s32.totalorder %s28, 5
    %p71 = por %p69, %p70
    %p72 = scmp.ne.s32.totalorder %s64, %s67
    %p73 = scmp.eq.s32.totalorder %s28, 0
    %p74 = por %p72, %p73
    %p75 = scmp.ne.s32.totalorder %s64, %s67
    %p76 = scmp.eq.s32.totalorder %s33, 5
    %p77 = por %p75, %p76
    %p78 = scmp.ne.s32.totalorder %s67, %s68
    %p79 = scmp.eq.s32.totalorder %s33, 0
    %p80 = por %p78, %p79
    %p81 = scmp.ne.s32.totalorder %s67, %s68
    %p82 = scmp.eq.s32.totalorder %s34, 5
    %p83 = por %p81, %p82
    %p85 = scmp.ne.s32.totalorder %s68, %s84
    %p86 = scmp.eq.s32.totalorder %s34, 0
    %p87 = por %p85, %p86
    %s89 = sadd.s32 %s88, 1
    %p92 = scmp.eq.s32.totalorder %s28, 5
    %p93 = scmp.ne.s32.totalorder %s88, %s90
    %p94 = scmp.eq.s32.totalorder %s28, 0
    %p95 = por %p93, %p94
    %p96 = scmp.ne.s32.totalorder %s88, %s90
    %p97 = scmp.eq.s32.totalorder %s33, 5
    %p98 = por %p96, %p97
    %p99 = scmp.ne.s32.totalorder %s90, %s91
    %p100 = scmp.eq.s32.totalorder %s33, 0
    %p101 = por %p99, %p100
    %p102 = scmp.ne.s32.totalorder %s90, %s91
    %p103 = scmp.eq.s32.totalorder %s34, 5
    %p104 = por %p102, %p103
    %p106 = scmp.ne.s32.totalorder %s91, %s105
    %p107 = scmp.eq.s32.totalorder %s34, 0
    %p108 = por %p106, %p107
    %s110 = sadd.s32 %s109, 1
    %p113 = scmp.eq.s32.totalorder %s28, 5
    %p114 = scmp.ne.s32.totalorder %s109, %s111
    %p115 = scmp.eq.s32.totalorder %s28, 0
    %p116 = por %p114, %p115
    %p117 = scmp.ne.s32.totalorder %s109, %s111
    %p118 = scmp.eq.s32.totalorder %s33, 5
    %p119 = por %p117, %p118
    %p120 = scmp.ne.s32.totalorder %s111, %s112
    %p121 = scmp.eq.s32.totalorder %s33, 0
    %p122 = por %p120, %p121
    %p123 = scmp.ne.s32.totalorder %s111, %s112
    %p124 = scmp.eq.s32.totalorder %s34, 5
    %p125 = por %p123, %p124
    %p127 = scmp.ne.s32.totalorder %s112, %s126
    %p128 = scmp.eq.s32.totalorder %s34, 0
    %p129 = por %p127, %p128
    %s131 = sadd.s32 %s130, 1
    %p134 = scmp.eq.s32.totalorder %s28, 5
    %p135 = scmp.ne.s32.totalorder %s130, %s132
    %p136 = scmp.eq.s32.totalorder %s28, 0
    %p137 = por %p135, %p136
    %p138 = scmp.ne.s32.totalorder %s130, %s132
    %p139 = scmp.eq.s32.totalorder %s33, 5
    %p140 = por %p138, %p139
    %p141 = scmp.ne.s32.totalorder %s132, %s133
    %p142 = scmp.eq.s32.totalorder %s33, 0
    %p143 = por %p141, %p142
    %p144 = scmp.ne.s32.totalorder %s132, %s133
    %p145 = scmp.eq.s32.totalorder %s34, 5
    %p146 = por %p144, %p145
    %p148 = scmp.ne.s32.totalorder %s133, %s147
    %p149 = scmp.eq.s32.totalorder %s34, 0
    %p150 = por %p148, %p149
    %s152 = sadd.s32 %s151, 1
    %p155 = scmp.eq.s32.totalorder %s28, 5
    %p156 = scmp.ne.s32.totalorder %s151, %s153
    %p157 = scmp.eq.s32.totalorder %s28, 0
    %p158 = por %p156, %p157
    %p159 = scmp.ne.s32.totalorder %s151, %s153
    %p160 = scmp.eq.s32.totalorder %s33, 5
    %p161 = por %p159, %p160
    %p162 = scmp.ne.s32.totalorder %s153, %s154
    %p163 = scmp.eq.s32.totalorder %s33, 0
    %p164 = por %p162, %p163
    %p165 = scmp.ne.s32.totalorder %s153, %s154
    %p166 = scmp.eq.s32.totalorder %s34, 5
    %p167 = por %p165, %p166
    %p169 = scmp.ne.s32.totalorder %s154, %s168
    %p170 = scmp.eq.s32.totalorder %s34, 0
    %p171 = por %p169, %p170
    %s173 = sadd.s32 %s172, 1
    %p176 = scmp.eq.s32.totalorder %s28, 5
    %p177 = scmp.ne.s32.totalorder %s172, %s174
    %p178 = scmp.eq.s32.totalorder %s28, 0
    %p179 = por %p177, %p178
    %p180 = scmp.ne.s32.totalorder %s172, %s174
    %p181 = scmp.eq.s32.totalorder %s33, 5
    %p182 = por %p180, %p181
    %p183 = scmp.ne.s32.totalorder %s174, %s175
    %p184 = scmp.eq.s32.totalorder %s33, 0
    %p185 = por %p183, %p184
    %p186 = scmp.ne.s32.totalorder %s174, %s175
    %p187 = scmp.eq.s32.totalorder %s34, 5
    %p188 = por %p186, %p187
    %p190 = scmp.ne.s32.totalorder %s175, %s189
    %p191 = scmp.eq.s32.totalorder %s34, 0
    %p192 = por %p190, %p191
    %s194 = sadd.s32 %s193, 1
    %p197 = scmp.eq.s32.totalorder %s28, 5
    %p198 = scmp.ne.s32.totalorder %s193, %s195
    %p199 = scmp.eq.s32.totalorder %s28, 0
    %p200 = por %p198, %p199
    %p201 = scmp.ne.s32.totalorder %s193, %s195
    %p202 = scmp.eq.s32.totalorder %s33, 5
    %p203 = por %p201, %p202
    %p204 = scmp.ne.s32.totalorder %s195, %s196
    %p205 = scmp.eq.s32.totalorder %s33, 0
    %p206 = por %p204, %p205
    %p207 = scmp.ne.s32.totalorder %s195, %s196
    %p208 = scmp.eq.s32.totalorder %s34, 5
    %p209 = por %p207, %p208
    %p211 = scmp.ne.s32.totalorder %s196, %s210
    %p212 = scmp.eq.s32.totalorder %s34, 0
    %p213 = por %p211, %p212
    %s215 = sadd.s32 %s214, 1
    %p218 = scmp.eq.s32.totalorder %s28, 5
    %p219 = scmp.ne.s32.totalorder %s214, %s216
    %p220 = scmp.eq.s32.totalorder %s28, 0
    %p221 = por %p219, %p220
    %p222 = scmp.ne.s32.totalorder %s214, %s216
    %p223 = scmp.eq.s32.totalorder %s33, 5
    %p224 = por %p222, %p223
    %p225 = scmp.ne.s32.totalorder %s216, %s217
    %p226 = scmp.eq.s32.totalorder %s33, 0
    %p227 = por %p225, %p226
    %p228 = scmp.ne.s32.totalorder %s216, %s217
    %p229 = scmp.eq.s32.totalorder %s34, 5
    %p230 = por %p228, %p229
    %p232 = scmp.ne.s32.totalorder %s217, %s231
    %p233 = scmp.eq.s32.totalorder %s34, 0
    %p234 = por %p232, %p233
    %s236 = sadd.s32 %s235, 1
    %p239 = scmp.eq.s32.totalorder %s28, 5
    %p240 = scmp.ne.s32.totalorder %s235, %s237
    %p241 = scmp.eq.s32.totalorder %s28, 0
    %p242 = por %p240, %p241
    %p243 = scmp.ne.s32.totalorder %s235, %s237
    %p244 = scmp.eq.s32.totalorder %s33, 5
    %p245 = por %p243, %p244
    %p246 = scmp.ne.s32.totalorder %s237, %s238
    %p247 = scmp.eq.s32.totalorder %s33, 0
    %p248 = por %p246, %p247
    %p249 = scmp.ne.s32.totalorder %s237, %s238
    %p250 = scmp.eq.s32.totalorder %s34, 5
    %p251 = por %p249, %p250
    %p253 = scmp.ne.s32.totalorder %s238, %s252
    %p254 = scmp.eq.s32.totalorder %s34, 0
    %p255 = por %p253, %p254
    %s257 = sadd.s32 %s256, 1
    %p260 = scmp.eq.s32.totalorder %s28, 5
    %p261 = scmp.ne.s32.totalorder %s256, %s258
    %p262 = scmp.eq.s32.totalorder %s28, 0
    %p263 = por %p261, %p262
    %p264 = scmp.ne.s32.totalorder %s256, %s258
    %p265 = scmp.eq.s32.totalorder %s33, 5
    %p266 = por %p264, %p265
    %p267 = scmp.ne.s32.totalorder %s258, %s259
    %p268 = scmp.eq.s32.totalorder %s33, 0
    %p269 = por %p267, %p268
    %p270 = scmp.ne.s32.totalorder %s258, %s259
    %p271 = scmp.eq.s32.totalorder %s34, 5
    %p272 = por %p270, %p271
    %p274 = scmp.ne.s32.totalorder %s259, %s273
    %p275 = scmp.eq.s32.totalorder %s34, 0
    %p276 = por %p274, %p275
    %s278 = sadd.s32 %s277, 1
    %p281 = scmp.eq.s32.totalorder %s28, 5
    %p282 = scmp.ne.s32.totalorder %s277, %s279
    %p283 = scmp.eq.s32.totalorder %s28, 0
    %p284 = por %p282, %p283
    %p285 = scmp.ne.s32.totalorder %s277, %s279
    %p286 = scmp.eq.s32.totalorder %s33, 5
    %p287 = por %p285, %p286
    %p288 = scmp.ne.s32.totalorder %s279, %s280
    %p289 = scmp.eq.s32.totalorder %s33, 0
    %p290 = por %p288, %p289
    %p291 = scmp.ne.s32.totalorder %s279, %s280
    %p292 = scmp.eq.s32.totalorder %s34, 5
    %p293 = por %p291, %p292
    %p295 = scmp.ne.s32.totalorder %s280, %s294
    %p296 = scmp.eq.s32.totalorder %s34, 0
    %p297 = por %p295, %p296
    %s299 = sadd.s32 %s298, 1
    %p302 = scmp.eq.s32.totalorder %s28, 5
    %p303 = scmp.ne.s32.totalorder %s298, %s300
    %p304 = scmp.eq.s32.totalorder %s28, 0
    %p305 = por %p303, %p304
    %p306 = scmp.ne.s32.totalorder %s298, %s300
    %p307 = scmp.eq.s32.totalorder %s33, 5
    %p308 = por %p306, %p307
    %p309 = scmp.ne.s32.totalorder %s300, %s301
    %p310 = scmp.eq.s32.totalorder %s33, 0
    %p311 = por %p309, %p310
    %p312 = scmp.ne.s32.totalorder %s300, %s301
    %p313 = scmp.eq.s32.totalorder %s34, 5
    %p314 = por %p312, %p313
    %p316 = scmp.ne.s32.totalorder %s301, %s315
    %p317 = scmp.eq.s32.totalorder %s34, 0
    %p318 = por %p316, %p317
    %s320 = sadd.s32 %s319, 1
    %p323 = scmp.eq.s32.totalorder %s28, 5
    %p324 = scmp.ne.s32.totalorder %s319, %s321
    %p325 = scmp.eq.s32.totalorder %s28, 0
    %p326 = por %p324, %p325
    %p327 = scmp.ne.s32.totalorder %s319, %s321
    %p328 = scmp.eq.s32.totalorder %s33, 5
    %p329 = por %p327, %p328
    %p330 = scmp.ne.s32.totalorder %s321, %s322
    %p331 = scmp.eq.s32.totalorder %s33, 0
    %p332 = por %p330, %p331
    %p333 = scmp.ne.s32.totalorder %s321, %s322
    %p334 = scmp.eq.s32.totalorder %s34, 5
    %p335 = por %p333, %p334
    %p337 = scmp.ne.s32.totalorder %s322, %s336
    %p338 = scmp.eq.s32.totalorder %s34, 0
    %p339 = por %p337, %p338
    %s341 = sadd.s32 %s340, 1
    %p344 = scmp.eq.s32.totalorder %s28, 5
    %p345 = scmp.ne.s32.totalorder %s340, %s342
    %p346 = scmp.eq.s32.totalorder %s28, 0
    %p347 = por %p345, %p346
    %p348 = scmp.ne.s32.totalorder %s340, %s342
    %p349 = scmp.eq.s32.totalorder %s33, 5
    %p350 = por %p348, %p349
    %p351 = scmp.ne.s32.totalorder %s342, %s343
    %p352 = scmp.eq.s32.totalorder %s33, 0
    %p353 = por %p351, %p352
    %p354 = scmp.ne.s32.totalorder %s342, %s343
    %p355 = scmp.eq.s32.totalorder %s34, 5
    %p356 = por %p354, %p355
    %p358 = scmp.ne.s32.totalorder %s343, %s357
    %p359 = scmp.eq.s32.totalorder %s34, 0
    %p360 = por %p358, %p359
    %s362 = sadd.s32 %s361, 1
    %p365 = scmp.eq.s32.totalorder %s28, 5
    %p366 = scmp.ne.s32.totalorder %s361, %s363
    %p367 = scmp.eq.s32.totalorder %s28, 0
    %p368 = por %p366, %p367
    %p369 = scmp.ne.s32.totalorder %s361, %s363
    %p370 = scmp.eq.s32.totalorder %s33, 5
    %p371 = por %p369, %p370
    %p372 = scmp.ne.s32.totalorder %s363, %s364
    %p373 = scmp.eq.s32.totalorder %s33, 0
    %p374 = por %p372, %p373
    %p375 = scmp.ne.s32.totalorder %s363, %s364
    %p376 = scmp.eq.s32.totalorder %s34, 5
    %p377 = por %p375, %p376
    %p379 = scmp.ne.s32.totalorder %s364, %s378
    %p380 = scmp.eq.s32.totalorder %s34, 0
    %p381 = por %p379, %p380
    %s383 = sadd.s32 %s382, 1
    %p386 = scmp.eq.s32.totalorder %s28, 5
    %p387 = scmp.ne.s32.totalorder %s382, %s384
    %p388 = scmp.eq.s32.totalorder %s28, 0
    %p389 = por %p387, %p388
    %p390 = scmp.ne.s32.totalorder %s382, %s384
    %p391 = scmp.eq.s32.totalorder %s33, 5
    %p392 = por %p390, %p391
    %p393 = scmp.ne.s32.totalorder %s384, %s385
    %p394 = scmp.eq.s32.totalorder %s33, 0
    %p395 = por %p393, %p394
    %p396 = scmp.ne.s32.totalorder %s384, %s385
    %p397 = scmp.eq.s32.totalorder %s34, 5
    %p398 = por %p396, %p397
    %p400 = scmp.ne.s32.totalorder %s385, %s399
    %p401 = scmp.eq.s32.totalorder %s34, 0
    %p402 = por %p400, %p401
    %s404 = sadd.s32 %s403, 1
    %p407 = scmp.eq.s32.totalorder %s28, 5
    %p408 = scmp.ne.s32.totalorder %s403, %s405
    %p409 = scmp.eq.s32.totalorder %s28, 0
    %p410 = por %p408, %p409
    %p411 = scmp.ne.s32.totalorder %s403, %s405
    %p412 = scmp.eq.s32.totalorder %s33, 5
    %p413 = por %p411, %p412
    %p414 = scmp.ne.s32.totalorder %s405, %s406
    %p415 = scmp.eq.s32.totalorder %s33, 0
    %p416 = por %p414, %p415
    %p417 = scmp.ne.s32.totalorder %s405, %s406
    %p418 = scmp.eq.s32.totalorder %s34, 5
    %p419 = por %p417, %p418
    %p421 = scmp.ne.s32.totalorder %s406, %s420
    %p422 = scmp.eq.s32.totalorder %s34, 0
    %p423 = por %p421, %p422
    %s425 = sadd.s32 %s424, 1
    %p428 = scmp.eq.s32.totalorder %s28, 5
    %p429 = scmp.ne.s32.totalorder %s424, %s426
    %p430 = scmp.eq.s32.totalorder %s28, 0
    %p431 = por %p429, %p430
    %p432 = scmp.ne.s32.totalorder %s424, %s426
    %p433 = scmp.eq.s32.totalorder %s33, 5
    %p434 = por %p432, %p433
    %p435 = scmp.ne.s32.totalorder %s426, %s427
    %p436 = scmp.eq.s32.totalorder %s33, 0
    %p437 = por %p435, %p436
    %p438 = scmp.ne.s32.totalorder %s426, %s427
    %p439 = scmp.eq.s32.totalorder %s34, 5
    %p440 = por %p438, %p439
    %p442 = scmp.ne.s32.totalorder %s427, %s441
    %p443 = scmp.eq.s32.totalorder %s34, 0
    %p444 = por %p442, %p443
    %s446 = sadd.s32 %s445, 1
    %p449 = scmp.eq.s32.totalorder %s28, 5
    %p450 = scmp.ne.s32.totalorder %s445, %s447
    %p451 = scmp.eq.s32.totalorder %s28, 0
    %p452 = por %p450, %p451
    %p453 = scmp.ne.s32.totalorder %s445, %s447
    %p454 = scmp.eq.s32.totalorder %s33, 5
    %p455 = por %p453, %p454
    %p456 = scmp.ne.s32.totalorder %s447, %s448
    %p457 = scmp.eq.s32.totalorder %s33, 0
    %p458 = por %p456, %p457
    %p459 = scmp.ne.s32.totalorder %s447, %s448
    %p460 = scmp.eq.s32.totalorder %s34, 5
    %p461 = por %p459, %p460
    %p463 = scmp.ne.s32.totalorder %s448, %s462
    %p464 = scmp.eq.s32.totalorder %s34, 0
    %p465 = por %p463, %p464
    %s467 = sadd.s32 %s466, 1
    %p470 = scmp.eq.s32.totalorder %s28, 5
    %p471 = scmp.ne.s32.totalorder %s466, %s468
    %p472 = scmp.eq.s32.totalorder %s28, 0
    %p473 = por %p471, %p472
    %p474 = scmp.ne.s32.totalorder %s466, %s468
    %p475 = scmp.eq.s32.totalorder %s33, 5
    %p476 = por %p474, %p475
    %p477 = scmp.ne.s32.totalorder %s468, %s469
    %p478 = scmp.eq.s32.totalorder %s33, 0
    %p479 = por %p477, %p478
    %p480 = scmp.ne.s32.totalorder %s468, %s469
    %p481 = scmp.eq.s32.totalorder %s34, 5
    %p482 = por %p480, %p481
    %p484 = scmp.ne.s32.totalorder %s469, %s483
    %p485 = scmp.eq.s32.totalorder %s34, 0
    %p486 = por %p484, %p485
    %s488 = sadd.s32 %s487, 1
    %p491 = scmp.eq.s32.totalorder %s28, 5
    %p492 = scmp.ne.s32.totalorder %s487, %s489
    %p493 = scmp.eq.s32.totalorder %s28, 0
    %p494 = por %p492, %p493
    %p495 = scmp.ne.s32.totalorder %s487, %s489
    %p496 = scmp.eq.s32.totalorder %s33, 5
    %p497 = por %p495, %p496
    %p498 = scmp.ne.s32.totalorder %s489, %s490
    %p499 = scmp.eq.s32.totalorder %s33, 0
    %p500 = por %p498, %p499
    %p501 = scmp.ne.s32.totalorder %s489, %s490
    %p502 = scmp.eq.s32.totalorder %s34, 5
    %p503 = por %p501, %p502
    %p505 = scmp.ne.s32.totalorder %s490, %s504
    %p506 = scmp.eq.s32.totalorder %s34, 0
    %p507 = por %p505, %p506
    %s508 = ssub.s32 %s28, %s35
    %p509 = scmp.eq.s32.totalorder %s508, 0
    %s511 = sadd.s32 %s510, 1
    %s512 = scalar_select %p509, %s510, %s511
    %p515 = pneg %p509
    %p516 = scmp.eq.s32.totalorder %s28, 5
    %p517 = por %p515, %p516
    %p518 = scmp.ne.s32.totalorder %s510, %s513
    %p519 = scmp.eq.s32.totalorder %s28, 0
    %p520 = por %p518, %p519
    %p521 = scmp.ne.s32.totalorder %s510, %s513
    %p522 = scmp.eq.s32.totalorder %s33, 5
    %p523 = por %p521, %p522
    %p524 = scmp.ne.s32.totalorder %s513, %s514
    %p525 = scmp.eq.s32.totalorder %s33, 0
    %p526 = por %p524, %p525
    %p527 = scmp.ne.s32.totalorder %s513, %s514
    %p528 = scmp.eq.s32.totalorder %s34, 5
    %p529 = por %p527, %p528
    %p531 = scmp.ne.s32.totalorder %s514, %s530
    %p532 = scmp.eq.s32.totalorder %s34, 0
    %p533 = por %p531, %p532
    %p534 = scmp.le.s32.totalorder 1, %s28
    %p535 = scmp.lt.s32.totalorder %s28, 7
    %p536 = pnand %p534, %p535
    %p537 = pneg %p536
    // Predicated region
    $region9: #{msssim_forward.1} parent=5 // pred_check
      _
    $region10: #{msssim_forward.1} parent=5 // pred_check_branch
      %539 = sbr.rel (%p536) target = $region12
    $region11: #{msssim_forward.1} parent=5 // pred_region
      %s540 = ssub.s32 %s28, 1
      // Predicated region
      $region13: #{msssim_forward.1} parent=11 // pred_check
        %p541 = pneg %p101
      $region14: #{msssim_forward.1} parent=11 // pred_check_branch
        %543 = sbr.rel (%p541) target = $region16
      $region15: #{msssim_forward.1} parent=11 // pred_region
        _
      $region16: #{msssim_forward.1} parent=11 // pred_fallthru
        _
      // Predicated region
      $region17: #{msssim_forward.1} parent=11 // pred_check
        %p544 = pneg %p122
      $region18: #{msssim_forward.1} parent=11 // pred_check_branch
        %546 = sbr.rel (%p544) target = $region20
      $region19: #{msssim_forward.1} parent=11 // pred_region
        _
      $region20: #{msssim_forward.1} parent=11 // pred_fallthru
        _
      // Predicated region
      $region21: #{msssim_forward.1} parent=11 // pred_check
        %p547 = pneg %p143
      $region22: #{msssim_forward.1} parent=11 // pred_check_branch
        %549 = sbr.rel (%p547) target = $region24
      $region23: #{msssim_forward.1} parent=11 // pred_region
        _
      $region24: #{msssim_forward.1} parent=11 // pred_fallthru
        _
      // Predicated region
      $region25: #{msssim_forward.1} parent=11 // pred_check
        %p550 = pneg %p164
      $region26: #{msssim_forward.1} parent=11 // pred_check_branch
        %552 = sbr.rel (%p550) target = $region28
      $region27: #{msssim_forward.1} parent=11 // pred_region
        _
      $region28: #{msssim_forward.1} parent=11 // pred_fallthru
        _
      // Predicated region
      $region29: #{msssim_forward.1} parent=11 // pred_check
        %p553 = pneg %p185
      $region30: #{msssim_forward.1} parent=11 // pred_check_branch
        %555 = sbr.rel (%p553) target = $region32
      $region31: #{msssim_forward.1} parent=11 // pred_region
        _
      $region32: #{msssim_forward.1} parent=11 // pred_fallthru
        _
      // Predicated region
      $region33: #{msssim_forward.1} parent=11 // pred_check
        %p556 = pneg %p206
      $region34: #{msssim_forward.1} parent=11 // pred_check_branch
        %558 = sbr.rel (%p556) target = $region36
      $region35: #{msssim_forward.1} parent=11 // pred_region
        _
      $region36: #{msssim_forward.1} parent=11 // pred_fallthru
        _
      // Predicated region
      $region37: #{msssim_forward.1} parent=11 // pred_check
        %p559 = pneg %p227
      $region38: #{msssim_forward.1} parent=11 // pred_check_branch
        %561 = sbr.rel (%p559) target = $region40
      $region39: #{msssim_forward.1} parent=11 // pred_region
        _
      $region40: #{msssim_forward.1} parent=11 // pred_fallthru
        _
      // Predicated region
      $region41: #{msssim_forward.1} parent=11 // pred_check
        %p562 = pneg %p248
      $region42: #{msssim_forward.1} parent=11 // pred_check_branch
        %564 = sbr.rel (%p562) target = $region44
      $region43: #{msssim_forward.1} parent=11 // pred_region
        _
      $region44: #{msssim_forward.1} parent=11 // pred_fallthru
        _
      // Predicated region
      $region45: #{msssim_forward.1} parent=11 // pred_check
        %p565 = pneg %p269
      $region46: #{msssim_forward.1} parent=11 // pred_check_branch
        %567 = sbr.rel (%p565) target = $region48
      $region47: #{msssim_forward.1} parent=11 // pred_region
        _
      $region48: #{msssim_forward.1} parent=11 // pred_fallthru
        _
      // Predicated region
      $region49: #{msssim_forward.1} parent=11 // pred_check
        %p568 = pneg %p290
      $region50: #{msssim_forward.1} parent=11 // pred_check_branch
        %570 = sbr.rel (%p568) target = $region52
      $region51: #{msssim_forward.1} parent=11 // pred_region
        _
      $region52: #{msssim_forward.1} parent=11 // pred_fallthru
        _
      // Predicated region
      $region53: #{msssim_forward.1} parent=11 // pred_check
        %p571 = pneg %p311
      $region54: #{msssim_forward.1} parent=11 // pred_check_branch
        %573 = sbr.rel (%p571) target = $region56
      $region55: #{msssim_forward.1} parent=11 // pred_region
        _
      $region56: #{msssim_forward.1} parent=11 // pred_fallthru
        _
      // Predicated region
      $region57: #{msssim_forward.1} parent=11 // pred_check
        %p574 = pneg %p332
      $region58: #{msssim_forward.1} parent=11 // pred_check_branch
        %576 = sbr.rel (%p574) target = $region60
      $region59: #{msssim_forward.1} parent=11 // pred_region
        _
      $region60: #{msssim_forward.1} parent=11 // pred_fallthru
        _
      // Predicated region
      $region61: #{msssim_forward.1} parent=11 // pred_check
        %p577 = pneg %p353
      $region62: #{msssim_forward.1} parent=11 // pred_check_branch
        %579 = sbr.rel (%p577) target = $region64
      $region63: #{msssim_forward.1} parent=11 // pred_region
        _
      $region64: #{msssim_forward.1} parent=11 // pred_fallthru
        _
      // Predicated region
      $region65: #{msssim_forward.1} parent=11 // pred_check
        %p580 = pneg %p374
      $region66: #{msssim_forward.1} parent=11 // pred_check_branch
        %582 = sbr.rel (%p580) target = $region68
      $region67: #{msssim_forward.1} parent=11 // pred_region
        _
      $region68: #{msssim_forward.1} parent=11 // pred_fallthru
        _
      // Predicated region
      $region69: #{msssim_forward.1} parent=11 // pred_check
        %p583 = pneg %p395
      $region70: #{msssim_forward.1} parent=11 // pred_check_branch
        %585 = sbr.rel (%p583) target = $region72
      $region71: #{msssim_forward.1} parent=11 // pred_region
        _
      $region72: #{msssim_forward.1} parent=11 // pred_fallthru
        _
      // Predicated region
      $region73: #{msssim_forward.1} parent=11 // pred_check
        %p586 = pneg %p416
      $region74: #{msssim_forward.1} parent=11 // pred_check_branch
        %588 = sbr.rel (%p586) target = $region76
      $region75: #{msssim_forward.1} parent=11 // pred_region
        _
      $region76: #{msssim_forward.1} parent=11 // pred_fallthru
        _
      // Predicated region
      $region77: #{msssim_forward.1} parent=11 // pred_check
        %p589 = pneg %p437
      $region78: #{msssim_forward.1} parent=11 // pred_check_branch
        %591 = sbr.rel (%p589) target = $region80
      $region79: #{msssim_forward.1} parent=11 // pred_region
        _
      $region80: #{msssim_forward.1} parent=11 // pred_fallthru
        _
      // Predicated region
      $region81: #{msssim_forward.1} parent=11 // pred_check
        %p592 = pneg %p458
      $region82: #{msssim_forward.1} parent=11 // pred_check_branch
        %594 = sbr.rel (%p592) target = $region84
      $region83: #{msssim_forward.1} parent=11 // pred_region
        _
      $region84: #{msssim_forward.1} parent=11 // pred_fallthru
        _
      // Predicated region
      $region85: #{msssim_forward.1} parent=11 // pred_check
        %p595 = pneg %p479
      $region86: #{msssim_forward.1} parent=11 // pred_check_branch
        %597 = sbr.rel (%p595) target = $region88
      $region87: #{msssim_forward.1} parent=11 // pred_region
        _
      $region88: #{msssim_forward.1} parent=11 // pred_fallthru
        _
      // Predicated region
      $region89: #{msssim_forward.1} parent=11 // pred_check
        %p598 = pneg %p500
      $region90: #{msssim_forward.1} parent=11 // pred_check_branch
        %600 = sbr.rel (%p598) target = $region92
      $region91: #{msssim_forward.1} parent=11 // pred_region
        _
      $region92: #{msssim_forward.1} parent=11 // pred_fallthru
        _
    $region12: #{msssim_forward.1} parent=5 // pred_fallthru
      _
    %p601 = scmp.lt.s32.totalorder %s28, 6
    // Predicated region
    $region93: #{msssim_forward.1} parent=5 // pred_check
      %p602 = pneg %p601
    $region94: #{msssim_forward.1} parent=5 // pred_check_branch
      %604 = sbr.rel (%p602) target = $region96
    $region95: #{msssim_forward.1} parent=5 // pred_region
      // Predicated region
      $region97: #{msssim_forward.1} parent=95 // pred_check
        %p605 = pneg %p48
      $region98: #{msssim_forward.1} parent=95 // pred_check_branch
        %607 = sbr.rel (%p605) target = $region100
      $region99: #{msssim_forward.1} parent=95 // pred_region
        %p608 = scmp.lt.s32.totalorder %s28, 5
        %s609 = scalar_select %p608, %s28, 5
        %s610 = smul.addr %s609, 4
        %s611 = smul.addr %s610, 8
        %s612 = scalar_lea.vmem %s0, %s611
      $region100: #{msssim_forward.1} parent=95 // pred_fallthru
        _
      // Predicated region
      $region101: #{msssim_forward.1} parent=95 // pred_check
        %p613 = pneg %p74
      $region102: #{msssim_forward.1} parent=95 // pred_check_branch
        %615 = sbr.rel (%p613) target = $region104
      $region103: #{msssim_forward.1} parent=95 // pred_region
        %p616 = scmp.lt.s32.totalorder %s28, 5
        %s617 = scalar_select %p616, %s28, 5
        %s618 = smul.addr %s617, 4
        %s619 = smul.addr %s618, 8
        %s620 = scalar_lea.vmem %s1, %s619
      $region104: #{msssim_forward.1} parent=95 // pred_fallthru
        _
    $region96: #{msssim_forward.1} parent=5 // pred_fallthru
      _
    %p621 = scmp.le.s32.totalorder 1, %s28
    %p622 = scmp.lt.s32.totalorder %s28, 7
    %p623 = pnand %p621, %p622
    %p624 = pneg %p623
    // Predicated region
    $region105: #{msssim_forward.1} parent=5 // pred_check
      _
    $region106: #{msssim_forward.1} parent=5 // pred_check_branch
      %626 = sbr.rel (%p623) target = $region108
    $region107: #{msssim_forward.1} parent=5 // pred_region
      %s627 = ssub.s32 %s28, 1
      %p628 = scmp.lt.s32.totalorder %s33, 5
      %s629 = scalar_select %p628, %s33, 5
      %s630 = smul.addr %s629, 4
      %s631 = smul.addr %s630, 8
      %s632 = scalar_lea.vmem %s0, %s631
      %p633 = pneg %p54
      %p634 = pneg %p51
      %p635 = scmp.lt.s32.totalorder %s33, 5
      %s636 = scalar_select %p635, %s33, 5
      %s637 = smul.addr %s636, 4
      %s638 = smul.addr %s637, 8
      %s639 = scalar_lea.vmem %s1, %s638
      %p640 = pneg %p80
      %p641 = pneg %p77
      %p642 = pneg %p101
      %p643 = pneg %p98
      %p644 = pneg %p122
      %p645 = pneg %p119
      %p646 = pneg %p143
      %p647 = pneg %p140
      %p648 = pneg %p164
      %p649 = pneg %p161
      %p650 = pneg %p185
      %p651 = pneg %p182
      %p652 = pneg %p206
      %p653 = pneg %p203
      %p654 = pneg %p227
      %p655 = pneg %p224
      %p656 = pneg %p248
      %p657 = pneg %p245
      %p658 = pneg %p269
      %p659 = pneg %p266
      %p660 = pneg %p290
      %p661 = pneg %p287
      %p662 = pneg %p311
      %p663 = pneg %p308
      %p664 = pneg %p332
      %p665 = pneg %p329
      %p666 = pneg %p353
      %p667 = pneg %p350
      %p668 = pneg %p374
      %p669 = pneg %p371
      %p670 = pneg %p395
      %p671 = pneg %p392
      %p672 = pneg %p416
      %p673 = pneg %p413
      %p674 = pneg %p437
      %p675 = pneg %p434
      %p676 = pneg %p458
      %p677 = pneg %p455
      %p678 = pneg %p479
      %p679 = pneg %p476
      %p680 = pneg %p500
      %p681 = pneg %p497
      %p682 = pneg %p526
      %p683 = pneg %p523
      %p684 = scmp.lt.s32.totalorder %s33, 5
      %s685 = scalar_select %p684, %s33, 5
      %s686 = smul.addr %s685, 4
      %s687 = smul.addr %s686, 8
      %s688 = scalar_lea.vmem %s22, %s687
      %p689 = scmp.lt.s32.totalorder %s33, 5
      %s690 = scalar_select %p689, %s33, 5
      %s691 = smul.addr %s690, 4
      %s692 = smul.addr %s691, 8
      %s693 = scalar_lea.vmem %s0, %s692
      %p694 = scmp.lt.s32.totalorder %s33, 5
      %s695 = scalar_select %p694, %s33, 5
      %s696 = smul.addr %s695, 4
      %s697 = smul.addr %s696, 8
      %s698 = scalar_lea.vmem %s1, %s697
      %p699 = scmp.lt.s32.totalorder %s33, 5
      %s700 = scalar_select %p699, %s33, 5
      %s701 = smul.addr %s700, 4
      %s702 = smul.addr %s701, 8
      %s703 = scalar_lea.vmem %s22, %s702
      %v704 = vld [vmem:[%s693] sm:$0xff]
      %v705 = vld [vmem:[%s693 + $0x8] sm:$0xff]
      %v706 = vld [vmem:[%s693 + $0x10] sm:$0xff]
      %v707 = vld [vmem:[%s693 + $0x18] sm:$0xff]
      %v708 = vld [vmem:[%s698] sm:$0xff]
      %v709 = vld [vmem:[%s698 + $0x8] sm:$0xff]
      %v710 = vld [vmem:[%s698 + $0x10] sm:$0xff]
      %v711 = vld [vmem:[%s698 + $0x18] sm:$0xff]
      %v712 = vld [vmem:[%s2] sm:$0xff]
      %v713 = vld [vmem:[%s2 + $0x8] sm:$0xff]
      %v714 = vld [vmem:[%s2 + $0x10] sm:$0xff]
      %v715 = vld [vmem:[%s2 + $0x18] sm:$0xff]
      %v716 = vld [vmem:[%s3] sm:$0xff]
      %v717 = vld [vmem:[%s3 + $0x8] sm:$0xff]
      %v718 = vld [vmem:[%s3 + $0x10] sm:$0xff]
      %v719 = vld [vmem:[%s3 + $0x18] sm:$0xff]
      %v720 = vmul.f32 %v704, %v704
      %v721 = vmul.f32 %v705, %v705
      %v722 = vmul.f32 %v706, %v706
      %v723 = vmul.f32 %v707, %v707
      %v724 = vmul.f32 %v708, %v708
      %v725 = vmul.f32 %v709, %v709
      %v726 = vmul.f32 %v710, %v710
      %v727 = vmul.f32 %v711, %v711
      %v728 = vmul.f32 %v704, %v708
      %v729 = vmul.f32 %v705, %v709
      %v730 = vmul.f32 %v706, %v710
      %v731 = vmul.f32 %v707, %v711
      %vm732 = vcmask 261120
      %v734 = vsel %vm732, %v704, 0
      %v737 = vsel %vm732, %v705, 0
      %v740 = vsel %vm732, %v706, 0
      %v743 = vsel %vm732, %v707, 0
      %v746 = vsel %vm732, %v708, 0
      %v749 = vsel %vm732, %v709, 0
      %v752 = vsel %vm732, %v710, 0
      %v755 = vsel %vm732, %v711, 0
      %v758 = vsel %vm732, %v720, 0
      %v761 = vsel %vm732, %v721, 0
      %v764 = vsel %vm732, %v722, 0
      %v767 = vsel %vm732, %v723, 0
      %v770 = vsel %vm732, %v724, 0
      %v773 = vsel %vm732, %v725, 0
      %v776 = vsel %vm732, %v726, 0
      %v779 = vsel %vm732, %v727, 0
      %v782 = vsel %vm732, %v728, 0
      %v785 = vsel %vm732, %v729, 0
      %v788 = vsel %vm732, %v730, 0
      %v791 = vsel %vm732, %v731, 0
      %793 = vmatprep.subr.mxu0 0.0
      %794 = vmatpush1.msra.mxu0 %v716
      %795 = vmatprep.subr.mxu0 0.0
      %796 = vmatpush1.msra.mxu0 %v717
      %797 = vmatprep.subr.mxu0 0.0
      %798 = vmatpush1.msra.mxu0 %v718
      %799 = vmatprep.subr.mxu0 0.0
      %800 = vmatpush1.msra.mxu0 %v719
      %801 = vmatprep.subr.mxu0 0.0
      %802 = vmatpush1.msra.mxu0 0.0
      %803 = vmatprep.subr.mxu0 0.0
      %804 = vmatpush1.msra.mxu0 0.0
      %805 = vmatprep.subr.mxu0 0.0
      %806 = vmatpush1.msra.mxu0 0.0
      %807 = vmatprep.subr.mxu0 0.0
      %808 = vmatpush1.msra.mxu0 0.0
      %809 = vmatprep.subr.mxu0 0.0
      %810 = vmatpush1.msra.mxu0 0.0
      %811 = vmatprep.subr.mxu0 0.0
      %812 = vmatpush1.msra.mxu0 0.0
      %813 = vmatprep.subr.mxu0 0.0
      %814 = vmatpush1.msra.mxu0 0.0
      %815 = vmatprep.subr.mxu0 0.0
      %816 = vmatpush1.msra.mxu0 0.0
      %817 = vmatprep.subr.mxu0 0.0
      %818 = vmatpush1.msra.mxu0 0.0
      %819 = vmatprep.subr.mxu0 0.0
      %820 = vmatpush1.msra.mxu0 0.0
      %821 = vmatprep.subr.mxu0 0.0
      %822 = vmatpush1.msra.mxu0 0.0
      %823 = vmatprep.subr.mxu0 0.0
      %824 = vmatpush1.msra.mxu0 0.0
      %825 = vmatprep.subr.mxu0 0.0
      %826 = vmatpush1.msra.mxu0 0.0
      %827 = vmatprep.subr.mxu0 0.0
      %828 = vmatpush1.msra.mxu0 0.0
      %829 = vmatprep.subr.mxu0 0.0
      %830 = vmatpush1.msra.mxu0 0.0
      %831 = vmatprep.subr.mxu0 0.0
      %832 = vmatpush1.msra.mxu0 0.0
      %833 = vmatprep.subr.mxu0 0.0
      %834 = vmatpush1.msra.mxu0 0.0
      %835 = vmatprep.subr.mxu0 0.0
      %836 = vmatpush1.msra.mxu0 0.0
      %837 = vmatprep.subr.mxu0 0.0
      %838 = vmatpush1.msra.mxu0 0.0
      %839 = vmatprep.subr.mxu0 0.0
      %840 = vmatpush1.msra.mxu0 0.0
      %841 = vmatprep.subr.mxu0 0.0
      %842 = vmatpush1.msra.mxu0 0.0
      %843 = vmatprep.subr.mxu0 0.0
      %844 = vmatpush1.msra.mxu0 0.0
      %845 = vmatprep.subr.mxu0 0.0
      %846 = vmatpush1.msra.mxu0 0.0
      %847 = vmatprep.subr.mxu0 0.0
      %848 = vmatpush1.msra.mxu0 0.0
      %849 = vmatprep.subr.mxu0 0.0
      %850 = vmatpush1.msra.mxu0 0.0
      %851 = vmatprep.subr.mxu0 0.0
      %852 = vmatpush1.msra.mxu0 0.0
      %853 = vmatprep.subr.mxu0 0.0
      %854 = vmatpush1.msra.mxu0 0.0
      %855 = vmatprep.subr.mxu0 0.0
      %856 = vmatpush1.msra.mxu0 0.0
      %857 = vmatprep.mubr.f32.mxu0 0.0
      %858 = vmatmul.mubr.f32.gmra.mrb[0].mxu0 %v734
      %v859 = vpop.f32.mrb[0].mxu0
      %v860 = vadd.f32 0.0, %v859
      %v861 = vpop.f32.mrb[0].mxu0
      %862 = vmatprep.mubr.f32.mxu0 0.0
      %863 = vmatmul.mubr.f32.gmra.mrb[0].mxu0 %v737
      %v864 = vpop.f32.mrb[0].mxu0
      %v865 = vadd.f32 0.0, %v864
      %v866 = vpop.f32.mrb[0].mxu0
      %867 = vmatprep.mubr.f32.mxu0 0.0
      %868 = vmatmul.mubr.f32.gmra.mrb[0].mxu0 %v740
      %v869 = vpop.f32.mrb[0].mxu0
      %v870 = vadd.f32 0.0, %v869
      %v871 = vpop.f32.mrb[0].mxu0
      %872 = vmatprep.mubr.f32.mxu0 0.0
      %873 = vmatmul.mubr.f32.gmra.mrb[0].mxu0 %v743
      %v874 = vpop.f32.mrb[0].mxu0
      %v875 = vadd.f32 0.0, %v874
      %v876 = vpop.f32.mrb[0].mxu0
      %877 = vmatprep.mubr.f32.mxu0 0.0
      %878 = vmatmul.mubr.f32.gmra.mrb[0].mxu0 %v746
      %v879 = vpop.f32.mrb[0].mxu0
      %v880 = vadd.f32 0.0, %v879
      %v881 = vpop.f32.mrb[0].mxu0
      %882 = vmatprep.mubr.f32.mxu0 0.0
      %883 = vmatmul.mubr.f32.gmra.mrb[0].mxu0 %v749
      %v884 = vpop.f32.mrb[0].mxu0
      %v885 = vadd.f32 0.0, %v884
      %v886 = vpop.f32.mrb[0].mxu0
      %887 = vmatprep.mubr.f32.mxu0 0.0
      %888 = vmatmul.mubr.f32.gmra.mrb[0].mxu0 %v752
      %v889 = vpop.f32.mrb[0].mxu0
      %v890 = vadd.f32 0.0, %v889
      %v891 = vpop.f32.mrb[0].mxu0
      %892 = vmatprep.mubr.f32.mxu0 0.0
      %893 = vmatmul.mubr.f32.gmra.mrb[0].mxu0 %v755
      %v894 = vpop.f32.mrb[0].mxu0
      %v895 = vadd.f32 0.0, %v894
      %v896 = vpop.f32.mrb[0].mxu0
      %897 = vmatprep.mubr.f32.mxu0 0.0
      %898 = vmatmul.mubr.f32.gmra.mrb[0].mxu0 %v758
      %v899 = vpop.f32.mrb[0].mxu0
      %v900 = vadd.f32 0.0, %v899
      %v901 = vpop.f32.mrb[0].mxu0
      %902 = vmatprep.mubr.f32.mxu0 0.0
      %903 = vmatmul.mubr.f32.gmra.mrb[0].mxu0 %v761
      %v904 = vpop.f32.mrb[0].mxu0
      %v905 = vadd.f32 0.0, %v904
      %v906 = vpop.f32.mrb[0].mxu0
      %907 = vmatprep.mubr.f32.mxu0 0.0
      %908 = vmatmul.mubr.f32.gmra.mrb[0].mxu0 %v764
      %v909 = vpop.f32.mrb[0].mxu0
      %v910 = vadd.f32 0.0, %v909
      %v911 = vpop.f32.mrb[0].mxu0
      %912 = vmatprep.mubr.f32.mxu0 0.0
      %913 = vmatmul.mubr.f32.gmra.mrb[0].mxu0 %v767
      %v914 = vpop.f32.mrb[0].mxu0
      %v915 = vadd.f32 0.0, %v914
      %v916 = vpop.f32.mrb[0].mxu0
      %917 = vmatprep.mubr.f32.mxu0 0.0
      %918 = vmatmul.mubr.f32.gmra.mrb[0].mxu0 %v770
      %v919 = vpop.f32.mrb[0].mxu0
      %v920 = vadd.f32 0.0, %v919
      %v921 = vpop.f32.mrb[0].mxu0
      %922 = vmatprep.mubr.f32.mxu0 0.0
      %923 = vmatmul.mubr.f32.gmra.mrb[0].mxu0 %v773
      %v924 = vpop.f32.mrb[0].mxu0
      %v925 = vadd.f32 0.0, %v924
      %v926 = vpop.f32.mrb[0].mxu0
      %927 = vmatprep.mubr.f32.mxu0 0.0
      %928 = vmatmul.mubr.f32.gmra.mrb[0].mxu0 %v776
      %v929 = vpop.f32.mrb[0].mxu0
      %v930 = vadd.f32 0.0, %v929
      %v931 = vpop.f32.mrb[0].mxu0
      %932 = vmatprep.mubr.f32.mxu0 0.0
      %933 = vmatmul.mubr.f32.gmra.mrb[0].mxu0 %v779
      %v934 = vpop.f32.mrb[0].mxu0
      %v935 = vadd.f32 0.0, %v934
      %v936 = vpop.f32.mrb[0].mxu0
      %937 = vmatprep.mubr.f32.mxu0 0.0
      %938 = vmatmul.mubr.f32.gmra.mrb[0].mxu0 %v782
      %v939 = vpop.f32.mrb[0].mxu0
      %v940 = vadd.f32 0.0, %v939
      %v941 = vpop.f32.mrb[0].mxu0
      %942 = vmatprep.mubr.f32.mxu0 0.0
      %943 = vmatmul.mubr.f32.gmra.mrb[0].mxu0 %v785
      %v944 = vpop.f32.mrb[0].mxu0
      %v945 = vadd.f32 0.0, %v944
      %v946 = vpop.f32.mrb[0].mxu0
      %947 = vmatprep.mubr.f32.mxu0 0.0
      %948 = vmatmul.mubr.f32.gmra.mrb[0].mxu0 %v788
      %v949 = vpop.f32.mrb[0].mxu0
      %v950 = vadd.f32 0.0, %v949
      %v951 = vpop.f32.mrb[0].mxu0
      %952 = vmatprep.mubr.f32.mxu0 0.0
      %953 = vmatmul.mubr.f32.gmra.mrb[0].mxu0 %v791
      %v954 = vpop.f32.mrb[0].mxu0
      %v955 = vadd.f32 0.0, %v954
      %v956 = vpop.f32.mrb[0].mxu0
      %957 = vdwg.mxu0
      %v959 = vsel %vm732, %v712, 0
      %v962 = vsel %vm732, %v713, 0
      %v965 = vsel %vm732, %v714, 0
      %v968 = vsel %vm732, %v715, 0
      %970 = vmatprep.subr.mxu0 0.0
      %971 = vmatpush1.msra.mxu0 %v860
      %972 = vmatprep.subr.mxu0 0.0
      %973 = vmatpush1.msra.mxu0 %v865
      %974 = vmatprep.subr.mxu0 0.0
      %975 = vmatpush1.msra.mxu0 %v870
      %976 = vmatprep.subr.mxu0 0.0
      %977 = vmatpush1.msra.mxu0 %v875
      %978 = vmatprep.subr.mxu0 0.0
      %979 = vmatpush1.msra.mxu0 0.0
      %980 = vmatprep.subr.mxu0 0.0
      %981 = vmatpush1.msra.mxu0 0.0
      %982 = vmatprep.subr.mxu0 0.0
      %983 = vmatpush1.msra.mxu0 0.0
      %984 = vmatprep.subr.mxu0 0.0
      %985 = vmatpush1.msra.mxu0 0.0
      %986 = vmatprep.subr.mxu0 0.0
      %987 = vmatpush1.msra.mxu0 0.0
      %988 = vmatprep.subr.mxu0 0.0
      %989 = vmatpush1.msra.mxu0 0.0
      %990 = vmatprep.subr.mxu0 0.0
      %991 = vmatpush1.msra.mxu0 0.0
      %992 = vmatprep.subr.mxu0 0.0
      %993 = vmatpush1.msra.mxu0 0.0
      %994 = vmatprep.subr.mxu0 0.0
      %995 = vmatpush1.msra.mxu0 0.0
      %996 = vmatprep.subr.mxu0 0.0
      %997 = vmatpush1.msra.mxu0 0.0
      %998 = vmatprep.subr.mxu0 0.0
      %999 = vmatpush1.msra.mxu0 0.0
      %1000 = vmatprep.subr.mxu0 0.0
      %1001 = vmatpush1.msra.mxu0 0.0
      %1002 = vmatprep.subr.mxu0 0.0
      %1003 = vmatpush1.msra.mxu0 0.0
      %1004 = vmatprep.subr.mxu0 0.0
      %1005 = vmatpush1.msra.mxu0 0.0
      %1006 = vmatprep.subr.mxu0 0.0
      %1007 = vmatpush1.msra.mxu0 0.0
      %1008 = vmatprep.subr.mxu0 0.0
      %1009 = vmatpush1.msra.mxu0 0.0
      %1010 = vmatprep.subr.mxu0 0.0
      %1011 = vmatpush1.msra.mxu0 0.0
      %1012 = vmatprep.subr.mxu0 0.0
      %1013 = vmatpush1.msra.mxu0 0.0
      %1014 = vmatprep.subr.mxu0 0.0
      %1015 = vmatpush1.msra.mxu0 0.0
      %1016 = vmatprep.subr.mxu0 0.0
      %1017 = vmatpush1.msra.mxu0 0.0
      %1018 = vmatprep.subr.mxu0 0.0
      %1019 = vmatpush1.msra.mxu0 0.0
      %1020 = vmatprep.subr.mxu0 0.0
      %1021 = vmatpush1.msra.mxu0 0.0
      %1022 = vmatprep.subr.mxu0 0.0
      %1023 = vmatpush1.msra.mxu0 0.0
      %1024 = vmatprep.subr.mxu0 0.0
      %1025 = vmatpush1.msra.mxu0 0.0
      %1026 = vmatprep.subr.mxu0 0.0
      %1027 = vmatpush1.msra.mxu0 0.0
      %1028 = vmatprep.subr.mxu0 0.0
      %1029 = vmatpush1.msra.mxu0 0.0
      %1030 = vmatprep.subr.mxu0 0.0
      %1031 = vmatpush1.msra.mxu0 0.0
      %1032 = vmatprep.subr.mxu0 0.0
      %1033 = vmatpush1.msra.mxu0 0.0
      %1034 = vmatprep.mubr.f32.mxu0 0.0
      %1035 = vmatmul.mubr.f32.gmra.mrb[0].mxu0 %v959
      %v1036 = vpop.f32.mrb[0].mxu0
      %v1037 = vadd.f32 0.0, %v1036
      %v1038 = vpop.f32.mrb[0].mxu0
      %1039 = vmatprep.mubr.f32.mxu0 0.0
      %1040 = vmatmul.mubr.f32.gmra.mrb[0].mxu0 %v962
      %v1041 = vpop.f32.mrb[0].mxu0
      %v1042 = vadd.f32 0.0, %v1041
      %v1043 = vpop.f32.mrb[0].mxu0
      %1044 = vmatprep.mubr.f32.mxu0 0.0
      %1045 = vmatmul.mubr.f32.gmra.mrb[0].mxu0 %v965
      %v1046 = vpop.f32.mrb[0].mxu0
      %v1047 = vadd.f32 0.0, %v1046
      %v1048 = vpop.f32.mrb[0].mxu0
      %1049 = vmatprep.mubr.f32.mxu0 0.0
      %1050 = vmatmul.mubr.f32.gmra.mrb[0].mxu0 %v968
      %v1051 = vpop.f32.mrb[0].mxu0
      %v1052 = vadd.f32 0.0, %v1051
      %v1053 = vpop.f32.mrb[0].mxu0
      %1054 = vdwg.mxu0
      %1055 = vmatprep.subr.mxu0 0.0
      %1056 = vmatpush1.msra.mxu0 %v880
      %1057 = vmatprep.subr.mxu0 0.0
      %1058 = vmatpush1.msra.mxu0 %v885
      %1059 = vmatprep.subr.mxu0 0.0
      %1060 = vmatpush1.msra.mxu0 %v890
      %1061 = vmatprep.subr.mxu0 0.0
      %1062 = vmatpush1.msra.mxu0 %v895
      %1063 = vmatprep.subr.mxu0 0.0
      %1064 = vmatpush1.msra.mxu0 0.0
      %1065 = vmatprep.subr.mxu0 0.0
      %1066 = vmatpush1.msra.mxu0 0.0
      %1067 = vmatprep.subr.mxu0 0.0
      %1068 = vmatpush1.msra.mxu0 0.0
      %1069 = vmatprep.subr.mxu0 0.0
      %1070 = vmatpush1.msra.mxu0 0.0
      %1071 = vmatprep.subr.mxu0 0.0
      %1072 = vmatpush1.msra.mxu0 0.0
      %1073 = vmatprep.subr.mxu0 0.0
      %1074 = vmatpush1.msra.mxu0 0.0
      %1075 = vmatprep.subr.mxu0 0.0
      %1076 = vmatpush1.msra.mxu0 0.0
      %1077 = vmatprep.subr.mxu0 0.0
      %1078 = vmatpush1.msra.mxu0 0.0
      %1079 = vmatprep.subr.mxu0 0.0
      %1080 = vmatpush1.msra.mxu0 0.0
      %1081 = vmatprep.subr.mxu0 0.0
      %1082 = vmatpush1.msra.mxu0 0.0
      %1083 = vmatprep.subr.mxu0 0.0
      %1084 = vmatpush1.msra.mxu0 0.0
      %1085 = vmatprep.subr.mxu0 0.0
      %1086 = vmatpush1.msra.mxu0 0.0
      %1087 = vmatprep.subr.mxu0 0.0
      %1088 = vmatpush1.msra.mxu0 0.0
      %1089 = vmatprep.subr.mxu0 0.0
      %1090 = vmatpush1.msra.mxu0 0.0
      %1091 = vmatprep.subr.mxu0 0.0
      %1092 = vmatpush1.msra.mxu0 0.0
      %1093 = vmatprep.subr.mxu0 0.0
      %1094 = vmatpush1.msra.mxu0 0.0
      %1095 = vmatprep.subr.mxu0 0.0
      %1096 = vmatpush1.msra.mxu0 0.0
      %1097 = vmatprep.subr.mxu0 0.0
      %1098 = vmatpush1.msra.mxu0 0.0
      %1099 = vmatprep.subr.mxu0 0.0
      %1100 = vmatpush1.msra.mxu0 0.0
      %1101 = vmatprep.subr.mxu0 0.0
      %1102 = vmatpush1.msra.mxu0 0.0
      %1103 = vmatprep.subr.mxu0 0.0
      %1104 = vmatpush1.msra.mxu0 0.0
      %1105 = vmatprep.subr.mxu0 0.0
      %1106 = vmatpush1.msra.mxu0 0.0
      %1107 = vmatprep.subr.mxu0 0.0
      %1108 = vmatpush1.msra.mxu0 0.0
      %1109 = vmatprep.subr.mxu0 0.0
      %1110 = vmatpush1.msra.mxu0 0.0
      %1111 = vmatprep.subr.mxu0 0.0
      %1112 = vmatpush1.msra.mxu0 0.0
      %1113 = vmatprep.subr.mxu0 0.0
      %1114 = vmatpush1.msra.mxu0 0.0
      %1115 = vmatprep.subr.mxu0 0.0
      %1116 = vmatpush1.msra.mxu0 0.0
      %1117 = vmatprep.subr.mxu0 0.0
      %1118 = vmatpush1.msra.mxu0 0.0
      %1119 = vmatprep.mubr.f32.mxu0 0.0
      %1120 = vmatmul.mubr.f32.gmra.mrb[0].mxu0 %v959
      %v1121 = vpop.f32.mrb[0].mxu0
      %v1122 = vadd.f32 0.0, %v1121
      %v1123 = vpop.f32.mrb[0].mxu0
      %1124 = vmatprep.mubr.f32.mxu0 0.0
      %1125 = vmatmul.mubr.f32.gmra.mrb[0].mxu0 %v962
      %v1126 = vpop.f32.mrb[0].mxu0
      %v1127 = vadd.f32 0.0, %v1126
      %v1128 = vpop.f32.mrb[0].mxu0
      %1129 = vmatprep.mubr.f32.mxu0 0.0
      %1130 = vmatmul.mubr.f32.gmra.mrb[0].mxu0 %v965
      %v1131 = vpop.f32.mrb[0].mxu0
      %v1132 = vadd.f32 0.0, %v1131
      %v1133 = vpop.f32.mrb[0].mxu0
      %1134 = vmatprep.mubr.f32.mxu0 0.0
      %1135 = vmatmul.mubr.f32.gmra.mrb[0].mxu0 %v968
      %v1136 = vpop.f32.mrb[0].mxu0
      %v1137 = vadd.f32 0.0, %v1136
      %v1138 = vpop.f32.mrb[0].mxu0
      %1139 = vdwg.mxu0
      %1140 = vmatprep.subr.mxu0 0.0
      %1141 = vmatpush1.msra.mxu0 %v900
      %1142 = vmatprep.subr.mxu0 0.0
      %1143 = vmatpush1.msra.mxu0 %v905
      %1144 = vmatprep.subr.mxu0 0.0
      %1145 = vmatpush1.msra.mxu0 %v910
      %1146 = vmatprep.subr.mxu0 0.0
      %1147 = vmatpush1.msra.mxu0 %v915
      %1148 = vmatprep.subr.mxu0 0.0
      %1149 = vmatpush1.msra.mxu0 0.0
      %1150 = vmatprep.subr.mxu0 0.0
      %1151 = vmatpush1.msra.mxu0 0.0
      %1152 = vmatprep.subr.mxu0 0.0
      %1153 = vmatpush1.msra.mxu0 0.0
      %1154 = vmatprep.subr.mxu0 0.0
      %1155 = vmatpush1.msra.mxu0 0.0
      %1156 = vmatprep.subr.mxu0 0.0
      %1157 = vmatpush1.msra.mxu0 0.0
      %1158 = vmatprep.subr.mxu0 0.0
      %1159 = vmatpush1.msra.mxu0 0.0
      %1160 = vmatprep.subr.mxu0 0.0
      %1161 = vmatpush1.msra.mxu0 0.0
      %1162 = vmatprep.subr.mxu0 0.0
      %1163 = vmatpush1.msra.mxu0 0.0
      %1164 = vmatprep.subr.mxu0 0.0
      %1165 = vmatpush1.msra.mxu0 0.0
      %1166 = vmatprep.subr.mxu0 0.0
      %1167 = vmatpush1.msra.mxu0 0.0
      %1168 = vmatprep.subr.mxu0 0.0
      %1169 = vmatpush1.msra.mxu0 0.0
      %1170 = vmatprep.subr.mxu0 0.0
      %1171 = vmatpush1.msra.mxu0 0.0
      %1172 = vmatprep.subr.mxu0 0.0
      %1173 = vmatpush1.msra.mxu0 0.0
      %1174 = vmatprep.subr.mxu0 0.0
      %1175 = vmatpush1.msra.mxu0 0.0
      %1176 = vmatprep.subr.mxu0 0.0
      %1177 = vmatpush1.msra.mxu0 0.0
      %1178 = vmatprep.subr.mxu0 0.0
      %1179 = vmatpush1.msra.mxu0 0.0
      %1180 = vmatprep.subr.mxu0 0.0
      %1181 = vmatpush1.msra.mxu0 0.0
      %1182 = vmatprep.subr.mxu0 0.0
      %1183 = vmatpush1.msra.mxu0 0.0
      %1184 = vmatprep.subr.mxu0 0.0
      %1185 = vmatpush1.msra.mxu0 0.0
      %1186 = vmatprep.subr.mxu0 0.0
      %1187 = vmatpush1.msra.mxu0 0.0
      %1188 = vmatprep.subr.mxu0 0.0
      %1189 = vmatpush1.msra.mxu0 0.0
      %1190 = vmatprep.subr.mxu0 0.0
      %1191 = vmatpush1.msra.mxu0 0.0
      %1192 = vmatprep.subr.mxu0 0.0
      %1193 = vmatpush1.msra.mxu0 0.0
      %1194 = vmatprep.subr.mxu0 0.0
      %1195 = vmatpush1.msra.mxu0 0.0
      %1196 = vmatprep.subr.mxu0 0.0
      %1197 = vmatpush1.msra.mxu0 0.0
      %1198 = vmatprep.subr.mxu0 0.0
      %1199 = vmatpush1.msra.mxu0 0.0
      %1200 = vmatprep.subr.mxu0 0.0
      %1201 = vmatpush1.msra.mxu0 0.0
      %1202 = vmatprep.subr.mxu0 0.0
      %1203 = vmatpush1.msra.mxu0 0.0
      %1204 = vmatprep.mubr.f32.mxu0 0.0
      %1205 = vmatmul.mubr.f32.gmra.mrb[0].mxu0 %v959
      %v1206 = vpop.f32.mrb[0].mxu0
      %v1207 = vadd.f32 0.0, %v1206
      %v1208 = vpop.f32.mrb[0].mxu0
      %1209 = vmatprep.mubr.f32.mxu0 0.0
      %1210 = vmatmul.mubr.f32.gmra.mrb[0].mxu0 %v962
      %v1211 = vpop.f32.mrb[0].mxu0
      %v1212 = vadd.f32 0.0, %v1211
      %v1213 = vpop.f32.mrb[0].mxu0
      %1214 = vmatprep.mubr.f32.mxu0 0.0
      %1215 = vmatmul.mubr.f32.gmra.mrb[0].mxu0 %v965
      %v1216 = vpop.f32.mrb[0].mxu0
      %v1217 = vadd.f32 0.0, %v1216
      %v1218 = vpop.f32.mrb[0].mxu0
      %1219 = vmatprep.mubr.f32.mxu0 0.0
      %1220 = vmatmul.mubr.f32.gmra.mrb[0].mxu0 %v968
      %v1221 = vpop.f32.mrb[0].mxu0
      %v1222 = vadd.f32 0.0, %v1221
      %v1223 = vpop.f32.mrb[0].mxu0
      %1224 = vdwg.mxu0
      %1225 = vmatprep.subr.mxu0 0.0
      %1226 = vmatpush1.msra.mxu0 %v920
      %1227 = vmatprep.subr.mxu0 0.0
      %1228 = vmatpush1.msra.mxu0 %v925
      %1229 = vmatprep.subr.mxu0 0.0
      %1230 = vmatpush1.msra.mxu0 %v930
      %1231 = vmatprep.subr.mxu0 0.0
      %1232 = vmatpush1.msra.mxu0 %v935
      %1233 = vmatprep.subr.mxu0 0.0
      %1234 = vmatpush1.msra.mxu0 0.0
      %1235 = vmatprep.subr.mxu0 0.0
      %1236 = vmatpush1.msra.mxu0 0.0
      %1237 = vmatprep.subr.mxu0 0.0
      %1238 = vmatpush1.msra.mxu0 0.0
      %1239 = vmatprep.subr.mxu0 0.0
      %1240 = vmatpush1.msra.mxu0 0.0
      %1241 = vmatprep.subr.mxu0 0.0
      %1242 = vmatpush1.msra.mxu0 0.0
      %1243 = vmatprep.subr.mxu0 0.0
      %1244 = vmatpush1.msra.mxu0 0.0
      %1245 = vmatprep.subr.mxu0 0.0
      %1246 = vmatpush1.msra.mxu0 0.0
      %1247 = vmatprep.subr.mxu0 0.0
      %1248 = vmatpush1.msra.mxu0 0.0
      %1249 = vmatprep.subr.mxu0 0.0
      %1250 = vmatpush1.msra.mxu0 0.0
      %1251 = vmatprep.subr.mxu0 0.0
      %1252 = vmatpush1.msra.mxu0 0.0
      %1253 = vmatprep.subr.mxu0 0.0
      %1254 = vmatpush1.msra.mxu0 0.0
      %1255 = vmatprep.subr.mxu0 0.0
      %1256 = vmatpush1.msra.mxu0 0.0
      %1257 = vmatprep.subr.mxu0 0.0
      %1258 = vmatpush1.msra.mxu0 0.0
      %1259 = vmatprep.subr.mxu0 0.0
      %1260 = vmatpush1.msra.mxu0 0.0
      %1261 = vmatprep.subr.mxu0 0.0
      %1262 = vmatpush1.msra.mxu0 0.0
      %1263 = vmatprep.subr.mxu0 0.0
      %1264 = vmatpush1.msra.mxu0 0.0
      %1265 = vmatprep.subr.mxu0 0.0
      %1266 = vmatpush1.msra.mxu0 0.0
      %1267 = vmatprep.subr.mxu0 0.0
      %1268 = vmatpush1.msra.mxu0 0.0
      %1269 = vmatprep.subr.mxu0 0.0
      %1270 = vmatpush1.msra.mxu0 0.0
      %1271 = vmatprep.subr.mxu0 0.0
      %1272 = vmatpush1.msra.mxu0 0.0
      %1273 = vmatprep.subr.mxu0 0.0
      %1274 = vmatpush1.msra.mxu0 0.0
      %1275 = vmatprep.subr.mxu0 0.0
      %1276 = vmatpush1.msra.mxu0 0.0
      %1277 = vmatprep.subr.mxu0 0.0
      %1278 = vmatpush1.msra.mxu0 0.0
      %1279 = vmatprep.subr.mxu0 0.0
      %1280 = vmatpush1.msra.mxu0 0.0
      %1281 = vmatprep.subr.mxu0 0.0
      %1282 = vmatpush1.msra.mxu0 0.0
      %1283 = vmatprep.subr.mxu0 0.0
      %1284 = vmatpush1.msra.mxu0 0.0
      %1285 = vmatprep.subr.mxu0 0.0
      %1286 = vmatpush1.msra.mxu0 0.0
      %1287 = vmatprep.subr.mxu0 0.0
      %1288 = vmatpush1.msra.mxu0 0.0
      %1289 = vmatprep.mubr.f32.mxu0 0.0
      %1290 = vmatmul.mubr.f32.gmra.mrb[0].mxu0 %v959
      %v1291 = vpop.f32.mrb[0].mxu0
      %v1292 = vadd.f32 0.0, %v1291
      %v1293 = vpop.f32.mrb[0].mxu0
      %1294 = vmatprep.mubr.f32.mxu0 0.0
      %1295 = vmatmul.mubr.f32.gmra.mrb[0].mxu0 %v962
      %v1296 = vpop.f32.mrb[0].mxu0
      %v1297 = vadd.f32 0.0, %v1296
      %v1298 = vpop.f32.mrb[0].mxu0
      %1299 = vmatprep.mubr.f32.mxu0 0.0
      %1300 = vmatmul.mubr.f32.gmra.mrb[0].mxu0 %v965
      %v1301 = vpop.f32.mrb[0].mxu0
      %v1302 = vadd.f32 0.0, %v1301
      %v1303 = vpop.f32.mrb[0].mxu0
      %1304 = vmatprep.mubr.f32.mxu0 0.0
      %1305 = vmatmul.mubr.f32.gmra.mrb[0].mxu0 %v968
      %v1306 = vpop.f32.mrb[0].mxu0
      %v1307 = vadd.f32 0.0, %v1306
      %v1308 = vpop.f32.mrb[0].mxu0
      %1309 = vdwg.mxu0
      %1310 = vmatprep.subr.mxu0 0.0
      %1311 = vmatpush1.msra.mxu0 %v940
      %1312 = vmatprep.subr.mxu0 0.0
      %1313 = vmatpush1.msra.mxu0 %v945
      %1314 = vmatprep.subr.mxu0 0.0
      %1315 = vmatpush1.msra.mxu0 %v950
      %1316 = vmatprep.subr.mxu0 0.0
      %1317 = vmatpush1.msra.mxu0 %v955
      %1318 = vmatprep.subr.mxu0 0.0
      %1319 = vmatpush1.msra.mxu0 0.0
      %1320 = vmatprep.subr.mxu0 0.0
      %1321 = vmatpush1.msra.mxu0 0.0
      %1322 = vmatprep.subr.mxu0 0.0
      %1323 = vmatpush1.msra.mxu0 0.0
      %1324 = vmatprep.subr.mxu0 0.0
      %1325 = vmatpush1.msra.mxu0 0.0
      %1326 = vmatprep.subr.mxu0 0.0
      %1327 = vmatpush1.msra.mxu0 0.0
      %1328 = vmatprep.subr.mxu0 0.0
      %1329 = vmatpush1.msra.mxu0 0.0
      %1330 = vmatprep.subr.mxu0 0.0
      %1331 = vmatpush1.msra.mxu0 0.0
      %1332 = vmatprep.subr.mxu0 0.0
      %1333 = vmatpush1.msra.mxu0 0.0
      %1334 = vmatprep.subr.mxu0 0.0
      %1335 = vmatpush1.msra.mxu0 0.0
      %1336 = vmatprep.subr.mxu0 0.0
      %1337 = vmatpush1.msra.mxu0 0.0
      %1338 = vmatprep.subr.mxu0 0.0
      %1339 = vmatpush1.msra.mxu0 0.0
      %1340 = vmatprep.subr.mxu0 0.0
      %1341 = vmatpush1.msra.mxu0 0.0
      %1342 = vmatprep.subr.mxu0 0.0
      %1343 = vmatpush1.msra.mxu0 0.0
      %1344 = vmatprep.subr.mxu0 0.0
      %1345 = vmatpush1.msra.mxu0 0.0
      %1346 = vmatprep.subr.mxu0 0.0
      %1347 = vmatpush1.msra.mxu0 0.0
      %1348 = vmatprep.subr.mxu0 0.0
      %1349 = vmatpush1.msra.mxu0 0.0
      %1350 = vmatprep.subr.mxu0 0.0
      %1351 = vmatpush1.msra.mxu0 0.0
      %1352 = vmatprep.subr.mxu0 0.0
      %1353 = vmatpush1.msra.mxu0 0.0
      %1354 = vmatprep.subr.mxu0 0.0
      %1355 = vmatpush1.msra.mxu0 0.0
      %1356 = vmatprep.subr.mxu0 0.0
      %1357 = vmatpush1.msra.mxu0 0.0
      %1358 = vmatprep.subr.mxu0 0.0
      %1359 = vmatpush1.msra.mxu0 0.0
      %1360 = vmatprep.subr.mxu0 0.0
      %1361 = vmatpush1.msra.mxu0 0.0
      %1362 = vmatprep.subr.mxu0 0.0
      %1363 = vmatpush1.msra.mxu0 0.0
      %1364 = vmatprep.subr.mxu0 0.0
      %1365 = vmatpush1.msra.mxu0 0.0
      %1366 = vmatprep.subr.mxu0 0.0
      %1367 = vmatpush1.msra.mxu0 0.0
      %1368 = vmatprep.subr.mxu0 0.0
      %1369 = vmatpush1.msra.mxu0 0.0
      %1370 = vmatprep.subr.mxu0 0.0
      %1371 = vmatpush1.msra.mxu0 0.0
      %1372 = vmatprep.subr.mxu0 0.0
      %1373 = vmatpush1.msra.mxu0 0.0
      %1374 = vmatprep.mubr.f32.mxu0 0.0
      %1375 = vmatmul.mubr.f32.gmra.mrb[0].mxu0 %v959
      %v1376 = vpop.f32.mrb[0].mxu0
      %v1377 = vadd.f32 0.0, %v1376
      %v1378 = vpop.f32.mrb[0].mxu0
      %1379 = vmatprep.mubr.f32.mxu0 0.0
      %1380 = vmatmul.mubr.f32.gmra.mrb[0].mxu0 %v962
      %v1381 = vpop.f32.mrb[0].mxu0
      %v1382 = vadd.f32 0.0, %v1381
      %v1383 = vpop.f32.mrb[0].mxu0
      %1384 = vmatprep.mubr.f32.mxu0 0.0
      %1385 = vmatmul.mubr.f32.gmra.mrb[0].mxu0 %v965
      %v1386 = vpop.f32.mrb[0].mxu0
      %v1387 = vadd.f32 0.0, %v1386
      %v1388 = vpop.f32.mrb[0].mxu0
      %1389 = vmatprep.mubr.f32.mxu0 0.0
      %1390 = vmatmul.mubr.f32.gmra.mrb[0].mxu0 %v968
      %v1391 = vpop.f32.mrb[0].mxu0
      %v1392 = vadd.f32 0.0, %v1391
      %v1393 = vpop.f32.mrb[0].mxu0
      %1394 = vdwg.mxu0
      %v1395 = vmul.f32 %v1037, %v1037
      %v1396 = vmul.f32 %v1042, %v1042
      %v1397 = vmul.f32 %v1047, %v1047
      %v1398 = vmul.f32 %v1052, %v1052
      %v1399 = vsub.f32 %v1207, %v1395
      %v1400 = vsub.f32 %v1212, %v1396
      %v1401 = vsub.f32 %v1217, %v1397
      %v1402 = vsub.f32 %v1222, %v1398
      %v1403 = vmul.f32 %v1122, %v1122
      %v1404 = vmul.f32 %v1127, %v1127
      %v1405 = vmul.f32 %v1132, %v1132
      %v1406 = vmul.f32 %v1137, %v1137
      %v1407 = vsub.f32 %v1292, %v1403
      %v1408 = vsub.f32 %v1297, %v1404
      %v1409 = vsub.f32 %v1302, %v1405
      %v1410 = vsub.f32 %v1307, %v1406
      %v1411 = vmul.f32 %v1037, %v1122
      %v1412 = vmul.f32 %v1042, %v1127
      %v1413 = vmul.f32 %v1047, %v1132
      %v1414 = vmul.f32 %v1052, %v1137
      %v1415 = vsub.f32 %v1377, %v1411
      %v1416 = vsub.f32 %v1382, %v1412
      %v1417 = vsub.f32 %v1387, %v1413
      %v1418 = vsub.f32 %v1392, %v1414
      %v1419 = vmul.f32 %v1415, 2.0
      %v1420 = vmul.f32 %v1416, 2.0
      %v1421 = vmul.f32 %v1417, 2.0
      %v1422 = vmul.f32 %v1418, 2.0
      %v1423 = vadd.f32 %v1419, 0.0009
      %v1424 = vadd.f32 %v1420, 0.0009
      %v1425 = vadd.f32 %v1421, 0.0009
      %v1426 = vadd.f32 %v1422, 0.0009
      %v1427 = vadd.f32 %v1399, %v1407
      %v1428 = vadd.f32 %v1400, %v1408
      %v1429 = vadd.f32 %v1401, %v1409
      %v1430 = vadd.f32 %v1402, %v1410
      %v1431 = vadd.f32 %v1427, 0.0009
      %v1432 = vadd.f32 %v1428, 0.0009
      %v1433 = vadd.f32 %v1429, 0.0009
      %v1434 = vadd.f32 %v1430, 0.0009
      %v1435 = vrcp.pop %v1431
      %v1436 = vmul.f32 %v1423, %v1435
      %v1437 = vrcp.pop %v1432
      %v1438 = vmul.f32 %v1424, %v1437
      %v1439 = vrcp.pop %v1433
      %v1440 = vmul.f32 %v1425, %v1439
      %v1441 = vrcp.pop %v1434
      %v1442 = vmul.f32 %v1426, %v1441
      %v1443 = vmul.f32 %v1037, 2.0
      %v1444 = vmul.f32 %v1042, 2.0
      %v1445 = vmul.f32 %v1047, 2.0
      %v1446 = vmul.f32 %v1052, 2.0
      %v1447 = vmul.f32 %v1443, %v1122
      %v1448 = vmul.f32 %v1444, %v1127
      %v1449 = vmul.f32 %v1445, %v1132
      %v1450 = vmul.f32 %v1446, %v1137
      %v1451 = vadd.f32 %v1447, 0.0001
      %v1452 = vadd.f32 %v1448, 0.0001
      %v1453 = vadd.f32 %v1449, 0.0001
      %v1454 = vadd.f32 %v1450, 0.0001
      %v1455 = vadd.f32 %v1395, %v1403
      %v1456 = vadd.f32 %v1396, %v1404
      %v1457 = vadd.f32 %v1397, %v1405
      %v1458 = vadd.f32 %v1398, %v1406
      %v1459 = vadd.f32 %v1455, 0.0001
      %v1460 = vadd.f32 %v1456, 0.0001
      %v1461 = vadd.f32 %v1457, 0.0001
      %v1462 = vadd.f32 %v1458, 0.0001
      %v1463 = vrcp.pop %v1459
      %v1464 = vmul.f32 %v1451, %v1463
      %v1465 = vrcp.pop %v1460
      %v1466 = vmul.f32 %v1452, %v1465
      %v1467 = vrcp.pop %v1461
      %v1468 = vmul.f32 %v1453, %v1467
      %v1469 = vrcp.pop %v1462
      %v1470 = vmul.f32 %v1454, %v1469
      %v1471 = vld [vmem:[%s4] sm:$0xff]
      %v1472 = vld [vmem:[%s4 + $0x8] sm:$0xff]
      %v1473 = vld [vmem:[%s5] sm:$0xff]
      %v1474 = vld [vmem:[%s5 + $0x8] sm:$0xff]
      %v1475 = vld [vmem:[%s5 + $0x10] sm:$0xff]
      %v1476 = vld [vmem:[%s5 + $0x18] sm:$0xff]
      %v1478 = vsel %vm732, %v1471, 0
      %v1481 = vsel %vm732, %v1472, 0
      %1483 = vmatprep.subr.mxu0 0.0
      %1484 = vmatpush1.msra.mxu0 %v704
      %1485 = vmatprep.subr.mxu0 0.0
      %1486 = vmatpush1.msra.mxu0 %v705
      %1487 = vmatprep.subr.mxu0 0.0
      %1488 = vmatpush1.msra.mxu0 %v706
      %1489 = vmatprep.subr.mxu0 0.0
      %1490 = vmatpush1.msra.mxu0 %v707
      %1491 = vmatprep.subr.mxu0 0.0
      %1492 = vmatpush1.msra.mxu0 0.0
      %1493 = vmatprep.subr.mxu0 0.0
      %1494 = vmatpush1.msra.mxu0 0.0
      %1495 = vmatprep.subr.mxu0 0.0
      %1496 = vmatpush1.msra.mxu0 0.0
      %1497 = vmatprep.subr.mxu0 0.0
      %1498 = vmatpush1.msra.mxu0 0.0
      %1499 = vmatprep.subr.mxu0 0.0
      %1500 = vmatpush1.msra.mxu0 0.0
      %1501 = vmatprep.subr.mxu0 0.0
      %1502 = vmatpush1.msra.mxu0 0.0
      %1503 = vmatprep.subr.mxu0 0.0
      %1504 = vmatpush1.msra.mxu0 0.0
      %1505 = vmatprep.subr.mxu0 0.0
      %1506 = vmatpush1.msra.mxu0 0.0
      %1507 = vmatprep.subr.mxu0 0.0
      %1508 = vmatpush1.msra.mxu0 0.0
      %1509 = vmatprep.subr.mxu0 0.0
      %1510 = vmatpush1.msra.mxu0 0.0
      %1511 = vmatprep.subr.mxu0 0.0
      %1512 = vmatpush1.msra.mxu0 0.0
      %1513 = vmatprep.subr.mxu0 0.0
      %1514 = vmatpush1.msra.mxu0 0.0
      %1515 = vmatprep.subr.mxu0 0.0
      %1516 = vmatpush1.msra.mxu0 0.0
      %1517 = vmatprep.subr.mxu0 0.0
      %1518 = vmatpush1.msra.mxu0 0.0
      %1519 = vmatprep.subr.mxu0 0.0
      %1520 = vmatpush1.msra.mxu0 0.0
      %1521 = vmatprep.subr.mxu0 0.0
      %1522 = vmatpush1.msra.mxu0 0.0
      %1523 = vmatprep.subr.mxu0 0.0
      %1524 = vmatpush1.msra.mxu0 0.0
      %1525 = vmatprep.subr.mxu0 0.0
      %1526 = vmatpush1.msra.mxu0 0.0
      %1527 = vmatprep.subr.mxu0 0.0
      %1528 = vmatpush1.msra.mxu0 0.0
      %1529 = vmatprep.subr.mxu0 0.0
      %1530 = vmatpush1.msra.mxu0 0.0
      %1531 = vmatprep.subr.mxu0 0.0
      %1532 = vmatpush1.msra.mxu0 0.0
      %1533 = vmatprep.subr.mxu0 0.0
      %1534 = vmatpush1.msra.mxu0 0.0
      %1535 = vmatprep.subr.mxu0 0.0
      %1536 = vmatpush1.msra.mxu0 0.0
      %1537 = vmatprep.subr.mxu0 0.0
      %1538 = vmatpush1.msra.mxu0 0.0
      %1539 = vmatprep.subr.mxu0 0.0
      %1540 = vmatpush1.msra.mxu0 0.0
      %1541 = vmatprep.subr.mxu0 0.0
      %1542 = vmatpush1.msra.mxu0 0.0
      %1543 = vmatprep.subr.mxu0 0.0
      %1544 = vmatpush1.msra.mxu0 0.0
      %1545 = vmatprep.subr.mxu0 0.0
      %1546 = vmatpush1.msra.mxu0 0.0
      %1547 = vmatprep.mubr.f32.mxu0 0.0
      %1548 = vmatmul.mubr.f32.gmra.mrb[0].mxu0 %v1478
      %v1549 = vpop.f32.mrb[0].mxu0
      %v1550 = vadd.f32 0.0, %v1549
      %v1551 = vpop.f32.mrb[0].mxu0
      %1552 = vmatprep.mubr.f32.mxu0 0.0
      %1553 = vmatmul.mubr.f32.gmra.mrb[0].mxu0 %v1481
      %v1554 = vpop.f32.mrb[0].mxu0
      %v1555 = vadd.f32 0.0, %v1554
      %v1556 = vpop.f32.mrb[0].mxu0
      %1557 = vdwg.mxu0
      %v1559 = vsel %vm732, %v1550, 0
      %v1562 = vsel %vm732, %v1555, 0
      %1564 = vmatprep.subr.mxu0 0.0
      %1565 = vmatpush1.msra.mxu0 %v1473
      %1566 = vmatprep.subr.mxu0 0.0
      %1567 = vmatpush1.msra.mxu0 %v1474
      %1568 = vmatprep.subr.mxu0 0.0
      %1569 = vmatpush1.msra.mxu0 %v1475
      %1570 = vmatprep.subr.mxu0 0.0
      %1571 = vmatpush1.msra.mxu0 %v1476
      %1572 = vmatprep.subr.mxu0 0.0
      %1573 = vmatpush1.msra.mxu0 0.0
      %1574 = vmatprep.subr.mxu0 0.0
      %1575 = vmatpush1.msra.mxu0 0.0
      %1576 = vmatprep.subr.mxu0 0.0
      %1577 = vmatpush1.msra.mxu0 0.0
      %1578 = vmatprep.subr.mxu0 0.0
      %1579 = vmatpush1.msra.mxu0 0.0
      %1580 = vmatprep.subr.mxu0 0.0
      %1581 = vmatpush1.msra.mxu0 0.0
      %1582 = vmatprep.subr.mxu0 0.0
      %1583 = vmatpush1.msra.mxu0 0.0
      %1584 = vmatprep.subr.mxu0 0.0
      %1585 = vmatpush1.msra.mxu0 0.0
      %1586 = vmatprep.subr.mxu0 0.0
      %1587 = vmatpush1.msra.mxu0 0.0
      %1588 = vmatprep.subr.mxu0 0.0
      %1589 = vmatpush1.msra.mxu0 0.0
      %1590 = vmatprep.subr.mxu0 0.0
      %1591 = vmatpush1.msra.mxu0 0.0
      %1592 = vmatprep.subr.mxu0 0.0
      %1593 = vmatpush1.msra.mxu0 0.0
      %1594 = vmatprep.subr.mxu0 0.0
      %1595 = vmatpush1.msra.mxu0 0.0
      %1596 = vmatprep.subr.mxu0 0.0
      %1597 = vmatpush1.msra.mxu0 0.0
      %1598 = vmatprep.subr.mxu0 0.0
      %1599 = vmatpush1.msra.mxu0 0.0
      %1600 = vmatprep.subr.mxu0 0.0
      %1601 = vmatpush1.msra.mxu0 0.0
      %1602 = vmatprep.subr.mxu0 0.0
      %1603 = vmatpush1.msra.mxu0 0.0
      %1604 = vmatprep.subr.mxu0 0.0
      %1605 = vmatpush1.msra.mxu0 0.0
      %1606 = vmatprep.subr.mxu0 0.0
      %1607 = vmatpush1.msra.mxu0 0.0
      %1608 = vmatprep.subr.mxu0 0.0
      %1609 = vmatpush1.msra.mxu0 0.0
      %1610 = vmatprep.subr.mxu0 0.0
      %1611 = vmatpush1.msra.mxu0 0.0
      %1612 = vmatprep.subr.mxu0 0.0
      %1613 = vmatpush1.msra.mxu0 0.0
      %1614 = vmatprep.subr.mxu0 0.0
      %1615 = vmatpush1.msra.mxu0 0.0
      %1616 = vmatprep.subr.mxu0 0.0
      %1617 = vmatpush1.msra.mxu0 0.0
      %1618 = vmatprep.subr.mxu0 0.0
      %1619 = vmatpush1.msra.mxu0 0.0
      %1620 = vmatprep.subr.mxu0 0.0
      %1621 = vmatpush1.msra.mxu0 0.0
      %1622 = vmatprep.subr.mxu0 0.0
      %1623 = vmatpush1.msra.mxu0 0.0
      %1624 = vmatprep.subr.mxu0 0.0
      %1625 = vmatpush1.msra.mxu0 0.0
      %1626 = vmatprep.subr.mxu0 0.0
      %1627 = vmatpush1.msra.mxu0 0.0
      %1628 = vmatprep.mubr.f32.mxu0 0.0
      %1629 = vmatmul.mubr.f32.gmra.mrb[0].mxu0 %v1559
      %v1630 = vpop.f32.mrb[0].mxu0
      %v1631 = vadd.f32 0.0, %v1630
      %v1632 = vpop.f32.mrb[0].mxu0
      %1633 = vmatprep.mubr.f32.mxu0 0.0
      %1634 = vmatmul.mubr.f32.gmra.mrb[0].mxu0 %v1562
      %v1635 = vpop.f32.mrb[0].mxu0
      %v1636 = vadd.f32 0.0, %v1635
      %v1637 = vpop.f32.mrb[0].mxu0
      %1638 = vdwg.mxu0
      %1639 = vmatprep.subr.mxu0 0.0
      %1640 = vmatpush1.msra.mxu0 %v708
      %1641 = vmatprep.subr.mxu0 0.0
      %1642 = vmatpush1.msra.mxu0 %v709
      %1643 = vmatprep.subr.mxu0 0.0
      %1644 = vmatpush1.msra.mxu0 %v710
      %1645 = vmatprep.subr.mxu0 0.0
      %1646 = vmatpush1.msra.mxu0 %v711
      %1647 = vmatprep.subr.mxu0 0.0
      %1648 = vmatpush1.msra.mxu0 0.0
      %1649 = vmatprep.subr.mxu0 0.0
      %1650 = vmatpush1.msra.mxu0 0.0
      %1651 = vmatprep.subr.mxu0 0.0
      %1652 = vmatpush1.msra.mxu0 0.0
      %1653 = vmatprep.subr.mxu0 0.0
      %1654 = vmatpush1.msra.mxu0 0.0
      %1655 = vmatprep.subr.mxu0 0.0
      %1656 = vmatpush1.msra.mxu0 0.0
      %1657 = vmatprep.subr.mxu0 0.0
      %1658 = vmatpush1.msra.mxu0 0.0
      %1659 = vmatprep.subr.mxu0 0.0
      %1660 = vmatpush1.msra.mxu0 0.0
      %1661 = vmatprep.subr.mxu0 0.0
      %1662 = vmatpush1.msra.mxu0 0.0
      %1663 = vmatprep.subr.mxu0 0.0
      %1664 = vmatpush1.msra.mxu0 0.0
      %1665 = vmatprep.subr.mxu0 0.0
      %1666 = vmatpush1.msra.mxu0 0.0
      %1667 = vmatprep.subr.mxu0 0.0
      %1668 = vmatpush1.msra.mxu0 0.0
      %1669 = vmatprep.subr.mxu0 0.0
      %1670 = vmatpush1.msra.mxu0 0.0
      %1671 = vmatprep.subr.mxu0 0.0
      %1672 = vmatpush1.msra.mxu0 0.0
      %1673 = vmatprep.subr.mxu0 0.0
      %1674 = vmatpush1.msra.mxu0 0.0
      %1675 = vmatprep.subr.mxu0 0.0
      %1676 = vmatpush1.msra.mxu0 0.0
      %1677 = vmatprep.subr.mxu0 0.0
      %1678 = vmatpush1.msra.mxu0 0.0
      %1679 = vmatprep.subr.mxu0 0.0
      %1680 = vmatpush1.msra.mxu0 0.0
      %1681 = vmatprep.subr.mxu0 0.0
      %1682 = vmatpush1.msra.mxu0 0.0
      %1683 = vmatprep.subr.mxu0 0.0
      %1684 = vmatpush1.msra.mxu0 0.0
      %1685 = vmatprep.subr.mxu0 0.0
      %1686 = vmatpush1.msra.mxu0 0.0
      %1687 = vmatprep.subr.mxu0 0.0
      %1688 = vmatpush1.msra.mxu0 0.0
      %1689 = vmatprep.subr.mxu0 0.0
      %1690 = vmatpush1.msra.mxu0 0.0
      %1691 = vmatprep.subr.mxu0 0.0
      %1692 = vmatpush1.msra.mxu0 0.0
      %1693 = vmatprep.subr.mxu0 0.0
      %1694 = vmatpush1.msra.mxu0 0.0
      %1695 = vmatprep.subr.mxu0 0.0
      %1696 = vmatpush1.msra.mxu0 0.0
      %1697 = vmatprep.subr.mxu0 0.0
      %1698 = vmatpush1.msra.mxu0 0.0
      %1699 = vmatprep.subr.mxu0 0.0
      %1700 = vmatpush1.msra.mxu0 0.0
      %1701 = vmatprep.subr.mxu0 0.0
      %1702 = vmatpush1.msra.mxu0 0.0
      %1703 = vmatprep.mubr.f32.mxu0 0.0
      %1704 = vmatmul.mubr.f32.gmra.mrb[0].mxu0 %v1478
      %v1705 = vpop.f32.mrb[0].mxu0
      %v1706 = vadd.f32 0.0, %v1705
      %v1707 = vpop.f32.mrb[0].mxu0
      %1708 = vmatprep.mubr.f32.mxu0 0.0
      %1709 = vmatmul.mubr.f32.gmra.mrb[0].mxu0 %v1481
      %v1710 = vpop.f32.mrb[0].mxu0
      %v1711 = vadd.f32 0.0, %v1710
      %v1712 = vpop.f32.mrb[0].mxu0
      %1713 = vdwg.mxu0
      %v1715 = vsel %vm732, %v1706, 0
      %v1718 = vsel %vm732, %v1711, 0
      %1720 = vmatprep.subr.mxu0 0.0
      %1721 = vmatpush1.msra.mxu0 %v1473
      %1722 = vmatprep.subr.mxu0 0.0
      %1723 = vmatpush1.msra.mxu0 %v1474
      %1724 = vmatprep.subr.mxu0 0.0
      %1725 = vmatpush1.msra.mxu0 %v1475
      %1726 = vmatprep.subr.mxu0 0.0
      %1727 = vmatpush1.msra.mxu0 %v1476
      %1728 = vmatprep.subr.mxu0 0.0
      %1729 = vmatpush1.msra.mxu0 0.0
      %1730 = vmatprep.subr.mxu0 0.0
      %1731 = vmatpush1.msra.mxu0 0.0
      %1732 = vmatprep.subr.mxu0 0.0
      %1733 = vmatpush1.msra.mxu0 0.0
      %1734 = vmatprep.subr.mxu0 0.0
      %1735 = vmatpush1.msra.mxu0 0.0
      %1736 = vmatprep.subr.mxu0 0.0
      %1737 = vmatpush1.msra.mxu0 0.0
      %1738 = vmatprep.subr.mxu0 0.0
      %1739 = vmatpush1.msra.mxu0 0.0
      %1740 = vmatprep.subr.mxu0 0.0
      %1741 = vmatpush1.msra.mxu0 0.0
      %1742 = vmatprep.subr.mxu0 0.0
      %1743 = vmatpush1.msra.mxu0 0.0
      %1744 = vmatprep.subr.mxu0 0.0
      %1745 = vmatpush1.msra.mxu0 0.0
      %1746 = vmatprep.subr.mxu0 0.0
      %1747 = vmatpush1.msra.mxu0 0.0
      %1748 = vmatprep.subr.mxu0 0.0
      %1749 = vmatpush1.msra.mxu0 0.0
      %1750 = vmatprep.subr.mxu0 0.0
      %1751 = vmatpush1.msra.mxu0 0.0
      %1752 = vmatprep.subr.mxu0 0.0
      %1753 = vmatpush1.msra.mxu0 0.0
      %1754 = vmatprep.subr.mxu0 0.0
      %1755 = vmatpush1.msra.mxu0 0.0
      %1756 = vmatprep.subr.mxu0 0.0
      %1757 = vmatpush1.msra.mxu0 0.0
      %1758 = vmatprep.subr.mxu0 0.0
      %1759 = vmatpush1.msra.mxu0 0.0
      %1760 = vmatprep.subr.mxu0 0.0
      %1761 = vmatpush1.msra.mxu0 0.0
      %1762 = vmatprep.subr.mxu0 0.0
      %1763 = vmatpush1.msra.mxu0 0.0
      %1764 = vmatprep.subr.mxu0 0.0
      %1765 = vmatpush1.msra.mxu0 0.0
      %1766 = vmatprep.subr.mxu0 0.0
      %1767 = vmatpush1.msra.mxu0 0.0
      %1768 = vmatprep.subr.mxu0 0.0
      %1769 = vmatpush1.msra.mxu0 0.0
      %1770 = vmatprep.subr.mxu0 0.0
      %1771 = vmatpush1.msra.mxu0 0.0
      %1772 = vmatprep.subr.mxu0 0.0
      %1773 = vmatpush1.msra.mxu0 0.0
      %1774 = vmatprep.subr.mxu0 0.0
      %1775 = vmatpush1.msra.mxu0 0.0
      %1776 = vmatprep.subr.mxu0 0.0
      %1777 = vmatpush1.msra.mxu0 0.0
      %1778 = vmatprep.subr.mxu0 0.0
      %1779 = vmatpush1.msra.mxu0 0.0
      %1780 = vmatprep.subr.mxu0 0.0
      %1781 = vmatpush1.msra.mxu0 0.0
      %1782 = vmatprep.subr.mxu0 0.0
      %1783 = vmatpush1.msra.mxu0 0.0
      %1784 = vmatprep.mubr.f32.mxu0 0.0
      %1785 = vmatmul.mubr.f32.gmra.mrb[0].mxu0 %v1715
      %v1786 = vpop.f32.mrb[0].mxu0
      %v1787 = vadd.f32 0.0, %v1786
      %v1788 = vpop.f32.mrb[0].mxu0
      %1789 = vmatprep.mubr.f32.mxu0 0.0
      %1790 = vmatmul.mubr.f32.gmra.mrb[0].mxu0 %v1718
      %v1791 = vpop.f32.mrb[0].mxu0
      %v1792 = vadd.f32 0.0, %v1791
      %v1793 = vpop.f32.mrb[0].mxu0
      %1794 = vdwg.mxu0
      %v1795 = vld [vmem:[%s6] sm:$0xff]
      %v1796 = vld [vmem:[%s6 + $0x8] sm:$0xff]
      %v1797 = vld [vmem:[%s7] sm:$0xff]
      %v1798 = vld [vmem:[%s7 + $0x8] sm:$0xff]
      %v1799 = vmul.f32 %v1631, %v1631
      %v1800 = vmul.f32 %v1636, %v1636
      %v1801 = vmul.f32 %v1787, %v1787
      %v1802 = vmul.f32 %v1792, %v1792
      %v1803 = vmul.f32 %v1631, %v1787
      %v1804 = vmul.f32 %v1636, %v1792
      %vm1805 = vcmask 130048
      %v1807 = vsel %vm1805, %v1631, 0
      %v1810 = vsel %vm1805, %v1636, 0
      %v1813 = vsel %vm1805, %v1787, 0
      %v1816 = vsel %vm1805, %v1792, 0
      %v1819 = vsel %vm1805, %v1799, 0
      %v1822 = vsel %vm1805, %v1800, 0
      %v1825 = vsel %vm1805, %v1801, 0
      %v1828 = vsel %vm1805, %v1802, 0
      %v1831 = vsel %vm1805, %v1803, 0
      %v1834 = vsel %vm1805, %v1804, 0
      %1836 = vmatprep.subr.mxu0 0.0
      %1837 = vmatpush1.msra.mxu0 %v1797
      %1838 = vmatprep.subr.mxu0 0.0
      %1839 = vmatpush1.msra.mxu0 %v1798
      %1840 = vmatprep.subr.mxu0 0.0
      %1841 = vmatpush1.msra.mxu0 0.0
      %1842 = vmatprep.subr.mxu0 0.0
      %1843 = vmatpush1.msra.mxu0 0.0
      %1844 = vmatprep.subr.mxu0 0.0
      %1845 = vmatpush1.msra.mxu0 0.0
      %1846 = vmatprep.subr.mxu0 0.0
      %1847 = vmatpush1.msra.mxu0 0.0
      %1848 = vmatprep.subr.mxu0 0.0
      %1849 = vmatpush1.msra.mxu0 0.0
      %1850 = vmatprep.subr.mxu0 0.0
      %1851 = vmatpush1.msra.mxu0 0.0
      %1852 = vmatprep.subr.mxu0 0.0
      %1853 = vmatpush1.msra.mxu0 0.0
      %1854 = vmatprep.subr.mxu0 0.0
      %1855 = vmatpush1.msra.mxu0 0.0
      %1856 = vmatprep.subr.mxu0 0.0
      %1857 = vmatpush1.msra.mxu0 0.0
      %1858 = vmatprep.subr.mxu0 0.0
      %1859 = vmatpush1.msra.mxu0 0.0
      %1860 = vmatprep.subr.mxu0 0.0
      %1861 = vmatpush1.msra.mxu0 0.0
      %1862 = vmatprep.subr.mxu0 0.0
      %1863 = vmatpush1.msra.mxu0 0.0
      %1864 = vmatprep.subr.mxu0 0.0
      %1865 = vmatpush1.msra.mxu0 0.0
      %1866 = vmatprep.subr.mxu0 0.0
      %1867 = vmatpush1.msra.mxu0 0.0
      %1868 = vmatprep.subr.mxu0 0.0
      %1869 = vmatpush1.msra.mxu0 0.0
      %1870 = vmatprep.subr.mxu0 0.0
      %1871 = vmatpush1.msra.mxu0 0.0
      %1872 = vmatprep.subr.mxu0 0.0
      %1873 = vmatpush1.msra.mxu0 0.0
      %1874 = vmatprep.subr.mxu0 0.0
      %1875 = vmatpush1.msra.mxu0 0.0
      %1876 = vmatprep.subr.mxu0 0.0
      %1877 = vmatpush1.msra.mxu0 0.0
      %1878 = vmatprep.subr.mxu0 0.0
      %1879 = vmatpush1.msra.mxu0 0.0
      %1880 = vmatprep.subr.mxu0 0.0
      %1881 = vmatpush1.msra.mxu0 0.0
      %1882 = vmatprep.subr.mxu0 0.0
      %1883 = vmatpush1.msra.mxu0 0.0
      %1884 = vmatprep.subr.mxu0 0.0
      %1885 = vmatpush1.msra.mxu0 0.0
      %1886 = vmatprep.subr.mxu0 0.0
      %1887 = vmatpush1.msra.mxu0 0.0
      %1888 = vmatprep.subr.mxu0 0.0
      %1889 = vmatpush1.msra.mxu0 0.0
      %1890 = vmatprep.subr.mxu0 0.0
      %1891 = vmatpush1.msra.mxu0 0.0
      %1892 = vmatprep.subr.mxu0 0.0
      %1893 = vmatpush1.msra.mxu0 0.0
      %1894 = vmatprep.subr.mxu0 0.0
      %1895 = vmatpush1.msra.mxu0 0.0
      %1896 = vmatprep.subr.mxu0 0.0
      %1897 = vmatpush1.msra.mxu0 0.0
      %1898 = vmatprep.subr.mxu0 0.0
      %1899 = vmatpush1.msra.mxu0 0.0
      %1900 = vmatprep.mubr.f32.mxu0 0.0
      %1901 = vmatmul.mubr.f32.gmra.mrb[0].mxu0 %v1807
      %v1902 = vpop.f32.mrb[0].mxu0
      %v1903 = vadd.f32 0.0, %v1902
      %v1904 = vpop.f32.mrb[0].mxu0
      %1905 = vmatprep.mubr.f32.mxu0 0.0
      %1906 = vmatmul.mubr.f32.gmra.mrb[0].mxu0 %v1810
      %v1907 = vpop.f32.mrb[0].mxu0
      %v1908 = vadd.f32 0.0, %v1907
      %v1909 = vpop.f32.mrb[0].mxu0
      %1910 = vmatprep.mubr.f32.mxu0 0.0
      %1911 = vmatmul.mubr.f32.gmra.mrb[0].mxu0 %v1813
      %v1912 = vpop.f32.mrb[0].mxu0
      %v1913 = vadd.f32 0.0, %v1912
      %v1914 = vpop.f32.mrb[0].mxu0
      %1915 = vmatprep.mubr.f32.mxu0 0.0
      %1916 = vmatmul.mubr.f32.gmra.mrb[0].mxu0 %v1816
      %v1917 = vpop.f32.mrb[0].mxu0
      %v1918 = vadd.f32 0.0, %v1917
      %v1919 = vpop.f32.mrb[0].mxu0
      %1920 = vmatprep.mubr.f32.mxu0 0.0
      %1921 = vmatmul.mubr.f32.gmra.mrb[0].mxu0 %v1819
      %v1922 = vpop.f32.mrb[0].mxu0
      %v1923 = vadd.f32 0.0, %v1922
      %v1924 = vpop.f32.mrb[0].mxu0
      %1925 = vmatprep.mubr.f32.mxu0 0.0
      %1926 = vmatmul.mubr.f32.gmra.mrb[0].mxu0 %v1822
      %v1927 = vpop.f32.mrb[0].mxu0
      %v1928 = vadd.f32 0.0, %v1927
      %v1929 = vpop.f32.mrb[0].mxu0
      %1930 = vmatprep.mubr.f32.mxu0 0.0
      %1931 = vmatmul.mubr.f32.gmra.mrb[0].mxu0 %v1825
      %v1932 = vpop.f32.mrb[0].mxu0
      %v1933 = vadd.f32 0.0, %v1932
      %v1934 = vpop.f32.mrb[0].mxu0
      %1935 = vmatprep.mubr.f32.mxu0 0.0
      %1936 = vmatmul.mubr.f32.gmra.mrb[0].mxu0 %v1828
      %v1937 = vpop.f32.mrb[0].mxu0
      %v1938 = vadd.f32 0.0, %v1937
      %v1939 = vpop.f32.mrb[0].mxu0
      %1940 = vmatprep.mubr.f32.mxu0 0.0
      %1941 = vmatmul.mubr.f32.gmra.mrb[0].mxu0 %v1831
      %v1942 = vpop.f32.mrb[0].mxu0
      %v1943 = vadd.f32 0.0, %v1942
      %v1944 = vpop.f32.mrb[0].mxu0
      %1945 = vmatprep.mubr.f32.mxu0 0.0
      %1946 = vmatmul.mubr.f32.gmra.mrb[0].mxu0 %v1834
      %v1947 = vpop.f32.mrb[0].mxu0
      %v1948 = vadd.f32 0.0, %v1947
      %v1949 = vpop.f32.mrb[0].mxu0
      %1950 = vdwg.mxu0
      %v1952 = vsel %vm1805, %v1795, 0
      %v1955 = vsel %vm1805, %v1796, 0
      %1957 = vmatprep.subr.mxu0 0.0
      %1958 = vmatpush1.msra.mxu0 %v1903
      %1959 = vmatprep.subr.mxu0 0.0
      %1960 = vmatpush1.msra.mxu0 %v1908
      %1961 = vmatprep.subr.mxu0 0.0
      %1962 = vmatpush1.msra.mxu0 0.0
      %1963 = vmatprep.subr.mxu0 0.0
      %1964 = vmatpush1.msra.mxu0 0.0
      %1965 = vmatprep.subr.mxu0 0.0
      %1966 = vmatpush1.msra.mxu0 0.0
      %1967 = vmatprep.subr.mxu0 0.0
      %1968 = vmatpush1.msra.mxu0 0.0
      %1969 = vmatprep.subr.mxu0 0.0
      %1970 = vmatpush1.msra.mxu0 0.0
      %1971 = vmatprep.subr.mxu0 0.0
      %1972 = vmatpush1.msra.mxu0 0.0
      %1973 = vmatprep.subr.mxu0 0.0
      %1974 = vmatpush1.msra.mxu0 0.0
      %1975 = vmatprep.subr.mxu0 0.0
      %1976 = vmatpush1.msra.mxu0 0.0
      %1977 = vmatprep.subr.mxu0 0.0
      %1978 = vmatpush1.msra.mxu0 0.0
      %1979 = vmatprep.subr.mxu0 0.0
      %1980 = vmatpush1.msra.mxu0 0.0
      %1981 = vmatprep.subr.mxu0 0.0
      %1982 = vmatpush1.msra.mxu0 0.0
      %1983 = vmatprep.subr.mxu0 0.0
      %1984 = vmatpush1.msra.mxu0 0.0
      %1985 = vmatprep.subr.mxu0 0.0
      %1986 = vmatpush1.msra.mxu0 0.0
      %1987 = vmatprep.subr.mxu0 0.0
      %1988 = vmatpush1.msra.mxu0 0.0
      %1989 = vmatprep.subr.mxu0 0.0
      %1990 = vmatpush1.msra.mxu0 0.0
      %1991 = vmatprep.subr.mxu0 0.0
      %1992 = vmatpush1.msra.mxu0 0.0
      %1993 = vmatprep.subr.mxu0 0.0
      %1994 = vmatpush1.msra.mxu0 0.0
      %1995 = vmatprep.subr.mxu0 0.0
      %1996 = vmatpush1.msra.mxu0 0.0
      %1997 = vmatprep.subr.mxu0 0.0
      %1998 = vmatpush1.msra.mxu0 0.0
      %1999 = vmatprep.subr.mxu0 0.0
      %2000 = vmatpush1.msra.mxu0 0.0
      %2001 = vmatprep.subr.mxu0 0.0
      %2002 = vmatpush1.msra.mxu0 0.0
      %2003 = vmatprep.subr.mxu0 0.0
      %2004 = vmatpush1.msra.mxu0 0.0
      %2005 = vmatprep.subr.mxu0 0.0
      %2006 = vmatpush1.msra.mxu0 0.0
      %2007 = vmatprep.subr.mxu0 0.0
      %2008 = vmatpush1.msra.mxu0 0.0
      %2009 = vmatprep.subr.mxu0 0.0
      %2010 = vmatpush1.msra.mxu0 0.0
      %2011 = vmatprep.subr.mxu0 0.0
      %2012 = vmatpush1.msra.mxu0 0.0
      %2013 = vmatprep.subr.mxu0 0.0
      %2014 = vmatpush1.msra.mxu0 0.0
      %2015 = vmatprep.subr.mxu0 0.0
      %2016 = vmatpush1.msra.mxu0 0.0
      %2017 = vmatprep.subr.mxu0 0.0
      %2018 = vmatpush1.msra.mxu0 0.0
      %2019 = vmatprep.subr.mxu0 0.0
      %2020 = vmatpush1.msra.mxu0 0.0
      %2021 = vmatprep.mubr.f32.mxu0 0.0
      %2022 = vmatmul.mubr.f32.gmra.mrb[0].mxu0 %v1952
      %v2023 = vpop.f32.mrb[0].mxu0
      %v2024 = vadd.f32 0.0, %v2023
      %v2025 = vpop.f32.mrb[0].mxu0
      %2026 = vmatprep.mubr.f32.mxu0 0.0
      %2027 = vmatmul.mubr.f32.gmra.mrb[0].mxu0 %v1955
      %v2028 = vpop.f32.mrb[0].mxu0
      %v2029 = vadd.f32 0.0, %v2028
      %v2030 = vpop.f32.mrb[0].mxu0
      %2031 = vdwg.mxu0
      %2032 = vmatprep.subr.mxu0 0.0
      %2033 = vmatpush1.msra.mxu0 %v1913
      %2034 = vmatprep.subr.mxu0 0.0
      %2035 = vmatpush1.msra.mxu0 %v1918
      %2036 = vmatprep.subr.mxu0 0.0
      %2037 = vmatpush1.msra.mxu0 0.0
      %2038 = vmatprep.subr.mxu0 0.0
      %2039 = vmatpush1.msra.mxu0 0.0
      %2040 = vmatprep.subr.mxu0 0.0
      %2041 = vmatpush1.msra.mxu0 0.0
      %2042 = vmatprep.subr.mxu0 0.0
      %2043 = vmatpush1.msra.mxu0 0.0
      %2044 = vmatprep.subr.mxu0 0.0
      %2045 = vmatpush1.msra.mxu0 0.0
      %2046 = vmatprep.subr.mxu0 0.0
      %2047 = vmatpush1.msra.mxu0 0.0
      %2048 = vmatprep.subr.mxu0 0.0
      %2049 = vmatpush1.msra.mxu0 0.0
      %2050 = vmatprep.subr.mxu0 0.0
      %2051 = vmatpush1.msra.mxu0 0.0
      %2052 = vmatprep.subr.mxu0 0.0
      %2053 = vmatpush1.msra.mxu0 0.0
      %2054 = vmatprep.subr.mxu0 0.0
      %2055 = vmatpush1.msra.mxu0 0.0
      %2056 = vmatprep.subr.mxu0 0.0
      %2057 = vmatpush1.msra.mxu0 0.0
      %2058 = vmatprep.subr.mxu0 0.0
      %2059 = vmatpush1.msra.mxu0 0.0
      %2060 = vmatprep.subr.mxu0 0.0
      %2061 = vmatpush1.msra.mxu0 0.0
      %2062 = vmatprep.subr.mxu0 0.0
      %2063 = vmatpush1.msra.mxu0 0.0
      %2064 = vmatprep.subr.mxu0 0.0
      %2065 = vmatpush1.msra.mxu0 0.0
      %2066 = vmatprep.subr.mxu0 0.0
      %2067 = vmatpush1.msra.mxu0 0.0
      %2068 = vmatprep.subr.mxu0 0.0
      %2069 = vmatpush1.msra.mxu0 0.0
      %2070 = vmatprep.subr.mxu0 0.0
      %2071 = vmatpush1.msra.mxu0 0.0
      %2072 = vmatprep.subr.mxu0 0.0
      %2073 = vmatpush1.msra.mxu0 0.0
      %2074 = vmatprep.subr.mxu0 0.0
      %2075 = vmatpush1.msra.mxu0 0.0
      %2076 = vmatprep.subr.mxu0 0.0
      %2077 = vmatpush1.msra.mxu0 0.0
      %2078 = vmatprep.subr.mxu0 0.0
      %2079 = vmatpush1.msra.mxu0 0.0
      %2080 = vmatprep.subr.mxu0 0.0
      %2081 = vmatpush1.msra.mxu0 0.0
      %2082 = vmatprep.subr.mxu0 0.0
      %2083 = vmatpush1.msra.mxu0 0.0
      %2084 = vmatprep.subr.mxu0 0.0
      %2085 = vmatpush1.msra.mxu0 0.0
      %2086 = vmatprep.subr.mxu0 0.0
      %2087 = vmatpush1.msra.mxu0 0.0
      %2088 = vmatprep.subr.mxu0 0.0
      %2089 = vmatpush1.msra.mxu0 0.0
      %2090 = vmatprep.subr.mxu0 0.0
      %2091 = vmatpush1.msra.mxu0 0.0
      %2092 = vmatprep.subr.mxu0 0.0
      %2093 = vmatpush1.msra.mxu0 0.0
      %2094 = vmatprep.subr.mxu0 0.0
      %2095 = vmatpush1.msra.mxu0 0.0
      %2096 = vmatprep.mubr.f32.mxu0 0.0
      %2097 = vmatmul.mubr.f32.gmra.mrb[0].mxu0 %v1952
      %v2098 = vpop.f32.mrb[0].mxu0
      %v2099 = vadd.f32 0.0, %v2098
      %v2100 = vpop.f32.mrb[0].mxu0
      %2101 = vmatprep.mubr.f32.mxu0 0.0
      %2102 = vmatmul.mubr.f32.gmra.mrb[0].mxu0 %v1955
      %v2103 = vpop.f32.mrb[0].mxu0
      %v2104 = vadd.f32 0.0, %v2103
      %v2105 = vpop.f32.mrb[0].mxu0
      %2106 = vdwg.mxu0
      %2107 = vmatprep.subr.mxu0 0.0
      %2108 = vmatpush1.msra.mxu0 %v1923
      %2109 = vmatprep.subr.mxu0 0.0
      %2110 = vmatpush1.msra.mxu0 %v1928
      %2111 = vmatprep.subr.mxu0 0.0
      %2112 = vmatpush1.msra.mxu0 0.0
      %2113 = vmatprep.subr.mxu0 0.0
      %2114 = vmatpush1.msra.mxu0 0.0
      %2115 = vmatprep.subr.mxu0 0.0
      %2116 = vmatpush1.msra.mxu0 0.0
      %2117 = vmatprep.subr.mxu0 0.0
      %2118 = vmatpush1.msra.mxu0 0.0
      %2119 = vmatprep.subr.mxu0 0.0
      %2120 = vmatpush1.msra.mxu0 0.0
      %2121 = vmatprep.subr.mxu0 0.0
      %2122 = vmatpush1.msra.mxu0 0.0
      %2123 = vmatprep.subr.mxu0 0.0
      %2124 = vmatpush1.msra.mxu0 0.0
      %2125 = vmatprep.subr.mxu0 0.0
      %2126 = vmatpush1.msra.mxu0 0.0
      %2127 = vmatprep.subr.mxu0 0.0
      %2128 = vmatpush1.msra.mxu0 0.0
      %2129 = vmatprep.subr.mxu0 0.0
      %2130 = vmatpush1.msra.mxu0 0.0
      %2131 = vmatprep.subr.mxu0 0.0
      %2132 = vmatpush1.msra.mxu0 0.0
      %2133 = vmatprep.subr.mxu0 0.0
      %2134 = vmatpush1.msra.mxu0 0.0
      %2135 = vmatprep.subr.mxu0 0.0
      %2136 = vmatpush1.msra.mxu0 0.0
      %2137 = vmatprep.subr.mxu0 0.0
      %2138 = vmatpush1.msra.mxu0 0.0
      %2139 = vmatprep.subr.mxu0 0.0
      %2140 = vmatpush1.msra.mxu0 0.0
      %2141 = vmatprep.subr.mxu0 0.0
      %2142 = vmatpush1.msra.mxu0 0.0
      %2143 = vmatprep.subr.mxu0 0.0
      %2144 = vmatpush1.msra.mxu0 0.0
      %2145 = vmatprep.subr.mxu0 0.0
      %2146 = vmatpush1.msra.mxu0 0.0
      %2147 = vmatprep.subr.mxu0 0.0
      %2148 = vmatpush1.msra.mxu0 0.0
      %2149 = vmatprep.subr.mxu0 0.0
      %2150 = vmatpush1.msra.mxu0 0.0
      %2151 = vmatprep.subr.mxu0 0.0
      %2152 = vmatpush1.msra.mxu0 0.0
      %2153 = vmatprep.subr.mxu0 0.0
      %2154 = vmatpush1.msra.mxu0 0.0
      %2155 = vmatprep.subr.mxu0 0.0
      %2156 = vmatpush1.msra.mxu0 0.0
      %2157 = vmatprep.subr.mxu0 0.0
      %2158 = vmatpush1.msra.mxu0 0.0
      %2159 = vmatprep.subr.mxu0 0.0
      %2160 = vmatpush1.msra.mxu0 0.0
      %2161 = vmatprep.subr.mxu0 0.0
      %2162 = vmatpush1.msra.mxu0 0.0
      %2163 = vmatprep.subr.mxu0 0.0
      %2164 = vmatpush1.msra.mxu0 0.0
      %2165 = vmatprep.subr.mxu0 0.0
      %2166 = vmatpush1.msra.mxu0 0.0
      %2167 = vmatprep.subr.mxu0 0.0
      %2168 = vmatpush1.msra.mxu0 0.0
      %2169 = vmatprep.subr.mxu0 0.0
      %2170 = vmatpush1.msra.mxu0 0.0
      %2171 = vmatprep.mubr.f32.mxu0 0.0
      %2172 = vmatmul.mubr.f32.gmra.mrb[0].mxu0 %v1952
      %v2173 = vpop.f32.mrb[0].mxu0
      %v2174 = vadd.f32 0.0, %v2173
      %v2175 = vpop.f32.mrb[0].mxu0
      %2176 = vmatprep.mubr.f32.mxu0 0.0
      %2177 = vmatmul.mubr.f32.gmra.mrb[0].mxu0 %v1955
      %v2178 = vpop.f32.mrb[0].mxu0
      %v2179 = vadd.f32 0.0, %v2178
      %v2180 = vpop.f32.mrb[0].mxu0
      %2181 = vdwg.mxu0
      %2182 = vmatprep.subr.mxu0 0.0
      %2183 = vmatpush1.msra.mxu0 %v1933
      %2184 = vmatprep.subr.mxu0 0.0
      %2185 = vmatpush1.msra.mxu0 %v1938
      %2186 = vmatprep.subr.mxu0 0.0
      %2187 = vmatpush1.msra.mxu0 0.0
      %2188 = vmatprep.subr.mxu0 0.0
      %2189 = vmatpush1.msra.mxu0 0.0
      %2190 = vmatprep.subr.mxu0 0.0
      %2191 = vmatpush1.msra.mxu0 0.0
      %2192 = vmatprep.subr.mxu0 0.0
      %2193 = vmatpush1.msra.mxu0 0.0
      %2194 = vmatprep.subr.mxu0 0.0
      %2195 = vmatpush1.msra.mxu0 0.0
      %2196 = vmatprep.subr.mxu0 0.0
      %2197 = vmatpush1.msra.mxu0 0.0
      %2198 = vmatprep.subr.mxu0 0.0
      %2199 = vmatpush1.msra.mxu0 0.0
      %2200 = vmatprep.subr.mxu0 0.0
      %2201 = vmatpush1.msra.mxu0 0.0
      %2202 = vmatprep.subr.mxu0 0.0
      %2203 = vmatpush1.msra.mxu0 0.0
      %2204 = vmatprep.subr.mxu0 0.0
      %2205 = vmatpush1.msra.mxu0 0.0
      %2206 = vmatprep.subr.mxu0 0.0
      %2207 = vmatpush1.msra.mxu0 0.0
      %2208 = vmatprep.subr.mxu0 0.0
      %2209 = vmatpush1.msra.mxu0 0.0
      %2210 = vmatprep.subr.mxu0 0.0
      %2211 = vmatpush1.msra.mxu0 0.0
      %2212 = vmatprep.subr.mxu0 0.0
      %2213 = vmatpush1.msra.mxu0 0.0
      %2214 = vmatprep.subr.mxu0 0.0
      %2215 = vmatpush1.msra.mxu0 0.0
      %2216 = vmatprep.subr.mxu0 0.0
      %2217 = vmatpush1.msra.mxu0 0.0
      %2218 = vmatprep.subr.mxu0 0.0
      %2219 = vmatpush1.msra.mxu0 0.0
      %2220 = vmatprep.subr.mxu0 0.0
      %2221 = vmatpush1.msra.mxu0 0.0
      %2222 = vmatprep.subr.mxu0 0.0
      %2223 = vmatpush1.msra.mxu0 0.0
      %2224 = vmatprep.subr.mxu0 0.0
      %2225 = vmatpush1.msra.mxu0 0.0
      %2226 = vmatprep.subr.mxu0 0.0
      %2227 = vmatpush1.msra.mxu0 0.0
      %2228 = vmatprep.subr.mxu0 0.0
      %2229 = vmatpush1.msra.mxu0 0.0
      %2230 = vmatprep.subr.mxu0 0.0
      %2231 = vmatpush1.msra.mxu0 0.0
      %2232 = vmatprep.subr.mxu0 0.0
      %2233 = vmatpush1.msra.mxu0 0.0
      %2234 = vmatprep.subr.mxu0 0.0
      %2235 = vmatpush1.msra.mxu0 0.0
      %2236 = vmatprep.subr.mxu0 0.0
      %2237 = vmatpush1.msra.mxu0 0.0
      %2238 = vmatprep.subr.mxu0 0.0
      %2239 = vmatpush1.msra.mxu0 0.0
      %2240 = vmatprep.subr.mxu0 0.0
      %2241 = vmatpush1.msra.mxu0 0.0
      %2242 = vmatprep.subr.mxu0 0.0
      %2243 = vmatpush1.msra.mxu0 0.0
      %2244 = vmatprep.subr.mxu0 0.0
      %2245 = vmatpush1.msra.mxu0 0.0
      %2246 = vmatprep.mubr.f32.mxu0 0.0
      %2247 = vmatmul.mubr.f32.gmra.mrb[0].mxu0 %v1952
      %v2248 = vpop.f32.mrb[0].mxu0
      %v2249 = vadd.f32 0.0, %v2248
      %v2250 = vpop.f32.mrb[0].mxu0
      %2251 = vmatprep.mubr.f32.mxu0 0.0
      %2252 = vmatmul.mubr.f32.gmra.mrb[0].mxu0 %v1955
      %v2253 = vpop.f32.mrb[0].mxu0
      %v2254 = vadd.f32 0.0, %v2253
      %v2255 = vpop.f32.mrb[0].mxu0
      %2256 = vdwg.mxu0
      %2257 = vmatprep.subr.mxu0 0.0
      %2258 = vmatpush1.msra.mxu0 %v1943
      %2259 = vmatprep.subr.mxu0 0.0
      %2260 = vmatpush1.msra.mxu0 %v1948
      %2261 = vmatprep.subr.mxu0 0.0
      %2262 = vmatpush1.msra.mxu0 0.0
      %2263 = vmatprep.subr.mxu0 0.0
      %2264 = vmatpush1.msra.mxu0 0.0
      %2265 = vmatprep.subr.mxu0 0.0
      %2266 = vmatpush1.msra.mxu0 0.0
      %2267 = vmatprep.subr.mxu0 0.0
      %2268 = vmatpush1.msra.mxu0 0.0
      %2269 = vmatprep.subr.mxu0 0.0
      %2270 = vmatpush1.msra.mxu0 0.0
      %2271 = vmatprep.subr.mxu0 0.0
      %2272 = vmatpush1.msra.mxu0 0.0
      %2273 = vmatprep.subr.mxu0 0.0
      %2274 = vmatpush1.msra.mxu0 0.0
      %2275 = vmatprep.subr.mxu0 0.0
      %2276 = vmatpush1.msra.mxu0 0.0
      %2277 = vmatprep.subr.mxu0 0.0
      %2278 = vmatpush1.msra.mxu0 0.0
      %2279 = vmatprep.subr.mxu0 0.0
      %2280 = vmatpush1.msra.mxu0 0.0
      %2281 = vmatprep.subr.mxu0 0.0
      %2282 = vmatpush1.msra.mxu0 0.0
      %2283 = vmatprep.subr.mxu0 0.0
      %2284 = vmatpush1.msra.mxu0 0.0
      %2285 = vmatprep.subr.mxu0 0.0
      %2286 = vmatpush1.msra.mxu0 0.0
      %2287 = vmatprep.subr.mxu0 0.0
      %2288 = vmatpush1.msra.mxu0 0.0
      %2289 = vmatprep.subr.mxu0 0.0
      %2290 = vmatpush1.msra.mxu0 0.0
      %2291 = vmatprep.subr.mxu0 0.0
      %2292 = vmatpush1.msra.mxu0 0.0
      %2293 = vmatprep.subr.mxu0 0.0
      %2294 = vmatpush1.msra.mxu0 0.0
      %2295 = vmatprep.subr.mxu0 0.0
      %2296 = vmatpush1.msra.mxu0 0.0
      %2297 = vmatprep.subr.mxu0 0.0
      %2298 = vmatpush1.msra.mxu0 0.0
      %2299 = vmatprep.subr.mxu0 0.0
      %2300 = vmatpush1.msra.mxu0 0.0
      %2301 = vmatprep.subr.mxu0 0.0
      %2302 = vmatpush1.msra.mxu0 0.0
      %2303 = vmatprep.subr.mxu0 0.0
      %2304 = vmatpush1.msra.mxu0 0.0
      %2305 = vmatprep.subr.mxu0 0.0
      %2306 = vmatpush1.msra.mxu0 0.0
      %2307 = vmatprep.subr.mxu0 0.0
      %2308 = vmatpush1.msra.mxu0 0.0
      %2309 = vmatprep.subr.mxu0 0.0
      %2310 = vmatpush1.msra.mxu0 0.0
      %2311 = vmatprep.subr.mxu0 0.0
      %2312 = vmatpush1.msra.mxu0 0.0
      %2313 = vmatprep.subr.mxu0 0.0
      %2314 = vmatpush1.msra.mxu0 0.0
      %2315 = vmatprep.subr.mxu0 0.0
      %2316 = vmatpush1.msra.mxu0 0.0
      %2317 = vmatprep.subr.mxu0 0.0
      %2318 = vmatpush1.msra.mxu0 0.0
      %2319 = vmatprep.subr.mxu0 0.0
      %2320 = vmatpush1.msra.mxu0 0.0
      %2321 = vmatprep.mubr.f32.mxu0 0.0
      %2322 = vmatmul.mubr.f32.gmra.mrb[0].mxu0 %v1952
      %v2323 = vpop.f32.mrb[0].mxu0
      %v2324 = vadd.f32 0.0, %v2323
      %v2325 = vpop.f32.mrb[0].mxu0
      %2326 = vmatprep.mubr.f32.mxu0 0.0
      %2327 = vmatmul.mubr.f32.gmra.mrb[0].mxu0 %v1955
      %v2328 = vpop.f32.mrb[0].mxu0
      %v2329 = vadd.f32 0.0, %v2328
      %v2330 = vpop.f32.mrb[0].mxu0
      %2331 = vdwg.mxu0
      %v2332 = vmul.f32 %v2024, %v2024
      %v2333 = vmul.f32 %v2029, %v2029
      %v2334 = vsub.f32 %v2174, %v2332
      %v2335 = vsub.f32 %v2179, %v2333
      %v2336 = vmul.f32 %v2099, %v2099
      %v2337 = vmul.f32 %v2104, %v2104
      %v2338 = vsub.f32 %v2249, %v2336
      %v2339 = vsub.f32 %v2254, %v2337
      %v2340 = vmul.f32 %v2024, %v2099
      %v2341 = vmul.f32 %v2029, %v2104
      %v2342 = vsub.f32 %v2324, %v2340
      %v2343 = vsub.f32 %v2329, %v2341
      %v2344 = vmul.f32 %v2342, 2.0
      %v2345 = vmul.f32 %v2343, 2.0
      %v2346 = vadd.f32 %v2344, 0.0009
      %v2347 = vadd.f32 %v2345, 0.0009
      %v2348 = vadd.f32 %v2334, %v2338
      %v2349 = vadd.f32 %v2335, %v2339
      %v2350 = vadd.f32 %v2348, 0.0009
      %v2351 = vadd.f32 %v2349, 0.0009
      %v2352 = vrcp.pop %v2350
      %v2353 = vmul.f32 %v2346, %v2352
      %v2354 = vrcp.pop %v2351
      %v2355 = vmul.f32 %v2347, %v2354
      %v2356 = vld [vmem:[%s8] sm:$0xff]
      %v2357 = vld [vmem:[%s8 + $0x8] sm:$0xff]
      %v2358 = vld [vmem:[%s8 + $0x10] sm:$0xff]
      %v2359 = vld [vmem:[%s8 + $0x18] sm:$0xff]
      %v2360 = vld [vmem:[%s9] sm:$0xff]
      %v2361 = vld [vmem:[%s9 + $0x8] sm:$0xff]
      %v2363 = vsel %vm1805, %v2356, 0
      %v2366 = vsel %vm1805, %v2357, 0
      %v2369 = vsel %vm1805, %v2358, 0
      %v2372 = vsel %vm1805, %v2359, 0
      %2374 = vmatprep.subr.mxu0 0.0
      %2375 = vmatpush1.msra.mxu0 %v2353
      %2376 = vmatprep.subr.mxu0 0.0
      %2377 = vmatpush1.msra.mxu0 %v2355
      %2378 = vmatprep.subr.mxu0 0.0
      %2379 = vmatpush1.msra.mxu0 0.0
      %2380 = vmatprep.subr.mxu0 0.0
      %2381 = vmatpush1.msra.mxu0 0.0
      %2382 = vmatprep.subr.mxu0 0.0
      %2383 = vmatpush1.msra.mxu0 0.0
      %2384 = vmatprep.subr.mxu0 0.0
      %2385 = vmatpush1.msra.mxu0 0.0
      %2386 = vmatprep.subr.mxu0 0.0
      %2387 = vmatpush1.msra.mxu0 0.0
      %2388 = vmatprep.subr.mxu0 0.0
      %2389 = vmatpush1.msra.mxu0 0.0
      %2390 = vmatprep.subr.mxu0 0.0
      %2391 = vmatpush1.msra.mxu0 0.0
      %2392 = vmatprep.subr.mxu0 0.0
      %2393 = vmatpush1.msra.mxu0 0.0
      %2394 = vmatprep.subr.mxu0 0.0
      %2395 = vmatpush1.msra.mxu0 0.0
      %2396 = vmatprep.subr.mxu0 0.0
      %2397 = vmatpush1.msra.mxu0 0.0
      %2398 = vmatprep.subr.mxu0 0.0
      %2399 = vmatpush1.msra.mxu0 0.0
      %2400 = vmatprep.subr.mxu0 0.0
      %2401 = vmatpush1.msra.mxu0 0.0
      %2402 = vmatprep.subr.mxu0 0.0
      %2403 = vmatpush1.msra.mxu0 0.0
      %2404 = vmatprep.subr.mxu0 0.0
      %2405 = vmatpush1.msra.mxu0 0.0
      %2406 = vmatprep.subr.mxu0 0.0
      %2407 = vmatpush1.msra.mxu0 0.0
      %2408 = vmatprep.subr.mxu0 0.0
      %2409 = vmatpush1.msra.mxu0 0.0
      %2410 = vmatprep.subr.mxu0 0.0
      %2411 = vmatpush1.msra.mxu0 0.0
      %2412 = vmatprep.subr.mxu0 0.0
      %2413 = vmatpush1.msra.mxu0 0.0
      %2414 = vmatprep.subr.mxu0 0.0
      %2415 = vmatpush1.msra.mxu0 0.0
      %2416 = vmatprep.subr.mxu0 0.0
      %2417 = vmatpush1.msra.mxu0 0.0
      %2418 = vmatprep.subr.mxu0 0.0
      %2419 = vmatpush1.msra.mxu0 0.0
      %2420 = vmatprep.subr.mxu0 0.0
      %2421 = vmatpush1.msra.mxu0 0.0
      %2422 = vmatprep.subr.mxu0 0.0
      %2423 = vmatpush1.msra.mxu0 0.0
      %2424 = vmatprep.subr.mxu0 0.0
      %2425 = vmatpush1.msra.mxu0 0.0
      %2426 = vmatprep.subr.mxu0 0.0
      %2427 = vmatpush1.msra.mxu0 0.0
      %2428 = vmatprep.subr.mxu0 0.0
      %2429 = vmatpush1.msra.mxu0 0.0
      %2430 = vmatprep.subr.mxu0 0.0
      %2431 = vmatpush1.msra.mxu0 0.0
      %2432 = vmatprep.subr.mxu0 0.0
      %2433 = vmatpush1.msra.mxu0 0.0
      %2434 = vmatprep.subr.mxu0 0.0
      %2435 = vmatpush1.msra.mxu0 0.0
      %2436 = vmatprep.subr.mxu0 0.0
      %2437 = vmatpush1.msra.mxu0 0.0
      %2438 = vmatprep.mubr.f32.mxu0 0.0
      %2439 = vmatmul.mubr.f32.gmra.mrb[0].mxu0 %v2363
      %v2440 = vpop.f32.mrb[0].mxu0
      %v2441 = vadd.f32 0.0, %v2440
      %v2442 = vpop.f32.mrb[0].mxu0
      %2443 = vmatprep.mubr.f32.mxu0 0.0
      %2444 = vmatmul.mubr.f32.gmra.mrb[0].mxu0 %v2366
      %v2445 = vpop.f32.mrb[0].mxu0
      %v2446 = vadd.f32 0.0, %v2445
      %v2447 = vpop.f32.mrb[0].mxu0
      %2448 = vmatprep.mubr.f32.mxu0 0.0
      %2449 = vmatmul.mubr.f32.gmra.mrb[0].mxu0 %v2369
      %v2450 = vpop.f32.mrb[0].mxu0
      %v2451 = vadd.f32 0.0, %v2450
      %v2452 = vpop.f32.mrb[0].mxu0
      %2453 = vmatprep.mubr.f32.mxu0 0.0
      %2454 = vmatmul.mubr.f32.gmra.mrb[0].mxu0 %v2372
      %v2455 = vpop.f32.mrb[0].mxu0
      %v2456 = vadd.f32 0.0, %v2455
      %v2457 = vpop.f32.mrb[0].mxu0
      %2458 = vdwg.mxu0
      %v2460 = vsel %vm1805, %v2441, 0
      %v2463 = vsel %vm1805, %v2446, 0
      %v2466 = vsel %vm1805, %v2451, 0
      %v2469 = vsel %vm1805, %v2456, 0
      %2471 = vmatprep.subr.mxu0 0.0
      %2472 = vmatpush1.msra.mxu0 %v2360
      %2473 = vmatprep.subr.mxu0 0.0
      %2474 = vmatpush1.msra.mxu0 %v2361
      %2475 = vmatprep.subr.mxu0 0.0
      %2476 = vmatpush1.msra.mxu0 0.0
      %2477 = vmatprep.subr.mxu0 0.0
      %2478 = vmatpush1.msra.mxu0 0.0
      %2479 = vmatprep.subr.mxu0 0.0
      %2480 = vmatpush1.msra.mxu0 0.0
      %2481 = vmatprep.subr.mxu0 0.0
      %2482 = vmatpush1.msra.mxu0 0.0
      %2483 = vmatprep.subr.mxu0 0.0
      %2484 = vmatpush1.msra.mxu0 0.0
      %2485 = vmatprep.subr.mxu0 0.0
      %2486 = vmatpush1.msra.mxu0 0.0
      %2487 = vmatprep.subr.mxu0 0.0
      %2488 = vmatpush1.msra.mxu0 0.0
      %2489 = vmatprep.subr.mxu0 0.0
      %2490 = vmatpush1.msra.mxu0 0.0
      %2491 = vmatprep.subr.mxu0 0.0
      %2492 = vmatpush1.msra.mxu0 0.0
      %2493 = vmatprep.subr.mxu0 0.0
      %2494 = vmatpush1.msra.mxu0 0.0
      %2495 = vmatprep.subr.mxu0 0.0
      %2496 = vmatpush1.msra.mxu0 0.0
      %2497 = vmatprep.subr.mxu0 0.0
      %2498 = vmatpush1.msra.mxu0 0.0
      %2499 = vmatprep.subr.mxu0 0.0
      %2500 = vmatpush1.msra.mxu0 0.0
      %2501 = vmatprep.subr.mxu0 0.0
      %2502 = vmatpush1.msra.mxu0 0.0
      %2503 = vmatprep.subr.mxu0 0.0
      %2504 = vmatpush1.msra.mxu0 0.0
      %2505 = vmatprep.subr.mxu0 0.0
      %2506 = vmatpush1.msra.mxu0 0.0
      %2507 = vmatprep.subr.mxu0 0.0
      %2508 = vmatpush1.msra.mxu0 0.0
      %2509 = vmatprep.subr.mxu0 0.0
      %2510 = vmatpush1.msra.mxu0 0.0
      %2511 = vmatprep.subr.mxu0 0.0
      %2512 = vmatpush1.msra.mxu0 0.0
      %2513 = vmatprep.subr.mxu0 0.0
      %2514 = vmatpush1.msra.mxu0 0.0
      %2515 = vmatprep.subr.mxu0 0.0
      %2516 = vmatpush1.msra.mxu0 0.0
      %2517 = vmatprep.subr.mxu0 0.0
      %2518 = vmatpush1.msra.mxu0 0.0
      %2519 = vmatprep.subr.mxu0 0.0
      %2520 = vmatpush1.msra.mxu0 0.0
      %2521 = vmatprep.subr.mxu0 0.0
      %2522 = vmatpush1.msra.mxu0 0.0
      %2523 = vmatprep.subr.mxu0 0.0
      %2524 = vmatpush1.msra.mxu0 0.0
      %2525 = vmatprep.subr.mxu0 0.0
      %2526 = vmatpush1.msra.mxu0 0.0
      %2527 = vmatprep.subr.mxu0 0.0
      %2528 = vmatpush1.msra.mxu0 0.0
      %2529 = vmatprep.subr.mxu0 0.0
      %2530 = vmatpush1.msra.mxu0 0.0
      %2531 = vmatprep.subr.mxu0 0.0
      %2532 = vmatpush1.msra.mxu0 0.0
      %2533 = vmatprep.subr.mxu0 0.0
      %2534 = vmatpush1.msra.mxu0 0.0
      %2535 = vmatprep.mubr.f32.mxu0 0.0
      %2536 = vmatmul.mubr.f32.gmra.mrb[0].mxu0 %v2460
      %v2537 = vpop.f32.mrb[0].mxu0
      %v2538 = vadd.f32 0.0, %v2537
      %v2539 = vpop.f32.mrb[0].mxu0
      %2540 = vmatprep.mubr.f32.mxu0 0.0
      %2541 = vmatmul.mubr.f32.gmra.mrb[0].mxu0 %v2463
      %v2542 = vpop.f32.mrb[0].mxu0
      %v2543 = vadd.f32 0.0, %v2542
      %v2544 = vpop.f32.mrb[0].mxu0
      %2545 = vmatprep.mubr.f32.mxu0 0.0
      %2546 = vmatmul.mubr.f32.gmra.mrb[0].mxu0 %v2466
      %v2547 = vpop.f32.mrb[0].mxu0
      %v2548 = vadd.f32 0.0, %v2547
      %v2549 = vpop.f32.mrb[0].mxu0
      %2550 = vmatprep.mubr.f32.mxu0 0.0
      %2551 = vmatmul.mubr.f32.gmra.mrb[0].mxu0 %v2469
      %v2552 = vpop.f32.mrb[0].mxu0
      %v2553 = vadd.f32 0.0, %v2552
      %v2554 = vpop.f32.mrb[0].mxu0
      %2555 = vdwg.mxu0
      %v2556 = vadd.f32 %v1436, %v2538
      %v2557 = vadd.f32 %v1438, %v2543
      %v2558 = vadd.f32 %v1440, %v2548
      %v2559 = vadd.f32 %v1442, %v2553
      %v2560 = vld [vmem:[%s10] sm:$0xff]
      %v2561 = vld [vmem:[%s11] sm:$0xff]
      %v2562 = vld [vmem:[%s11 + $0x8] sm:$0xff]
      %v2564 = vsel %vm1805, %v2560, 0
      %2566 = vmatprep.subr.mxu0 0.0
      %2567 = vmatpush1.msra.mxu0 %v1631
      %2568 = vmatprep.subr.mxu0 0.0
      %2569 = vmatpush1.msra.mxu0 %v1636
      %2570 = vmatprep.subr.mxu0 0.0
      %2571 = vmatpush1.msra.mxu0 0.0
      %2572 = vmatprep.subr.mxu0 0.0
      %2573 = vmatpush1.msra.mxu0 0.0
      %2574 = vmatprep.subr.mxu0 0.0
      %2575 = vmatpush1.msra.mxu0 0.0
      %2576 = vmatprep.subr.mxu0 0.0
      %2577 = vmatpush1.msra.mxu0 0.0
      %2578 = vmatprep.subr.mxu0 0.0
      %2579 = vmatpush1.msra.mxu0 0.0
      %2580 = vmatprep.subr.mxu0 0.0
      %2581 = vmatpush1.msra.mxu0 0.0
      %2582 = vmatprep.subr.mxu0 0.0
      %2583 = vmatpush1.msra.mxu0 0.0
      %2584 = vmatprep.subr.mxu0 0.0
      %2585 = vmatpush1.msra.mxu0 0.0
      %2586 = vmatprep.subr.mxu0 0.0
      %2587 = vmatpush1.msra.mxu0 0.0
      %2588 = vmatprep.subr.mxu0 0.0
      %2589 = vmatpush1.msra.mxu0 0.0
      %2590 = vmatprep.subr.mxu0 0.0
      %2591 = vmatpush1.msra.mxu0 0.0
      %2592 = vmatprep.subr.mxu0 0.0
      %2593 = vmatpush1.msra.mxu0 0.0
      %2594 = vmatprep.subr.mxu0 0.0
      %2595 = vmatpush1.msra.mxu0 0.0
      %2596 = vmatprep.subr.mxu0 0.0
      %2597 = vmatpush1.msra.mxu0 0.0
      %2598 = vmatprep.subr.mxu0 0.0
      %2599 = vmatpush1.msra.mxu0 0.0
      %2600 = vmatprep.subr.mxu0 0.0
      %2601 = vmatpush1.msra.mxu0 0.0
      %2602 = vmatprep.subr.mxu0 0.0
      %2603 = vmatpush1.msra.mxu0 0.0
      %2604 = vmatprep.subr.mxu0 0.0
      %2605 = vmatpush1.msra.mxu0 0.0
      %2606 = vmatprep.subr.mxu0 0.0
      %2607 = vmatpush1.msra.mxu0 0.0
      %2608 = vmatprep.subr.mxu0 0.0
      %2609 = vmatpush1.msra.mxu0 0.0
      %2610 = vmatprep.subr.mxu0 0.0
      %2611 = vmatpush1.msra.mxu0 0.0
      %2612 = vmatprep.subr.mxu0 0.0
      %2613 = vmatpush1.msra.mxu0 0.0
      %2614 = vmatprep.subr.mxu0 0.0
      %2615 = vmatpush1.msra.mxu0 0.0
      %2616 = vmatprep.subr.mxu0 0.0
      %2617 = vmatpush1.msra.mxu0 0.0
      %2618 = vmatprep.subr.mxu0 0.0
      %2619 = vmatpush1.msra.mxu0 0.0
      %2620 = vmatprep.subr.mxu0 0.0
      %2621 = vmatpush1.msra.mxu0 0.0
      %2622 = vmatprep.subr.mxu0 0.0
      %2623 = vmatpush1.msra.mxu0 0.0
      %2624 = vmatprep.subr.mxu0 0.0
      %2625 = vmatpush1.msra.mxu0 0.0
      %2626 = vmatprep.subr.mxu0 0.0
      %2627 = vmatpush1.msra.mxu0 0.0
      %2628 = vmatprep.subr.mxu0 0.0
      %2629 = vmatpush1.msra.mxu0 0.0
      %2630 = vmatprep.mubr.f32.mxu0 0.0
      %2631 = vmatmul.mubr.f32.gmra.mrb[0].mxu0 %v2564
      %v2632 = vpop.f32.mrb[0].mxu0
      %v2633 = vadd.f32 0.0, %v2632
      %v2634 = vpop.f32.mrb[0].mxu0
      %2635 = vdwg.mxu0
      %v2637 = vsel %vm1805, %v2633, 0
      %2639 = vmatprep.subr.mxu0 0.0
      %2640 = vmatpush1.msra.mxu0 %v2561
      %2641 = vmatprep.subr.mxu0 0.0
      %2642 = vmatpush1.msra.mxu0 %v2562
      %2643 = vmatprep.subr.mxu0 0.0
      %2644 = vmatpush1.msra.mxu0 0.0
      %2645 = vmatprep.subr.mxu0 0.0
      %2646 = vmatpush1.msra.mxu0 0.0
      %2647 = vmatprep.subr.mxu0 0.0
      %2648 = vmatpush1.msra.mxu0 0.0
      %2649 = vmatprep.subr.mxu0 0.0
      %2650 = vmatpush1.msra.mxu0 0.0
      %2651 = vmatprep.subr.mxu0 0.0
      %2652 = vmatpush1.msra.mxu0 0.0
      %2653 = vmatprep.subr.mxu0 0.0
      %2654 = vmatpush1.msra.mxu0 0.0
      %2655 = vmatprep.subr.mxu0 0.0
      %2656 = vmatpush1.msra.mxu0 0.0
      %2657 = vmatprep.subr.mxu0 0.0
      %2658 = vmatpush1.msra.mxu0 0.0
      %2659 = vmatprep.subr.mxu0 0.0
      %2660 = vmatpush1.msra.mxu0 0.0
      %2661 = vmatprep.subr.mxu0 0.0
      %2662 = vmatpush1.msra.mxu0 0.0
      %2663 = vmatprep.subr.mxu0 0.0
      %2664 = vmatpush1.msra.mxu0 0.0
      %2665 = vmatprep.subr.mxu0 0.0
      %2666 = vmatpush1.msra.mxu0 0.0
      %2667 = vmatprep.subr.mxu0 0.0
      %2668 = vmatpush1.msra.mxu0 0.0
      %2669 = vmatprep.subr.mxu0 0.0
      %2670 = vmatpush1.msra.mxu0 0.0
      %2671 = vmatprep.subr.mxu0 0.0
      %2672 = vmatpush1.msra.mxu0 0.0
      %2673 = vmatprep.subr.mxu0 0.0
      %2674 = vmatpush1.msra.mxu0 0.0
      %2675 = vmatprep.subr.mxu0 0.0
      %2676 = vmatpush1.msra.mxu0 0.0
      %2677 = vmatprep.subr.mxu0 0.0
      %2678 = vmatpush1.msra.mxu0 0.0
      %2679 = vmatprep.subr.mxu0 0.0
      %2680 = vmatpush1.msra.mxu0 0.0
      %2681 = vmatprep.subr.mxu0 0.0
      %2682 = vmatpush1.msra.mxu0 0.0
      %2683 = vmatprep.subr.mxu0 0.0
      %2684 = vmatpush1.msra.mxu0 0.0
      %2685 = vmatprep.subr.mxu0 0.0
      %2686 = vmatpush1.msra.mxu0 0.0
      %2687 = vmatprep.subr.mxu0 0.0
      %2688 = vmatpush1.msra.mxu0 0.0
      %2689 = vmatprep.subr.mxu0 0.0
      %2690 = vmatpush1.msra.mxu0 0.0
      %2691 = vmatprep.subr.mxu0 0.0
      %2692 = vmatpush1.msra.mxu0 0.0
      %2693 = vmatprep.subr.mxu0 0.0
      %2694 = vmatpush1.msra.mxu0 0.0
      %2695 = vmatprep.subr.mxu0 0.0
      %2696 = vmatpush1.msra.mxu0 0.0
      %2697 = vmatprep.subr.mxu0 0.0
      %2698 = vmatpush1.msra.mxu0 0.0
      %2699 = vmatprep.subr.mxu0 0.0
      %2700 = vmatpush1.msra.mxu0 0.0
      %2701 = vmatprep.subr.mxu0 0.0
      %2702 = vmatpush1.msra.mxu0 0.0
      %2703 = vmatprep.mubr.f32.mxu0 0.0
      %2704 = vmatmul.mubr.f32.gmra.mrb[0].mxu0 %v2637
      %v2705 = vpop.f32.mrb[0].mxu0
      %v2706 = vadd.f32 0.0, %v2705
      %v2707 = vpop.f32.mrb[0].mxu0
      %2708 = vdwg.mxu0
      %2709 = vmatprep.subr.mxu0 0.0
      %2710 = vmatpush1.msra.mxu0 %v1787
      %2711 = vmatprep.subr.mxu0 0.0
      %2712 = vmatpush1.msra.mxu0 %v1792
      %2713 = vmatprep.subr.mxu0 0.0
      %2714 = vmatpush1.msra.mxu0 0.0
      %2715 = vmatprep.subr.mxu0 0.0
      %2716 = vmatpush1.msra.mxu0 0.0
      %2717 = vmatprep.subr.mxu0 0.0
      %2718 = vmatpush1.msra.mxu0 0.0
      %2719 = vmatprep.subr.mxu0 0.0
      %2720 = vmatpush1.msra.mxu0 0.0
      %2721 = vmatprep.subr.mxu0 0.0
      %2722 = vmatpush1.msra.mxu0 0.0
      %2723 = vmatprep.subr.mxu0 0.0
      %2724 = vmatpush1.msra.mxu0 0.0
      %2725 = vmatprep.subr.mxu0 0.0
      %2726 = vmatpush1.msra.mxu0 0.0
      %2727 = vmatprep.subr.mxu0 0.0
      %2728 = vmatpush1.msra.mxu0 0.0
      %2729 = vmatprep.subr.mxu0 0.0
      %2730 = vmatpush1.msra.mxu0 0.0
      %2731 = vmatprep.subr.mxu0 0.0
      %2732 = vmatpush1.msra.mxu0 0.0
      %2733 = vmatprep.subr.mxu0 0.0
      %2734 = vmatpush1.msra.mxu0 0.0
      %2735 = vmatprep.subr.mxu0 0.0
      %2736 = vmatpush1.msra.mxu0 0.0
      %2737 = vmatprep.subr.mxu0 0.0
      %2738 = vmatpush1.msra.mxu0 0.0
      %2739 = vmatprep.subr.mxu0 0.0
      %2740 = vmatpush1.msra.mxu0 0.0
      %2741 = vmatprep.subr.mxu0 0.0
      %2742 = vmatpush1.msra.mxu0 0.0
      %2743 = vmatprep.subr.mxu0 0.0
      %2744 = vmatpush1.msra.mxu0 0.0
      %2745 = vmatprep.subr.mxu0 0.0
      %2746 = vmatpush1.msra.mxu0 0.0
      %2747 = vmatprep.subr.mxu0 0.0
      %2748 = vmatpush1.msra.mxu0 0.0
      %2749 = vmatprep.subr.mxu0 0.0
      %2750 = vmatpush1.msra.mxu0 0.0
      %2751 = vmatprep.subr.mxu0 0.0
      %2752 = vmatpush1.msra.mxu0 0.0
      %2753 = vmatprep.subr.mxu0 0.0
      %2754 = vmatpush1.msra.mxu0 0.0
      %2755 = vmatprep.subr.mxu0 0.0
      %2756 = vmatpush1.msra.mxu0 0.0
      %2757 = vmatprep.subr.mxu0 0.0
      %2758 = vmatpush1.msra.mxu0 0.0
      %2759 = vmatprep.subr.mxu0 0.0
      %2760 = vmatpush1.msra.mxu0 0.0
      %2761 = vmatprep.subr.mxu0 0.0
      %2762 = vmatpush1.msra.mxu0 0.0
      %2763 = vmatprep.subr.mxu0 0.0
      %2764 = vmatpush1.msra.mxu0 0.0
      %2765 = vmatprep.subr.mxu0 0.0
      %2766 = vmatpush1.msra.mxu0 0.0
      %2767 = vmatprep.subr.mxu0 0.0
      %2768 = vmatpush1.msra.mxu0 0.0
      %2769 = vmatprep.subr.mxu0 0.0
      %2770 = vmatpush1.msra.mxu0 0.0
      %2771 = vmatprep.subr.mxu0 0.0
      %2772 = vmatpush1.msra.mxu0 0.0
      %2773 = vmatprep.mubr.f32.mxu0 0.0
      %2774 = vmatmul.mubr.f32.gmra.mrb[0].mxu0 %v2564
      %v2775 = vpop.f32.mrb[0].mxu0
      %v2776 = vadd.f32 0.0, %v2775
      %v2777 = vpop.f32.mrb[0].mxu0
      %2778 = vdwg.mxu0
      %v2780 = vsel %vm1805, %v2776, 0
      %2782 = vmatprep.subr.mxu0 0.0
      %2783 = vmatpush1.msra.mxu0 %v2561
      %2784 = vmatprep.subr.mxu0 0.0
      %2785 = vmatpush1.msra.mxu0 %v2562
      %2786 = vmatprep.subr.mxu0 0.0
      %2787 = vmatpush1.msra.mxu0 0.0
      %2788 = vmatprep.subr.mxu0 0.0
      %2789 = vmatpush1.msra.mxu0 0.0
      %2790 = vmatprep.subr.mxu0 0.0
      %2791 = vmatpush1.msra.mxu0 0.0
      %2792 = vmatprep.subr.mxu0 0.0
      %2793 = vmatpush1.msra.mxu0 0.0
      %2794 = vmatprep.subr.mxu0 0.0
      %2795 = vmatpush1.msra.mxu0 0.0
      %2796 = vmatprep.subr.mxu0 0.0
      %2797 = vmatpush1.msra.mxu0 0.0
      %2798 = vmatprep.subr.mxu0 0.0
      %2799 = vmatpush1.msra.mxu0 0.0
      %2800 = vmatprep.subr.mxu0 0.0
      %2801 = vmatpush1.msra.mxu0 0.0
      %2802 = vmatprep.subr.mxu0 0.0
      %2803 = vmatpush1.msra.mxu0 0.0
      %2804 = vmatprep.subr.mxu0 0.0
      %2805 = vmatpush1.msra.mxu0 0.0
      %2806 = vmatprep.subr.mxu0 0.0
      %2807 = vmatpush1.msra.mxu0 0.0
      %2808 = vmatprep.subr.mxu0 0.0
      %2809 = vmatpush1.msra.mxu0 0.0
      %2810 = vmatprep.subr.mxu0 0.0
      %2811 = vmatpush1.msra.mxu0 0.0
      %2812 = vmatprep.subr.mxu0 0.0
      %2813 = vmatpush1.msra.mxu0 0.0
      %2814 = vmatprep.subr.mxu0 0.0
      %2815 = vmatpush1.msra.mxu0 0.0
      %2816 = vmatprep.subr.mxu0 0.0
      %2817 = vmatpush1.msra.mxu0 0.0
      %2818 = vmatprep.subr.mxu0 0.0
      %2819 = vmatpush1.msra.mxu0 0.0
      %2820 = vmatprep.subr.mxu0 0.0
      %2821 = vmatpush1.msra.mxu0 0.0
      %2822 = vmatprep.subr.mxu0 0.0
      %2823 = vmatpush1.msra.mxu0 0.0
      %2824 = vmatprep.subr.mxu0 0.0
      %2825 = vmatpush1.msra.mxu0 0.0
      %2826 = vmatprep.subr.mxu0 0.0
      %2827 = vmatpush1.msra.mxu0 0.0
      %2828 = vmatprep.subr.mxu0 0.0
      %2829 = vmatpush1.msra.mxu0 0.0
      %2830 = vmatprep.subr.mxu0 0.0
      %2831 = vmatpush1.msra.mxu0 0.0
      %2832 = vmatprep.subr.mxu0 0.0
      %2833 = vmatpush1.msra.mxu0 0.0
      %2834 = vmatprep.subr.mxu0 0.0
      %2835 = vmatpush1.msra.mxu0 0.0
      %2836 = vmatprep.subr.mxu0 0.0
      %2837 = vmatpush1.msra.mxu0 0.0
      %2838 = vmatprep.subr.mxu0 0.0
      %2839 = vmatpush1.msra.mxu0 0.0
      %2840 = vmatprep.subr.mxu0 0.0
      %2841 = vmatpush1.msra.mxu0 0.0
      %2842 = vmatprep.subr.mxu0 0.0
      %2843 = vmatpush1.msra.mxu0 0.0
      %2844 = vmatprep.subr.mxu0 0.0
      %2845 = vmatpush1.msra.mxu0 0.0
      %2846 = vmatprep.mubr.f32.mxu0 0.0
      %2847 = vmatmul.mubr.f32.gmra.mrb[0].mxu0 %v2780
      %v2848 = vpop.f32.mrb[0].mxu0
      %v2849 = vadd.f32 0.0, %v2848
      %v2850 = vpop.f32.mrb[0].mxu0
      %2851 = vdwg.mxu0
      %v2852 = vld [vmem:[%s12] sm:$0xff]
      %v2853 = vld [vmem:[%s13] sm:$0xff]
      %v2854 = vmul.f32 %v2706, %v2706
      %v2855 = vmul.f32 %v2849, %v2849
      %v2856 = vmul.f32 %v2706, %v2849
      %vm2857 = vcmask 64512
      %v2859 = vsel %vm2857, %v2706, 0
      %v2862 = vsel %vm2857, %v2849, 0
      %v2865 = vsel %vm2857, %v2854, 0
      %v2868 = vsel %vm2857, %v2855, 0
      %v2871 = vsel %vm2857, %v2856, 0
      %2873 = vmatprep.subr.mxu0 0.0
      %2874 = vmatpush1.msra.mxu0 %v2853
      %2875 = vmatprep.subr.mxu0 0.0
      %2876 = vmatpush1.msra.mxu0 0.0
      %2877 = vmatprep.subr.mxu0 0.0
      %2878 = vmatpush1.msra.mxu0 0.0
      %2879 = vmatprep.subr.mxu0 0.0
      %2880 = vmatpush1.msra.mxu0 0.0
      %2881 = vmatprep.subr.mxu0 0.0
      %2882 = vmatpush1.msra.mxu0 0.0
      %2883 = vmatprep.subr.mxu0 0.0
      %2884 = vmatpush1.msra.mxu0 0.0
      %2885 = vmatprep.subr.mxu0 0.0
      %2886 = vmatpush1.msra.mxu0 0.0
      %2887 = vmatprep.subr.mxu0 0.0
      %2888 = vmatpush1.msra.mxu0 0.0
      %2889 = vmatprep.subr.mxu0 0.0
      %2890 = vmatpush1.msra.mxu0 0.0
      %2891 = vmatprep.subr.mxu0 0.0
      %2892 = vmatpush1.msra.mxu0 0.0
      %2893 = vmatprep.subr.mxu0 0.0
      %2894 = vmatpush1.msra.mxu0 0.0
      %2895 = vmatprep.subr.mxu0 0.0
      %2896 = vmatpush1.msra.mxu0 0.0
      %2897 = vmatprep.subr.mxu0 0.0
      %2898 = vmatpush1.msra.mxu0 0.0
      %2899 = vmatprep.subr.mxu0 0.0
      %2900 = vmatpush1.msra.mxu0 0.0
      %2901 = vmatprep.subr.mxu0 0.0
      %2902 = vmatpush1.msra.mxu0 0.0
      %2903 = vmatprep.subr.mxu0 0.0
      %2904 = vmatpush1.msra.mxu0 0.0
      %2905 = vmatprep.subr.mxu0 0.0
      %2906 = vmatpush1.msra.mxu0 0.0
      %2907 = vmatprep.subr.mxu0 0.0
      %2908 = vmatpush1.msra.mxu0 0.0
      %2909 = vmatprep.subr.mxu0 0.0
      %2910 = vmatpush1.msra.mxu0 0.0
      %2911 = vmatprep.subr.mxu0 0.0
      %2912 = vmatpush1.msra.mxu0 0.0
      %2913 = vmatprep.subr.mxu0 0.0
      %2914 = vmatpush1.msra.mxu0 0.0
      %2915 = vmatprep.subr.mxu0 0.0
      %2916 = vmatpush1.msra.mxu0 0.0
      %2917 = vmatprep.subr.mxu0 0.0
      %2918 = vmatpush1.msra.mxu0 0.0
      %2919 = vmatprep.subr.mxu0 0.0
      %2920 = vmatpush1.msra.mxu0 0.0
      %2921 = vmatprep.subr.mxu0 0.0
      %2922 = vmatpush1.msra.mxu0 0.0
      %2923 = vmatprep.subr.mxu0 0.0
      %2924 = vmatpush1.msra.mxu0 0.0
      %2925 = vmatprep.subr.mxu0 0.0
      %2926 = vmatpush1.msra.mxu0 0.0
      %2927 = vmatprep.subr.mxu0 0.0
      %2928 = vmatpush1.msra.mxu0 0.0
      %2929 = vmatprep.subr.mxu0 0.0
      %2930 = vmatpush1.msra.mxu0 0.0
      %2931 = vmatprep.subr.mxu0 0.0
      %2932 = vmatpush1.msra.mxu0 0.0
      %2933 = vmatprep.subr.mxu0 0.0
      %2934 = vmatpush1.msra.mxu0 0.0
      %2935 = vmatprep.subr.mxu0 0.0
      %2936 = vmatpush1.msra.mxu0 0.0
      %2937 = vmatprep.mubr.f32.mxu0 0.0
      %2938 = vmatmul.mubr.f32.gmra.mrb[0].mxu0 %v2859
      %v2939 = vpop.f32.mrb[0].mxu0
      %v2940 = vadd.f32 0.0, %v2939
      %v2941 = vpop.f32.mrb[0].mxu0
      %2942 = vmatprep.mubr.f32.mxu0 0.0
      %2943 = vmatmul.mubr.f32.gmra.mrb[0].mxu0 %v2862
      %v2944 = vpop.f32.mrb[0].mxu0
      %v2945 = vadd.f32 0.0, %v2944
      %v2946 = vpop.f32.mrb[0].mxu0
      %2947 = vmatprep.mubr.f32.mxu0 0.0
      %2948 = vmatmul.mubr.f32.gmra.mrb[0].mxu0 %v2865
      %v2949 = vpop.f32.mrb[0].mxu0
      %v2950 = vadd.f32 0.0, %v2949
      %v2951 = vpop.f32.mrb[0].mxu0
      %2952 = vmatprep.mubr.f32.mxu0 0.0
      %2953 = vmatmul.mubr.f32.gmra.mrb[0].mxu0 %v2868
      %v2954 = vpop.f32.mrb[0].mxu0
      %v2955 = vadd.f32 0.0, %v2954
      %v2956 = vpop.f32.mrb[0].mxu0
      %2957 = vmatprep.mubr.f32.mxu0 0.0
      %2958 = vmatmul.mubr.f32.gmra.mrb[0].mxu0 %v2871
      %v2959 = vpop.f32.mrb[0].mxu0
      %v2960 = vadd.f32 0.0, %v2959
      %v2961 = vpop.f32.mrb[0].mxu0
      %2962 = vdwg.mxu0
      %v2964 = vsel %vm2857, %v2852, 0
      %2966 = vmatprep.subr.mxu0 0.0
      %2967 = vmatpush1.msra.mxu0 %v2940
      %2968 = vmatprep.subr.mxu0 0.0
      %2969 = vmatpush1.msra.mxu0 0.0
      %2970 = vmatprep.subr.mxu0 0.0
      %2971 = vmatpush1.msra.mxu0 0.0
      %2972 = vmatprep.subr.mxu0 0.0
      %2973 = vmatpush1.msra.mxu0 0.0
      %2974 = vmatprep.subr.mxu0 0.0
      %2975 = vmatpush1.msra.mxu0 0.0
      %2976 = vmatprep.subr.mxu0 0.0
      %2977 = vmatpush1.msra.mxu0 0.0
      %2978 = vmatprep.subr.mxu0 0.0
      %2979 = vmatpush1.msra.mxu0 0.0
      %2980 = vmatprep.subr.mxu0 0.0
      %2981 = vmatpush1.msra.mxu0 0.0
      %2982 = vmatprep.subr.mxu0 0.0
      %2983 = vmatpush1.msra.mxu0 0.0
      %2984 = vmatprep.subr.mxu0 0.0
      %2985 = vmatpush1.msra.mxu0 0.0
      %2986 = vmatprep.subr.mxu0 0.0
      %2987 = vmatpush1.msra.mxu0 0.0
      %2988 = vmatprep.subr.mxu0 0.0
      %2989 = vmatpush1.msra.mxu0 0.0
      %2990 = vmatprep.subr.mxu0 0.0
      %2991 = vmatpush1.msra.mxu0 0.0
      %2992 = vmatprep.subr.mxu0 0.0
      %2993 = vmatpush1.msra.mxu0 0.0
      %2994 = vmatprep.subr.mxu0 0.0
      %2995 = vmatpush1.msra.mxu0 0.0
      %2996 = vmatprep.subr.mxu0 0.0
      %2997 = vmatpush1.msra.mxu0 0.0
      %2998 = vmatprep.subr.mxu0 0.0
      %2999 = vmatpush1.msra.mxu0 0.0
      %3000 = vmatprep.subr.mxu0 0.0
      %3001 = vmatpush1.msra.mxu0 0.0
      %3002 = vmatprep.subr.mxu0 0.0
      %3003 = vmatpush1.msra.mxu0 0.0
      %3004 = vmatprep.subr.mxu0 0.0
      %3005 = vmatpush1.msra.mxu0 0.0
      %3006 = vmatprep.subr.mxu0 0.0
      %3007 = vmatpush1.msra.mxu0 0.0
      %3008 = vmatprep.subr.mxu0 0.0
      %3009 = vmatpush1.msra.mxu0 0.0
      %3010 = vmatprep.subr.mxu0 0.0
      %3011 = vmatpush1.msra.mxu0 0.0
      %3012 = vmatprep.subr.mxu0 0.0
      %3013 = vmatpush1.msra.mxu0 0.0
      %3014 = vmatprep.subr.mxu0 0.0
      %3015 = vmatpush1.msra.mxu0 0.0
      %3016 = vmatprep.subr.mxu0 0.0
      %3017 = vmatpush1.msra.mxu0 0.0
      %3018 = vmatprep.subr.mxu0 0.0
      %3019 = vmatpush1.msra.mxu0 0.0
      %3020 = vmatprep.subr.mxu0 0.0
      %3021 = vmatpush1.msra.mxu0 0.0
      %3022 = vmatprep.subr.mxu0 0.0
      %3023 = vmatpush1.msra.mxu0 0.0
      %3024 = vmatprep.subr.mxu0 0.0
      %3025 = vmatpush1.msra.mxu0 0.0
      %3026 = vmatprep.subr.mxu0 0.0
      %3027 = vmatpush1.msra.mxu0 0.0
      %3028 = vmatprep.subr.mxu0 0.0
      %3029 = vmatpush1.msra.mxu0 0.0
      %3030 = vmatprep.mubr.f32.mxu0 0.0
      %3031 = vmatmul.mubr.f32.gmra.mrb[0].mxu0 %v2964
      %v3032 = vpop.f32.mrb[0].mxu0
      %v3033 = vadd.f32 0.0, %v3032
      %v3034 = vpop.f32.mrb[0].mxu0
      %3035 = vdwg.mxu0
      %3036 = vmatprep.subr.mxu0 0.0
      %3037 = vmatpush1.msra.mxu0 %v2945
      %3038 = vmatprep.subr.mxu0 0.0
      %3039 = vmatpush1.msra.mxu0 0.0
      %3040 = vmatprep.subr.mxu0 0.0
      %3041 = vmatpush1.msra.mxu0 0.0
      %3042 = vmatprep.subr.mxu0 0.0
      %3043 = vmatpush1.msra.mxu0 0.0
      %3044 = vmatprep.subr.mxu0 0.0
      %3045 = vmatpush1.msra.mxu0 0.0
      %3046 = vmatprep.subr.mxu0 0.0
      %3047 = vmatpush1.msra.mxu0 0.0
      %3048 = vmatprep.subr.mxu0 0.0
      %3049 = vmatpush1.msra.mxu0 0.0
      %3050 = vmatprep.subr.mxu0 0.0
      %3051 = vmatpush1.msra.mxu0 0.0
      %3052 = vmatprep.subr.mxu0 0.0
      %3053 = vmatpush1.msra.mxu0 0.0
      %3054 = vmatprep.subr.mxu0 0.0
      %3055 = vmatpush1.msra.mxu0 0.0
      %3056 = vmatprep.subr.mxu0 0.0
      %3057 = vmatpush1.msra.mxu0 0.0
      %3058 = vmatprep.subr.mxu0 0.0
      %3059 = vmatpush1.msra.mxu0 0.0
      %3060 = vmatprep.subr.mxu0 0.0
      %3061 = vmatpush1.msra.mxu0 0.0
      %3062 = vmatprep.subr.mxu0 0.0
      %3063 = vmatpush1.msra.mxu0 0.0
      %3064 = vmatprep.subr.mxu0 0.0
      %3065 = vmatpush1.msra.mxu0 0.0
      %3066 = vmatprep.subr.mxu0 0.0
      %3067 = vmatpush1.msra.mxu0 0.0
      %3068 = vmatprep.subr.mxu0 0.0
      %3069 = vmatpush1.msra.mxu0 0.0
      %3070 = vmatprep.subr.mxu0 0.0
      %3071 = vmatpush1.msra.mxu0 0.0
      %3072 = vmatprep.subr.mxu0 0.0
      %3073 = vmatpush1.msra.mxu0 0.0
      %3074 = vmatprep.subr.mxu0 0.0
      %3075 = vmatpush1.msra.mxu0 0.0
      %3076 = vmatprep.subr.mxu0 0.0
      %3077 = vmatpush1.msra.mxu0 0.0
      %3078 = vmatprep.subr.mxu0 0.0
      %3079 = vmatpush1.msra.mxu0 0.0
      %3080 = vmatprep.subr.mxu0 0.0
      %3081 = vmatpush1.msra.mxu0 0.0
      %3082 = vmatprep.subr.mxu0 0.0
      %3083 = vmatpush1.msra.mxu0 0.0
      %3084 = vmatprep.subr.mxu0 0.0
      %3085 = vmatpush1.msra.mxu0 0.0
      %3086 = vmatprep.subr.mxu0 0.0
      %3087 = vmatpush1.msra.mxu0 0.0
      %3088 = vmatprep.subr.mxu0 0.0
      %3089 = vmatpush1.msra.mxu0 0.0
      %3090 = vmatprep.subr.mxu0 0.0
      %3091 = vmatpush1.msra.mxu0 0.0
      %3092 = vmatprep.subr.mxu0 0.0
      %3093 = vmatpush1.msra.mxu0 0.0
      %3094 = vmatprep.subr.mxu0 0.0
      %3095 = vmatpush1.msra.mxu0 0.0
      %3096 = vmatprep.subr.mxu0 0.0
      %3097 = vmatpush1.msra.mxu0 0.0
      %3098 = vmatprep.subr.mxu0 0.0
      %3099 = vmatpush1.msra.mxu0 0.0
      %3100 = vmatprep.mubr.f32.mxu0 0.0
      %3101 = vmatmul.mubr.f32.gmra.mrb[0].mxu0 %v2964
      %v3102 = vpop.f32.mrb[0].mxu0
      %v3103 = vadd.f32 0.0, %v3102
      %v3104 = vpop.f32.mrb[0].mxu0
      %3105 = vdwg.mxu0
      %3106 = vmatprep.subr.mxu0 0.0
      %3107 = vmatpush1.msra.mxu0 %v2950
      %3108 = vmatprep.subr.mxu0 0.0
      %3109 = vmatpush1.msra.mxu0 0.0
      %3110 = vmatprep.subr.mxu0 0.0
      %3111 = vmatpush1.msra.mxu0 0.0
      %3112 = vmatprep.subr.mxu0 0.0
      %3113 = vmatpush1.msra.mxu0 0.0
      %3114 = vmatprep.subr.mxu0 0.0
      %3115 = vmatpush1.msra.mxu0 0.0
      %3116 = vmatprep.subr.mxu0 0.0
      %3117 = vmatpush1.msra.mxu0 0.0
      %3118 = vmatprep.subr.mxu0 0.0
      %3119 = vmatpush1.msra.mxu0 0.0
      %3120 = vmatprep.subr.mxu0 0.0
      %3121 = vmatpush1.msra.mxu0 0.0
      %3122 = vmatprep.subr.mxu0 0.0
      %3123 = vmatpush1.msra.mxu0 0.0
      %3124 = vmatprep.subr.mxu0 0.0
      %3125 = vmatpush1.msra.mxu0 0.0
      %3126 = vmatprep.subr.mxu0 0.0
      %3127 = vmatpush1.msra.mxu0 0.0
      %3128 = vmatprep.subr.mxu0 0.0
      %3129 = vmatpush1.msra.mxu0 0.0
      %3130 = vmatprep.subr.mxu0 0.0
      %3131 = vmatpush1.msra.mxu0 0.0
      %3132 = vmatprep.subr.mxu0 0.0
      %3133 = vmatpush1.msra.mxu0 0.0
      %3134 = vmatprep.subr.mxu0 0.0
      %3135 = vmatpush1.msra.mxu0 0.0
      %3136 = vmatprep.subr.mxu0 0.0
      %3137 = vmatpush1.msra.mxu0 0.0
      %3138 = vmatprep.subr.mxu0 0.0
      %3139 = vmatpush1.msra.mxu0 0.0
      %3140 = vmatprep.subr.mxu0 0.0
      %3141 = vmatpush1.msra.mxu0 0.0
      %3142 = vmatprep.subr.mxu0 0.0
      %3143 = vmatpush1.msra.mxu0 0.0
      %3144 = vmatprep.subr.mxu0 0.0
      %3145 = vmatpush1.msra.mxu0 0.0
      %3146 = vmatprep.subr.mxu0 0.0
      %3147 = vmatpush1.msra.mxu0 0.0
      %3148 = vmatprep.subr.mxu0 0.0
      %3149 = vmatpush1.msra.mxu0 0.0
      %3150 = vmatprep.subr.mxu0 0.0
      %3151 = vmatpush1.msra.mxu0 0.0
      %3152 = vmatprep.subr.mxu0 0.0
      %3153 = vmatpush1.msra.mxu0 0.0
      %3154 = vmatprep.subr.mxu0 0.0
      %3155 = vmatpush1.msra.mxu0 0.0
      %3156 = vmatprep.subr.mxu0 0.0
      %3157 = vmatpush1.msra.mxu0 0.0
      %3158 = vmatprep.subr.mxu0 0.0
      %3159 = vmatpush1.msra.mxu0 0.0
      %3160 = vmatprep.subr.mxu0 0.0
      %3161 = vmatpush1.msra.mxu0 0.0
      %3162 = vmatprep.subr.mxu0 0.0
      %3163 = vmatpush1.msra.mxu0 0.0
      %3164 = vmatprep.subr.mxu0 0.0
      %3165 = vmatpush1.msra.mxu0 0.0
      %3166 = vmatprep.subr.mxu0 0.0
      %3167 = vmatpush1.msra.mxu0 0.0
      %3168 = vmatprep.subr.mxu0 0.0
      %3169 = vmatpush1.msra.mxu0 0.0
      %3170 = vmatprep.mubr.f32.mxu0 0.0
      %3171 = vmatmul.mubr.f32.gmra.mrb[0].mxu0 %v2964
      %v3172 = vpop.f32.mrb[0].mxu0
      %v3173 = vadd.f32 0.0, %v3172
      %v3174 = vpop.f32.mrb[0].mxu0
      %3175 = vdwg.mxu0
      %3176 = vmatprep.subr.mxu0 0.0
      %3177 = vmatpush1.msra.mxu0 %v2955
      %3178 = vmatprep.subr.mxu0 0.0
      %3179 = vmatpush1.msra.mxu0 0.0
      %3180 = vmatprep.subr.mxu0 0.0
      %3181 = vmatpush1.msra.mxu0 0.0
      %3182 = vmatprep.subr.mxu0 0.0
      %3183 = vmatpush1.msra.mxu0 0.0
      %3184 = vmatprep.subr.mxu0 0.0
      %3185 = vmatpush1.msra.mxu0 0.0
      %3186 = vmatprep.subr.mxu0 0.0
      %3187 = vmatpush1.msra.mxu0 0.0
      %3188 = vmatprep.subr.mxu0 0.0
      %3189 = vmatpush1.msra.mxu0 0.0
      %3190 = vmatprep.subr.mxu0 0.0
      %3191 = vmatpush1.msra.mxu0 0.0
      %3192 = vmatprep.subr.mxu0 0.0
      %3193 = vmatpush1.msra.mxu0 0.0
      %3194 = vmatprep.subr.mxu0 0.0
      %3195 = vmatpush1.msra.mxu0 0.0
      %3196 = vmatprep.subr.mxu0 0.0
      %3197 = vmatpush1.msra.mxu0 0.0
      %3198 = vmatprep.subr.mxu0 0.0
      %3199 = vmatpush1.msra.mxu0 0.0
      %3200 = vmatprep.subr.mxu0 0.0
      %3201 = vmatpush1.msra.mxu0 0.0
      %3202 = vmatprep.subr.mxu0 0.0
      %3203 = vmatpush1.msra.mxu0 0.0
      %3204 = vmatprep.subr.mxu0 0.0
      %3205 = vmatpush1.msra.mxu0 0.0
      %3206 = vmatprep.subr.mxu0 0.0
      %3207 = vmatpush1.msra.mxu0 0.0
      %3208 = vmatprep.subr.mxu0 0.0
      %3209 = vmatpush1.msra.mxu0 0.0
      %3210 = vmatprep.subr.mxu0 0.0
      %3211 = vmatpush1.msra.mxu0 0.0
      %3212 = vmatprep.subr.mxu0 0.0
      %3213 = vmatpush1.msra.mxu0 0.0
      %3214 = vmatprep.subr.mxu0 0.0
      %3215 = vmatpush1.msra.mxu0 0.0
      %3216 = vmatprep.subr.mxu0 0.0
      %3217 = vmatpush1.msra.mxu0 0.0
      %3218 = vmatprep.subr.mxu0 0.0
      %3219 = vmatpush1.msra.mxu0 0.0
      %3220 = vmatprep.subr.mxu0 0.0
      %3221 = vmatpush1.msra.mxu0 0.0
      %3222 = vmatprep.subr.mxu0 0.0
      %3223 = vmatpush1.msra.mxu0 0.0
      %3224 = vmatprep.subr.mxu0 0.0
      %3225 = vmatpush1.msra.mxu0 0.0
      %3226 = vmatprep.subr.mxu0 0.0
      %3227 = vmatpush1.msra.mxu0 0.0
      %3228 = vmatprep.subr.mxu0 0.0
      %3229 = vmatpush1.msra.mxu0 0.0
      %3230 = vmatprep.subr.mxu0 0.0
      %3231 = vmatpush1.msra.mxu0 0.0
      %3232 = vmatprep.subr.mxu0 0.0
      %3233 = vmatpush1.msra.mxu0 0.0
      %3234 = vmatprep.subr.mxu0 0.0
      %3235 = vmatpush1.msra.mxu0 0.0
      %3236 = vmatprep.subr.mxu0 0.0
      %3237 = vmatpush1.msra.mxu0 0.0
      %3238 = vmatprep.subr.mxu0 0.0
      %3239 = vmatpush1.msra.mxu0 0.0
      %3240 = vmatprep.mubr.f32.mxu0 0.0
      %3241 = vmatmul.mubr.f32.gmra.mrb[0].mxu0 %v2964
      %v3242 = vpop.f32.mrb[0].mxu0
      %v3243 = vadd.f32 0.0, %v3242
      %v3244 = vpop.f32.mrb[0].mxu0
      %3245 = vdwg.mxu0
      %3246 = vmatprep.subr.mxu0 0.0
      %3247 = vmatpush1.msra.mxu0 %v2960
      %3248 = vmatprep.subr.mxu0 0.0
      %3249 = vmatpush1.msra.mxu0 0.0
      %3250 = vmatprep.subr.mxu0 0.0
      %3251 = vmatpush1.msra.mxu0 0.0
      %3252 = vmatprep.subr.mxu0 0.0
      %3253 = vmatpush1.msra.mxu0 0.0
      %3254 = vmatprep.subr.mxu0 0.0
      %3255 = vmatpush1.msra.mxu0 0.0
      %3256 = vmatprep.subr.mxu0 0.0
      %3257 = vmatpush1.msra.mxu0 0.0
      %3258 = vmatprep.subr.mxu0 0.0
      %3259 = vmatpush1.msra.mxu0 0.0
      %3260 = vmatprep.subr.mxu0 0.0
      %3261 = vmatpush1.msra.mxu0 0.0
      %3262 = vmatprep.subr.mxu0 0.0
      %3263 = vmatpush1.msra.mxu0 0.0
      %3264 = vmatprep.subr.mxu0 0.0
      %3265 = vmatpush1.msra.mxu0 0.0
      %3266 = vmatprep.subr.mxu0 0.0
      %3267 = vmatpush1.msra.mxu0 0.0
      %3268 = vmatprep.subr.mxu0 0.0
      %3269 = vmatpush1.msra.mxu0 0.0
      %3270 = vmatprep.subr.mxu0 0.0
      %3271 = vmatpush1.msra.mxu0 0.0
      %3272 = vmatprep.subr.mxu0 0.0
      %3273 = vmatpush1.msra.mxu0 0.0
      %3274 = vmatprep.subr.mxu0 0.0
      %3275 = vmatpush1.msra.mxu0 0.0
      %3276 = vmatprep.subr.mxu0 0.0
      %3277 = vmatpush1.msra.mxu0 0.0
      %3278 = vmatprep.subr.mxu0 0.0
      %3279 = vmatpush1.msra.mxu0 0.0
      %3280 = vmatprep.subr.mxu0 0.0
      %3281 = vmatpush1.msra.mxu0 0.0
      %3282 = vmatprep.subr.mxu0 0.0
      %3283 = vmatpush1.msra.mxu0 0.0
      %3284 = vmatprep.subr.mxu0 0.0
      %3285 = vmatpush1.msra.mxu0 0.0
      %3286 = vmatprep.subr.mxu0 0.0
      %3287 = vmatpush1.msra.mxu0 0.0
      %3288 = vmatprep.subr.mxu0 0.0
      %3289 = vmatpush1.msra.mxu0 0.0
      %3290 = vmatprep.subr.mxu0 0.0
      %3291 = vmatpush1.msra.mxu0 0.0
      %3292 = vmatprep.subr.mxu0 0.0
      %3293 = vmatpush1.msra.mxu0 0.0
      %3294 = vmatprep.subr.mxu0 0.0
      %3295 = vmatpush1.msra.mxu0 0.0
      %3296 = vmatprep.subr.mxu0 0.0
      %3297 = vmatpush1.msra.mxu0 0.0
      %3298 = vmatprep.subr.mxu0 0.0
      %3299 = vmatpush1.msra.mxu0 0.0
      %3300 = vmatprep.subr.mxu0 0.0
      %3301 = vmatpush1.msra.mxu0 0.0
      %3302 = vmatprep.subr.mxu0 0.0
      %3303 = vmatpush1.msra.mxu0 0.0
      %3304 = vmatprep.subr.mxu0 0.0
      %3305 = vmatpush1.msra.mxu0 0.0
      %3306 = vmatprep.subr.mxu0 0.0
      %3307 = vmatpush1.msra.mxu0 0.0
      %3308 = vmatprep.subr.mxu0 0.0
      %3309 = vmatpush1.msra.mxu0 0.0
      %3310 = vmatprep.mubr.f32.mxu0 0.0
      %3311 = vmatmul.mubr.f32.gmra.mrb[0].mxu0 %v2964
      %v3312 = vpop.f32.mrb[0].mxu0
      %v3313 = vadd.f32 0.0, %v3312
      %v3314 = vpop.f32.mrb[0].mxu0
      %3315 = vdwg.mxu0
      %v3316 = vmul.f32 %v3033, %v3033
      %v3317 = vsub.f32 %v3173, %v3316
      %v3318 = vmul.f32 %v3103, %v3103
      %v3319 = vsub.f32 %v3243, %v3318
      %v3320 = vmul.f32 %v3033, %v3103
      %v3321 = vsub.f32 %v3313, %v3320
      %v3322 = vmul.f32 %v3321, 2.0
      %v3323 = vadd.f32 %v3322, 0.0009
      %v3324 = vadd.f32 %v3317, %v3319
      %v3325 = vadd.f32 %v3324, 0.0009
      %v3326 = vrcp.pop %v3325
      %v3327 = vmul.f32 %v3323, %v3326
      %v3328 = vld [vmem:[%s14] sm:$0xff]
      %v3329 = vld [vmem:[%s14 + $0x8] sm:$0xff]
      %v3330 = vld [vmem:[%s14 + $0x10] sm:$0xff]
      %v3331 = vld [vmem:[%s14 + $0x18] sm:$0xff]
      %v3332 = vld [vmem:[%s15] sm:$0xff]
      %v3334 = vsel %vm2857, %v3328, 0
      %v3337 = vsel %vm2857, %v3329, 0
      %v3340 = vsel %vm2857, %v3330, 0
      %v3343 = vsel %vm2857, %v3331, 0
      %3345 = vmatprep.subr.mxu0 0.0
      %3346 = vmatpush1.msra.mxu0 %v3327
      %3347 = vmatprep.subr.mxu0 0.0
      %3348 = vmatpush1.msra.mxu0 0.0
      %3349 = vmatprep.subr.mxu0 0.0
      %3350 = vmatpush1.msra.mxu0 0.0
      %3351 = vmatprep.subr.mxu0 0.0
      %3352 = vmatpush1.msra.mxu0 0.0
      %3353 = vmatprep.subr.mxu0 0.0
      %3354 = vmatpush1.msra.mxu0 0.0
      %3355 = vmatprep.subr.mxu0 0.0
      %3356 = vmatpush1.msra.mxu0 0.0
      %3357 = vmatprep.subr.mxu0 0.0
      %3358 = vmatpush1.msra.mxu0 0.0
      %3359 = vmatprep.subr.mxu0 0.0
      %3360 = vmatpush1.msra.mxu0 0.0
      %3361 = vmatprep.subr.mxu0 0.0
      %3362 = vmatpush1.msra.mxu0 0.0
      %3363 = vmatprep.subr.mxu0 0.0
      %3364 = vmatpush1.msra.mxu0 0.0
      %3365 = vmatprep.subr.mxu0 0.0
      %3366 = vmatpush1.msra.mxu0 0.0
      %3367 = vmatprep.subr.mxu0 0.0
      %3368 = vmatpush1.msra.mxu0 0.0
      %3369 = vmatprep.subr.mxu0 0.0
      %3370 = vmatpush1.msra.mxu0 0.0
      %3371 = vmatprep.subr.mxu0 0.0
      %3372 = vmatpush1.msra.mxu0 0.0
      %3373 = vmatprep.subr.mxu0 0.0
      %3374 = vmatpush1.msra.mxu0 0.0
      %3375 = vmatprep.subr.mxu0 0.0
      %3376 = vmatpush1.msra.mxu0 0.0
      %3377 = vmatprep.subr.mxu0 0.0
      %3378 = vmatpush1.msra.mxu0 0.0
      %3379 = vmatprep.subr.mxu0 0.0
      %3380 = vmatpush1.msra.mxu0 0.0
      %3381 = vmatprep.subr.mxu0 0.0
      %3382 = vmatpush1.msra.mxu0 0.0
      %3383 = vmatprep.subr.mxu0 0.0
      %3384 = vmatpush1.msra.mxu0 0.0
      %3385 = vmatprep.subr.mxu0 0.0
      %3386 = vmatpush1.msra.mxu0 0.0
      %3387 = vmatprep.subr.mxu0 0.0
      %3388 = vmatpush1.msra.mxu0 0.0
      %3389 = vmatprep.subr.mxu0 0.0
      %3390 = vmatpush1.msra.mxu0 0.0
      %3391 = vmatprep.subr.mxu0 0.0
      %3392 = vmatpush1.msra.mxu0 0.0
      %3393 = vmatprep.subr.mxu0 0.0
      %3394 = vmatpush1.msra.mxu0 0.0
      %3395 = vmatprep.subr.mxu0 0.0
      %3396 = vmatpush1.msra.mxu0 0.0
      %3397 = vmatprep.subr.mxu0 0.0
      %3398 = vmatpush1.msra.mxu0 0.0
      %3399 = vmatprep.subr.mxu0 0.0
      %3400 = vmatpush1.msra.mxu0 0.0
      %3401 = vmatprep.subr.mxu0 0.0
      %3402 = vmatpush1.msra.mxu0 0.0
      %3403 = vmatprep.subr.mxu0 0.0
      %3404 = vmatpush1.msra.mxu0 0.0
      %3405 = vmatprep.subr.mxu0 0.0
      %3406 = vmatpush1.msra.mxu0 0.0
      %3407 = vmatprep.subr.mxu0 0.0
      %3408 = vmatpush1.msra.mxu0 0.0
      %3409 = vmatprep.mubr.f32.mxu0 0.0
      %3410 = vmatmul.mubr.f32.gmra.mrb[0].mxu0 %v3334
      %v3411 = vpop.f32.mrb[0].mxu0
      %v3412 = vadd.f32 0.0, %v3411
      %v3413 = vpop.f32.mrb[0].mxu0
      %3414 = vmatprep.mubr.f32.mxu0 0.0
      %3415 = vmatmul.mubr.f32.gmra.mrb[0].mxu0 %v3337
      %v3416 = vpop.f32.mrb[0].mxu0
      %v3417 = vadd.f32 0.0, %v3416
      %v3418 = vpop.f32.mrb[0].mxu0
      %3419 = vmatprep.mubr.f32.mxu0 0.0
      %3420 = vmatmul.mubr.f32.gmra.mrb[0].mxu0 %v3340
      %v3421 = vpop.f32.mrb[0].mxu0
      %v3422 = vadd.f32 0.0, %v3421
      %v3423 = vpop.f32.mrb[0].mxu0
      %3424 = vmatprep.mubr.f32.mxu0 0.0
      %3425 = vmatmul.mubr.f32.gmra.mrb[0].mxu0 %v3343
      %v3426 = vpop.f32.mrb[0].mxu0
      %v3427 = vadd.f32 0.0, %v3426
      %v3428 = vpop.f32.mrb[0].mxu0
      %3429 = vdwg.mxu0
      %v3431 = vsel %vm2857, %v3412, 0
      %v3434 = vsel %vm2857, %v3417, 0
      %v3437 = vsel %vm2857, %v3422, 0
      %v3440 = vsel %vm2857, %v3427, 0
      %3442 = vmatprep.subr.mxu0 0.0
      %3443 = vmatpush1.msra.mxu0 %v3332
      %3444 = vmatprep.subr.mxu0 0.0
      %3445 = vmatpush1.msra.mxu0 0.0
      %3446 = vmatprep.subr.mxu0 0.0
      %3447 = vmatpush1.msra.mxu0 0.0
      %3448 = vmatprep.subr.mxu0 0.0
      %3449 = vmatpush1.msra.mxu0 0.0
      %3450 = vmatprep.subr.mxu0 0.0
      %3451 = vmatpush1.msra.mxu0 0.0
      %3452 = vmatprep.subr.mxu0 0.0
      %3453 = vmatpush1.msra.mxu0 0.0
      %3454 = vmatprep.subr.mxu0 0.0
      %3455 = vmatpush1.msra.mxu0 0.0
      %3456 = vmatprep.subr.mxu0 0.0
      %3457 = vmatpush1.msra.mxu0 0.0
      %3458 = vmatprep.subr.mxu0 0.0
      %3459 = vmatpush1.msra.mxu0 0.0
      %3460 = vmatprep.subr.mxu0 0.0
      %3461 = vmatpush1.msra.mxu0 0.0
      %3462 = vmatprep.subr.mxu0 0.0
      %3463 = vmatpush1.msra.mxu0 0.0
      %3464 = vmatprep.subr.mxu0 0.0
      %3465 = vmatpush1.msra.mxu0 0.0
      %3466 = vmatprep.subr.mxu0 0.0
      %3467 = vmatpush1.msra.mxu0 0.0
      %3468 = vmatprep.subr.mxu0 0.0
      %3469 = vmatpush1.msra.mxu0 0.0
      %3470 = vmatprep.subr.mxu0 0.0
      %3471 = vmatpush1.msra.mxu0 0.0
      %3472 = vmatprep.subr.mxu0 0.0
      %3473 = vmatpush1.msra.mxu0 0.0
      %3474 = vmatprep.subr.mxu0 0.0
      %3475 = vmatpush1.msra.mxu0 0.0
      %3476 = vmatprep.subr.mxu0 0.0
      %3477 = vmatpush1.msra.mxu0 0.0
      %3478 = vmatprep.subr.mxu0 0.0
      %3479 = vmatpush1.msra.mxu0 0.0
      %3480 = vmatprep.subr.mxu0 0.0
      %3481 = vmatpush1.msra.mxu0 0.0
      %3482 = vmatprep.subr.mxu0 0.0
      %3483 = vmatpush1.msra.mxu0 0.0
      %3484 = vmatprep.subr.mxu0 0.0
      %3485 = vmatpush1.msra.mxu0 0.0
      %3486 = vmatprep.subr.mxu0 0.0
      %3487 = vmatpush1.msra.mxu0 0.0
      %3488 = vmatprep.subr.mxu0 0.0
      %3489 = vmatpush1.msra.mxu0 0.0
      %3490 = vmatprep.subr.mxu0 0.0
      %3491 = vmatpush1.msra.mxu0 0.0
      %3492 = vmatprep.subr.mxu0 0.0
      %3493 = vmatpush1.msra.mxu0 0.0
      %3494 = vmatprep.subr.mxu0 0.0
      %3495 = vmatpush1.msra.mxu0 0.0
      %3496 = vmatprep.subr.mxu0 0.0
      %3497 = vmatpush1.msra.mxu0 0.0
      %3498 = vmatprep.subr.mxu0 0.0
      %3499 = vmatpush1.msra.mxu0 0.0
      %3500 = vmatprep.subr.mxu0 0.0
      %3501 = vmatpush1.msra.mxu0 0.0
      %3502 = vmatprep.subr.mxu0 0.0
      %3503 = vmatpush1.msra.mxu0 0.0
      %3504 = vmatprep.subr.mxu0 0.0
      %3505 = vmatpush1.msra.mxu0 0.0
      %3506 = vmatprep.mubr.f32.mxu0 0.0
      %3507 = vmatmul.mubr.f32.gmra.mrb[0].mxu0 %v3431
      %v3508 = vpop.f32.mrb[0].mxu0
      %v3509 = vadd.f32 0.0, %v3508
      %v3510 = vpop.f32.mrb[0].mxu0
      %3511 = vmatprep.mubr.f32.mxu0 0.0
      %3512 = vmatmul.mubr.f32.gmra.mrb[0].mxu0 %v3434
      %v3513 = vpop.f32.mrb[0].mxu0
      %v3514 = vadd.f32 0.0, %v3513
      %v3515 = vpop.f32.mrb[0].mxu0
      %3516 = vmatprep.mubr.f32.mxu0 0.0
      %3517 = vmatmul.mubr.f32.gmra.mrb[0].mxu0 %v3437
      %v3518 = vpop.f32.mrb[0].mxu0
      %v3519 = vadd.f32 0.0, %v3518
      %v3520 = vpop.f32.mrb[0].mxu0
      %3521 = vmatprep.mubr.f32.mxu0 0.0
      %3522 = vmatmul.mubr.f32.gmra.mrb[0].mxu0 %v3440
      %v3523 = vpop.f32.mrb[0].mxu0
      %v3524 = vadd.f32 0.0, %v3523
      %v3525 = vpop.f32.mrb[0].mxu0
      %3526 = vdwg.mxu0
      %v3527 = vadd.f32 %v2556, %v3509
      %v3528 = vadd.f32 %v2557, %v3514
      %v3529 = vadd.f32 %v2558, %v3519
      %v3530 = vadd.f32 %v2559, %v3524
      %v3531 = vld [vmem:[%s16] sm:$0xf]
      %v3532 = vld [vmem:[%s17] sm:$0xff]
      %v3534 = vsel %vm2857, %v3531, 0
      %3536 = vmatprep.subr.mxu0 0.0
      %3537 = vmatpush1.msra.mxu0 %v2706
      %3538 = vmatprep.subr.mxu0 0.0
      %3539 = vmatpush1.msra.mxu0 0.0
      %3540 = vmatprep.subr.mxu0 0.0
      %3541 = vmatpush1.msra.mxu0 0.0
      %3542 = vmatprep.subr.mxu0 0.0
      %3543 = vmatpush1.msra.mxu0 0.0
      %3544 = vmatprep.subr.mxu0 0.0
      %3545 = vmatpush1.msra.mxu0 0.0
      %3546 = vmatprep.subr.mxu0 0.0
      %3547 = vmatpush1.msra.mxu0 0.0
      %3548 = vmatprep.subr.mxu0 0.0
      %3549 = vmatpush1.msra.mxu0 0.0
      %3550 = vmatprep.subr.mxu0 0.0
      %3551 = vmatpush1.msra.mxu0 0.0
      %3552 = vmatprep.subr.mxu0 0.0
      %3553 = vmatpush1.msra.mxu0 0.0
      %3554 = vmatprep.subr.mxu0 0.0
      %3555 = vmatpush1.msra.mxu0 0.0
      %3556 = vmatprep.subr.mxu0 0.0
      %3557 = vmatpush1.msra.mxu0 0.0
      %3558 = vmatprep.subr.mxu0 0.0
      %3559 = vmatpush1.msra.mxu0 0.0
      %3560 = vmatprep.subr.mxu0 0.0
      %3561 = vmatpush1.msra.mxu0 0.0
      %3562 = vmatprep.subr.mxu0 0.0
      %3563 = vmatpush1.msra.mxu0 0.0
      %3564 = vmatprep.subr.mxu0 0.0
      %3565 = vmatpush1.msra.mxu0 0.0
      %3566 = vmatprep.subr.mxu0 0.0
      %3567 = vmatpush1.msra.mxu0 0.0
      %3568 = vmatprep.subr.mxu0 0.0
      %3569 = vmatpush1.msra.mxu0 0.0
      %3570 = vmatprep.subr.mxu0 0.0
      %3571 = vmatpush1.msra.mxu0 0.0
      %3572 = vmatprep.subr.mxu0 0.0
      %3573 = vmatpush1.msra.mxu0 0.0
      %3574 = vmatprep.subr.mxu0 0.0
      %3575 = vmatpush1.msra.mxu0 0.0
      %3576 = vmatprep.subr.mxu0 0.0
      %3577 = vmatpush1.msra.mxu0 0.0
      %3578 = vmatprep.subr.mxu0 0.0
      %3579 = vmatpush1.msra.mxu0 0.0
      %3580 = vmatprep.subr.mxu0 0.0
      %3581 = vmatpush1.msra.mxu0 0.0
      %3582 = vmatprep.subr.mxu0 0.0
      %3583 = vmatpush1.msra.mxu0 0.0
      %3584 = vmatprep.subr.mxu0 0.0
      %3585 = vmatpush1.msra.mxu0 0.0
      %3586 = vmatprep.subr.mxu0 0.0
      %3587 = vmatpush1.msra.mxu0 0.0
      %3588 = vmatprep.subr.mxu0 0.0
      %3589 = vmatpush1.msra.mxu0 0.0
      %3590 = vmatprep.subr.mxu0 0.0
      %3591 = vmatpush1.msra.mxu0 0.0
      %3592 = vmatprep.subr.mxu0 0.0
      %3593 = vmatpush1.msra.mxu0 0.0
      %3594 = vmatprep.subr.mxu0 0.0
      %3595 = vmatpush1.msra.mxu0 0.0
      %3596 = vmatprep.subr.mxu0 0.0
      %3597 = vmatpush1.msra.mxu0 0.0
      %3598 = vmatprep.subr.mxu0 0.0
      %3599 = vmatpush1.msra.mxu0 0.0
      %3600 = vmatprep.mubr.f32.mxu0 0.0
      %3601 = vmatmul.mubr.f32.gmra.mrb[0].mxu0 %v3534
      %v3602 = vpop.f32.mrb[0].mxu0
      %v3603 = vadd.f32 0.0, %v3602
      %v3604 = vpop.f32.mrb[0].mxu0
      %3605 = vdwg.mxu0
      %v3607 = vsel %vm2857, %v3603, 0
      %3609 = vmatprep.subr.mxu0 0.0
      %3610 = vmatpush1.msra.mxu0 %v3532
      %3611 = vmatprep.subr.mxu0 0.0
      %3612 = vmatpush1.msra.mxu0 0.0
      %3613 = vmatprep.subr.mxu0 0.0
      %3614 = vmatpush1.msra.mxu0 0.0
      %3615 = vmatprep.subr.mxu0 0.0
      %3616 = vmatpush1.msra.mxu0 0.0
      %3617 = vmatprep.subr.mxu0 0.0
      %3618 = vmatpush1.msra.mxu0 0.0
      %3619 = vmatprep.subr.mxu0 0.0
      %3620 = vmatpush1.msra.mxu0 0.0
      %3621 = vmatprep.subr.mxu0 0.0
      %3622 = vmatpush1.msra.mxu0 0.0
      %3623 = vmatprep.subr.mxu0 0.0
      %3624 = vmatpush1.msra.mxu0 0.0
      %3625 = vmatprep.subr.mxu0 0.0
      %3626 = vmatpush1.msra.mxu0 0.0
      %3627 = vmatprep.subr.mxu0 0.0
      %3628 = vmatpush1.msra.mxu0 0.0
      %3629 = vmatprep.subr.mxu0 0.0
      %3630 = vmatpush1.msra.mxu0 0.0
      %3631 = vmatprep.subr.mxu0 0.0
      %3632 = vmatpush1.msra.mxu0 0.0
      %3633 = vmatprep.subr.mxu0 0.0
      %3634 = vmatpush1.msra.mxu0 0.0
      %3635 = vmatprep.subr.mxu0 0.0
      %3636 = vmatpush1.msra.mxu0 0.0
      %3637 = vmatprep.subr.mxu0 0.0
      %3638 = vmatpush1.msra.mxu0 0.0
      %3639 = vmatprep.subr.mxu0 0.0
      %3640 = vmatpush1.msra.mxu0 0.0
      %3641 = vmatprep.subr.mxu0 0.0
      %3642 = vmatpush1.msra.mxu0 0.0
      %3643 = vmatprep.subr.mxu0 0.0
      %3644 = vmatpush1.msra.mxu0 0.0
      %3645 = vmatprep.subr.mxu0 0.0
      %3646 = vmatpush1.msra.mxu0 0.0
      %3647 = vmatprep.subr.mxu0 0.0
      %3648 = vmatpush1.msra.mxu0 0.0
      %3649 = vmatprep.subr.mxu0 0.0
      %3650 = vmatpush1.msra.mxu0 0.0
      %3651 = vmatprep.subr.mxu0 0.0
      %3652 = vmatpush1.msra.mxu0 0.0
      %3653 = vmatprep.subr.mxu0 0.0
      %3654 = vmatpush1.msra.mxu0 0.0
      %3655 = vmatprep.subr.mxu0 0.0
      %3656 = vmatpush1.msra.mxu0 0.0
      %3657 = vmatprep.subr.mxu0 0.0
      %3658 = vmatpush1.msra.mxu0 0.0
      %3659 = vmatprep.subr.mxu0 0.0
      %3660 = vmatpush1.msra.mxu0 0.0
      %3661 = vmatprep.subr.mxu0 0.0
      %3662 = vmatpush1.msra.mxu0 0.0
      %3663 = vmatprep.subr.mxu0 0.0
      %3664 = vmatpush1.msra.mxu0 0.0
      %3665 = vmatprep.subr.mxu0 0.0
      %3666 = vmatpush1.msra.mxu0 0.0
      %3667 = vmatprep.subr.mxu0 0.0
      %3668 = vmatpush1.msra.mxu0 0.0
      %3669 = vmatprep.subr.mxu0 0.0
      %3670 = vmatpush1.msra.mxu0 0.0
      %3671 = vmatprep.subr.mxu0 0.0
      %3672 = vmatpush1.msra.mxu0 0.0
      %3673 = vmatprep.mubr.f32.mxu0 0.0
      %3674 = vmatmul.mubr.f32.gmra.mrb[0].mxu0 %v3607
      %v3675 = vpop.f32.mrb[0].mxu0
      %v3676 = vadd.f32 0.0, %v3675
      %v3677 = vpop.f32.mrb[0].mxu0
      %3678 = vdwg.mxu0
      %3679 = vmatprep.subr.mxu0 0.0
      %3680 = vmatpush1.msra.mxu0 %v2849
      %3681 = vmatprep.subr.mxu0 0.0
      %3682 = vmatpush1.msra.mxu0 0.0
      %3683 = vmatprep.subr.mxu0 0.0
      %3684 = vmatpush1.msra.mxu0 0.0
      %3685 = vmatprep.subr.mxu0 0.0
      %3686 = vmatpush1.msra.mxu0 0.0
      %3687 = vmatprep.subr.mxu0 0.0
      %3688 = vmatpush1.msra.mxu0 0.0
      %3689 = vmatprep.subr.mxu0 0.0
      %3690 = vmatpush1.msra.mxu0 0.0
      %3691 = vmatprep.subr.mxu0 0.0
      %3692 = vmatpush1.msra.mxu0 0.0
      %3693 = vmatprep.subr.mxu0 0.0
      %3694 = vmatpush1.msra.mxu0 0.0
      %3695 = vmatprep.subr.mxu0 0.0
      %3696 = vmatpush1.msra.mxu0 0.0
      %3697 = vmatprep.subr.mxu0 0.0
      %3698 = vmatpush1.msra.mxu0 0.0
      %3699 = vmatprep.subr.mxu0 0.0
      %3700 = vmatpush1.msra.mxu0 0.0
      %3701 = vmatprep.subr.mxu0 0.0
      %3702 = vmatpush1.msra.mxu0 0.0
      %3703 = vmatprep.subr.mxu0 0.0
      %3704 = vmatpush1.msra.mxu0 0.0
      %3705 = vmatprep.subr.mxu0 0.0
      %3706 = vmatpush1.msra.mxu0 0.0
      %3707 = vmatprep.subr.mxu0 0.0
      %3708 = vmatpush1.msra.mxu0 0.0
      %3709 = vmatprep.subr.mxu0 0.0
      %3710 = vmatpush1.msra.mxu0 0.0
      %3711 = vmatprep.subr.mxu0 0.0
      %3712 = vmatpush1.msra.mxu0 0.0
      %3713 = vmatprep.subr.mxu0 0.0
      %3714 = vmatpush1.msra.mxu0 0.0
      %3715 = vmatprep.subr.mxu0 0.0
      %3716 = vmatpush1.msra.mxu0 0.0
      %3717 = vmatprep.subr.mxu0 0.0
      %3718 = vmatpush1.msra.mxu0 0.0
      %3719 = vmatprep.subr.mxu0 0.0
      %3720 = vmatpush1.msra.mxu0 0.0
      %3721 = vmatprep.subr.mxu0 0.0
      %3722 = vmatpush1.msra.mxu0 0.0
      %3723 = vmatprep.subr.mxu0 0.0
      %3724 = vmatpush1.msra.mxu0 0.0
      %3725 = vmatprep.subr.mxu0 0.0
      %3726 = vmatpush1.msra.mxu0 0.0
      %3727 = vmatprep.subr.mxu0 0.0
      %3728 = vmatpush1.msra.mxu0 0.0
      %3729 = vmatprep.subr.mxu0 0.0
      %3730 = vmatpush1.msra.mxu0 0.0
      %3731 = vmatprep.subr.mxu0 0.0
      %3732 = vmatpush1.msra.mxu0 0.0
      %3733 = vmatprep.subr.mxu0 0.0
      %3734 = vmatpush1.msra.mxu0 0.0
      %3735 = vmatprep.subr.mxu0 0.0
      %3736 = vmatpush1.msra.mxu0 0.0
      %3737 = vmatprep.subr.mxu0 0.0
      %3738 = vmatpush1.msra.mxu0 0.0
      %3739 = vmatprep.subr.mxu0 0.0
      %3740 = vmatpush1.msra.mxu0 0.0
      %3741 = vmatprep.subr.mxu0 0.0
      %3742 = vmatpush1.msra.mxu0 0.0
      %3743 = vmatprep.mubr.f32.mxu0 0.0
      %3744 = vmatmul.mubr.f32.gmra.mrb[0].mxu0 %v3534
      %v3745 = vpop.f32.mrb[0].mxu0
      %v3746 = vadd.f32 0.0, %v3745
      %v3747 = vpop.f32.mrb[0].mxu0
      %3748 = vdwg.mxu0
      %v3750 = vsel %vm2857, %v3746, 0
      %3752 = vmatprep.subr.mxu0 0.0
      %3753 = vmatpush1.msra.mxu0 %v3532
      %3754 = vmatprep.subr.mxu0 0.0
      %3755 = vmatpush1.msra.mxu0 0.0
      %3756 = vmatprep.subr.mxu0 0.0
      %3757 = vmatpush1.msra.mxu0 0.0
      %3758 = vmatprep.subr.mxu0 0.0
      %3759 = vmatpush1.msra.mxu0 0.0
      %3760 = vmatprep.subr.mxu0 0.0
      %3761 = vmatpush1.msra.mxu0 0.0
      %3762 = vmatprep.subr.mxu0 0.0
      %3763 = vmatpush1.msra.mxu0 0.0
      %3764 = vmatprep.subr.mxu0 0.0
      %3765 = vmatpush1.msra.mxu0 0.0
      %3766 = vmatprep.subr.mxu0 0.0
      %3767 = vmatpush1.msra.mxu0 0.0
      %3768 = vmatprep.subr.mxu0 0.0
      %3769 = vmatpush1.msra.mxu0 0.0
      %3770 = vmatprep.subr.mxu0 0.0
      %3771 = vmatpush1.msra.mxu0 0.0
      %3772 = vmatprep.subr.mxu0 0.0
      %3773 = vmatpush1.msra.mxu0 0.0
      %3774 = vmatprep.subr.mxu0 0.0
      %3775 = vmatpush1.msra.mxu0 0.0
      %3776 = vmatprep.subr.mxu0 0.0
      %3777 = vmatpush1.msra.mxu0 0.0
      %3778 = vmatprep.subr.mxu0 0.0
      %3779 = vmatpush1.msra.mxu0 0.0
      %3780 = vmatprep.subr.mxu0 0.0
      %3781 = vmatpush1.msra.mxu0 0.0
      %3782 = vmatprep.subr.mxu0 0.0
      %3783 = vmatpush1.msra.mxu0 0.0
      %3784 = vmatprep.subr.mxu0 0.0
      %3785 = vmatpush1.msra.mxu0 0.0
      %3786 = vmatprep.subr.mxu0 0.0
      %3787 = vmatpush1.msra.mxu0 0.0
      %3788 = vmatprep.subr.mxu0 0.0
      %3789 = vmatpush1.msra.mxu0 0.0
      %3790 = vmatprep.subr.mxu0 0.0
      %3791 = vmatpush1.msra.mxu0 0.0
      %3792 = vmatprep.subr.mxu0 0.0
      %3793 = vmatpush1.msra.mxu0 0.0
      %3794 = vmatprep.subr.mxu0 0.0
      %3795 = vmatpush1.msra.mxu0 0.0
      %3796 = vmatprep.subr.mxu0 0.0
      %3797 = vmatpush1.msra.mxu0 0.0
      %3798 = vmatprep.subr.mxu0 0.0
      %3799 = vmatpush1.msra.mxu0 0.0
      %3800 = vmatprep.subr.mxu0 0.0
      %3801 = vmatpush1.msra.mxu0 0.0
      %3802 = vmatprep.subr.mxu0 0.0
      %3803 = vmatpush1.msra.mxu0 0.0
      %3804 = vmatprep.subr.mxu0 0.0
      %3805 = vmatpush1.msra.mxu0 0.0
      %3806 = vmatprep.subr.mxu0 0.0
      %3807 = vmatpush1.msra.mxu0 0.0
      %3808 = vmatprep.subr.mxu0 0.0
      %3809 = vmatpush1.msra.mxu0 0.0
      %3810 = vmatprep.subr.mxu0 0.0
      %3811 = vmatpush1.msra.mxu0 0.0
      %3812 = vmatprep.subr.mxu0 0.0
      %3813 = vmatpush1.msra.mxu0 0.0
      %3814 = vmatprep.subr.mxu0 0.0
      %3815 = vmatpush1.msra.mxu0 0.0
      %3816 = vmatprep.mubr.f32.mxu0 0.0
      %3817 = vmatmul.mubr.f32.gmra.mrb[0].mxu0 %v3750
      %v3818 = vpop.f32.mrb[0].mxu0
      %v3819 = vadd.f32 0.0, %v3818
      %v3820 = vpop.f32.mrb[0].mxu0
      %3821 = vdwg.mxu0
      %v3822 = vld [vmem:[%s18] sm:$0xf]
      %v3823 = vld [vmem:[%s19] sm:$0xf]
      %v3824 = vmul.f32 %v3676, %v3676
      %v3825 = vmul.f32 %v3819, %v3819
      %v3826 = vmul.f32 %v3676, %v3819
      %vm3827 = vcmask 31744
      %v3829 = vsel %vm3827, %v3676, 0
      %vm3831 = vcmask 1043456
      %v3833 = vsel %vm3831, %v3823, 0
      %3835 = vmatprep.subr.mxu0 0.0
      %3836 = vmatpush1.msra.mxu0 %v3833
      %3837 = vmatprep.subr.mxu0 0.0
      %3838 = vmatpush1.msra.mxu0 0.0
      %3839 = vmatprep.subr.mxu0 0.0
      %3840 = vmatpush1.msra.mxu0 0.0
      %3841 = vmatprep.subr.mxu0 0.0
      %3842 = vmatpush1.msra.mxu0 0.0
      %3843 = vmatprep.subr.mxu0 0.0
      %3844 = vmatpush1.msra.mxu0 0.0
      %3845 = vmatprep.subr.mxu0 0.0
      %3846 = vmatpush1.msra.mxu0 0.0
      %3847 = vmatprep.subr.mxu0 0.0
      %3848 = vmatpush1.msra.mxu0 0.0
      %3849 = vmatprep.subr.mxu0 0.0
      %3850 = vmatpush1.msra.mxu0 0.0
      %3851 = vmatprep.subr.mxu0 0.0
      %3852 = vmatpush1.msra.mxu0 0.0
      %3853 = vmatprep.subr.mxu0 0.0
      %3854 = vmatpush1.msra.mxu0 0.0
      %3855 = vmatprep.subr.mxu0 0.0
      %3856 = vmatpush1.msra.mxu0 0.0
      %3857 = vmatprep.subr.mxu0 0.0
      %3858 = vmatpush1.msra.mxu0 0.0
      %3859 = vmatprep.subr.mxu0 0.0
      %3860 = vmatpush1.msra.mxu0 0.0
      %3861 = vmatprep.subr.mxu0 0.0
      %3862 = vmatpush1.msra.mxu0 0.0
      %3863 = vmatprep.subr.mxu0 0.0
      %3864 = vmatpush1.msra.mxu0 0.0
      %3865 = vmatprep.subr.mxu0 0.0
      %3866 = vmatpush1.msra.mxu0 0.0
      %3867 = vmatprep.subr.mxu0 0.0
      %3868 = vmatpush1.msra.mxu0 0.0
      %3869 = vmatprep.subr.mxu0 0.0
      %3870 = vmatpush1.msra.mxu0 0.0
      %3871 = vmatprep.subr.mxu0 0.0
      %3872 = vmatpush1.msra.mxu0 0.0
      %3873 = vmatprep.subr.mxu0 0.0
      %3874 = vmatpush1.msra.mxu0 0.0
      %3875 = vmatprep.subr.mxu0 0.0
      %3876 = vmatpush1.msra.mxu0 0.0
      %3877 = vmatprep.subr.mxu0 0.0
      %3878 = vmatpush1.msra.mxu0 0.0
      %3879 = vmatprep.subr.mxu0 0.0
      %3880 = vmatpush1.msra.mxu0 0.0
      %3881 = vmatprep.subr.mxu0 0.0
      %3882 = vmatpush1.msra.mxu0 0.0
      %3883 = vmatprep.subr.mxu0 0.0
      %3884 = vmatpush1.msra.mxu0 0.0
      %3885 = vmatprep.subr.mxu0 0.0
      %3886 = vmatpush1.msra.mxu0 0.0
      %3887 = vmatprep.subr.mxu0 0.0
      %3888 = vmatpush1.msra.mxu0 0.0
      %3889 = vmatprep.subr.mxu0 0.0
      %3890 = vmatpush1.msra.mxu0 0.0
      %3891 = vmatprep.subr.mxu0 0.0
      %3892 = vmatpush1.msra.mxu0 0.0
      %3893 = vmatprep.subr.mxu0 0.0
      %3894 = vmatpush1.msra.mxu0 0.0
      %3895 = vmatprep.subr.mxu0 0.0
      %3896 = vmatpush1.msra.mxu0 0.0
      %3897 = vmatprep.subr.mxu0 0.0
      %3898 = vmatpush1.msra.mxu0 0.0
      %3899 = vmatprep.mubr.f32.mxu0 0.0
      %3900 = vmatmul.mubr.f32.gmra.mrb[0].mxu0 %v3829
      %v3901 = vpop.f32.mrb[0].mxu0
      %v3902 = vadd.f32 0.0, %v3901
      %v3903 = vpop.f32.mrb[0].mxu0
      %3904 = vdwg.mxu0
      %v3906 = vsel %vm3827, %v3822, 0
      %v3909 = vsel %vm3831, %v3902, 0
      %3911 = vmatprep.subr.mxu0 0.0
      %3912 = vmatpush1.msra.mxu0 %v3909
      %3913 = vmatprep.subr.mxu0 0.0
      %3914 = vmatpush1.msra.mxu0 0.0
      %3915 = vmatprep.subr.mxu0 0.0
      %3916 = vmatpush1.msra.mxu0 0.0
      %3917 = vmatprep.subr.mxu0 0.0
      %3918 = vmatpush1.msra.mxu0 0.0
      %3919 = vmatprep.subr.mxu0 0.0
      %3920 = vmatpush1.msra.mxu0 0.0
      %3921 = vmatprep.subr.mxu0 0.0
      %3922 = vmatpush1.msra.mxu0 0.0
      %3923 = vmatprep.subr.mxu0 0.0
      %3924 = vmatpush1.msra.mxu0 0.0
      %3925 = vmatprep.subr.mxu0 0.0
      %3926 = vmatpush1.msra.mxu0 0.0
      %3927 = vmatprep.subr.mxu0 0.0
      %3928 = vmatpush1.msra.mxu0 0.0
      %3929 = vmatprep.subr.mxu0 0.0
      %3930 = vmatpush1.msra.mxu0 0.0
      %3931 = vmatprep.subr.mxu0 0.0
      %3932 = vmatpush1.msra.mxu0 0.0
      %3933 = vmatprep.subr.mxu0 0.0
      %3934 = vmatpush1.msra.mxu0 0.0
      %3935 = vmatprep.subr.mxu0 0.0
      %3936 = vmatpush1.msra.mxu0 0.0
      %3937 = vmatprep.subr.mxu0 0.0
      %3938 = vmatpush1.msra.mxu0 0.0
      %3939 = vmatprep.subr.mxu0 0.0
      %3940 = vmatpush1.msra.mxu0 0.0
      %3941 = vmatprep.subr.mxu0 0.0
      %3942 = vmatpush1.msra.mxu0 0.0
      %3943 = vmatprep.subr.mxu0 0.0
      %3944 = vmatpush1.msra.mxu0 0.0
      %3945 = vmatprep.subr.mxu0 0.0
      %3946 = vmatpush1.msra.mxu0 0.0
      %3947 = vmatprep.subr.mxu0 0.0
      %3948 = vmatpush1.msra.mxu0 0.0
      %3949 = vmatprep.subr.mxu0 0.0
      %3950 = vmatpush1.msra.mxu0 0.0
      %3951 = vmatprep.subr.mxu0 0.0
      %3952 = vmatpush1.msra.mxu0 0.0
      %3953 = vmatprep.subr.mxu0 0.0
      %3954 = vmatpush1.msra.mxu0 0.0
      %3955 = vmatprep.subr.mxu0 0.0
      %3956 = vmatpush1.msra.mxu0 0.0
      %3957 = vmatprep.subr.mxu0 0.0
      %3958 = vmatpush1.msra.mxu0 0.0
      %3959 = vmatprep.subr.mxu0 0.0
      %3960 = vmatpush1.msra.mxu0 0.0
      %3961 = vmatprep.subr.mxu0 0.0
      %3962 = vmatpush1.msra.mxu0 0.0
      %3963 = vmatprep.subr.mxu0 0.0
      %3964 = vmatpush1.msra.mxu0 0.0
      %3965 = vmatprep.subr.mxu0 0.0
      %3966 = vmatpush1.msra.mxu0 0.0
      %3967 = vmatprep.subr.mxu0 0.0
      %3968 = vmatpush1.msra.mxu0 0.0
      %3969 = vmatprep.subr.mxu0 0.0
      %3970 = vmatpush1.msra.mxu0 0.0
      %3971 = vmatprep.subr.mxu0 0.0
      %3972 = vmatpush1.msra.mxu0 0.0
      %3973 = vmatprep.subr.mxu0 0.0
      %3974 = vmatpush1.msra.mxu0 0.0
      %3975 = vmatprep.mubr.f32.mxu0 0.0
      %3976 = vmatmul.mubr.f32.gmra.mrb[0].mxu0 %v3906
      %v3977 = vpop.f32.mrb[0].mxu0
      %v3978 = vadd.f32 0.0, %v3977
      %v3979 = vpop.f32.mrb[0].mxu0
      %3980 = vdwg.mxu0
      %v3982 = vsel %vm3827, %v3819, 0
      %3984 = vmatprep.subr.mxu0 0.0
      %3985 = vmatpush1.msra.mxu0 %v3833
      %3986 = vmatprep.subr.mxu0 0.0
      %3987 = vmatpush1.msra.mxu0 0.0
      %3988 = vmatprep.subr.mxu0 0.0
      %3989 = vmatpush1.msra.mxu0 0.0
      %3990 = vmatprep.subr.mxu0 0.0
      %3991 = vmatpush1.msra.mxu0 0.0
      %3992 = vmatprep.subr.mxu0 0.0
      %3993 = vmatpush1.msra.mxu0 0.0
      %3994 = vmatprep.subr.mxu0 0.0
      %3995 = vmatpush1.msra.mxu0 0.0
      %3996 = vmatprep.subr.mxu0 0.0
      %3997 = vmatpush1.msra.mxu0 0.0
      %3998 = vmatprep.subr.mxu0 0.0
      %3999 = vmatpush1.msra.mxu0 0.0
      %4000 = vmatprep.subr.mxu0 0.0
      %4001 = vmatpush1.msra.mxu0 0.0
      %4002 = vmatprep.subr.mxu0 0.0
      %4003 = vmatpush1.msra.mxu0 0.0
      %4004 = vmatprep.subr.mxu0 0.0
      %4005 = vmatpush1.msra.mxu0 0.0
      %4006 = vmatprep.subr.mxu0 0.0
      %4007 = vmatpush1.msra.mxu0 0.0
      %4008 = vmatprep.subr.mxu0 0.0
      %4009 = vmatpush1.msra.mxu0 0.0
      %4010 = vmatprep.subr.mxu0 0.0
      %4011 = vmatpush1.msra.mxu0 0.0
      %4012 = vmatprep.subr.mxu0 0.0
      %4013 = vmatpush1.msra.mxu0 0.0
      %4014 = vmatprep.subr.mxu0 0.0
      %4015 = vmatpush1.msra.mxu0 0.0
      %4016 = vmatprep.subr.mxu0 0.0
      %4017 = vmatpush1.msra.mxu0 0.0
      %4018 = vmatprep.subr.mxu0 0.0
      %4019 = vmatpush1.msra.mxu0 0.0
      %4020 = vmatprep.subr.mxu0 0.0
      %4021 = vmatpush1.msra.mxu0 0.0
      %4022 = vmatprep.subr.mxu0 0.0
      %4023 = vmatpush1.msra.mxu0 0.0
      %4024 = vmatprep.subr.mxu0 0.0
      %4025 = vmatpush1.msra.mxu0 0.0
      %4026 = vmatprep.subr.mxu0 0.0
      %4027 = vmatpush1.msra.mxu0 0.0
      %4028 = vmatprep.subr.mxu0 0.0
      %4029 = vmatpush1.msra.mxu0 0.0
      %4030 = vmatprep.subr.mxu0 0.0
      %4031 = vmatpush1.msra.mxu0 0.0
      %4032 = vmatprep.subr.mxu0 0.0
      %4033 = vmatpush1.msra.mxu0 0.0
      %4034 = vmatprep.subr.mxu0 0.0
      %4035 = vmatpush1.msra.mxu0 0.0
      %4036 = vmatprep.subr.mxu0 0.0
      %4037 = vmatpush1.msra.mxu0 0.0
      %4038 = vmatprep.subr.mxu0 0.0
      %4039 = vmatpush1.msra.mxu0 0.0
      %4040 = vmatprep.subr.mxu0 0.0
      %4041 = vmatpush1.msra.mxu0 0.0
      %4042 = vmatprep.subr.mxu0 0.0
      %4043 = vmatpush1.msra.mxu0 0.0
      %4044 = vmatprep.subr.mxu0 0.0
      %4045 = vmatpush1.msra.mxu0 0.0
      %4046 = vmatprep.subr.mxu0 0.0
      %4047 = vmatpush1.msra.mxu0 0.0
      %4048 = vmatprep.mubr.f32.mxu0 0.0
      %4049 = vmatmul.mubr.f32.gmra.mrb[0].mxu0 %v3982
      %v4050 = vpop.f32.mrb[0].mxu0
      %v4051 = vadd.f32 0.0, %v4050
      %v4052 = vpop.f32.mrb[0].mxu0
      %4053 = vdwg.mxu0
      %v4055 = vsel %vm3831, %v4051, 0
      %4057 = vmatprep.subr.mxu0 0.0
      %4058 = vmatpush1.msra.mxu0 %v4055
      %4059 = vmatprep.subr.mxu0 0.0
      %4060 = vmatpush1.msra.mxu0 0.0
      %4061 = vmatprep.subr.mxu0 0.0
      %4062 = vmatpush1.msra.mxu0 0.0
      %4063 = vmatprep.subr.mxu0 0.0
      %4064 = vmatpush1.msra.mxu0 0.0
      %4065 = vmatprep.subr.mxu0 0.0
      %4066 = vmatpush1.msra.mxu0 0.0
      %4067 = vmatprep.subr.mxu0 0.0
      %4068 = vmatpush1.msra.mxu0 0.0
      %4069 = vmatprep.subr.mxu0 0.0
      %4070 = vmatpush1.msra.mxu0 0.0
      %4071 = vmatprep.subr.mxu0 0.0
      %4072 = vmatpush1.msra.mxu0 0.0
      %4073 = vmatprep.subr.mxu0 0.0
      %4074 = vmatpush1.msra.mxu0 0.0
      %4075 = vmatprep.subr.mxu0 0.0
      %4076 = vmatpush1.msra.mxu0 0.0
      %4077 = vmatprep.subr.mxu0 0.0
      %4078 = vmatpush1.msra.mxu0 0.0
      %4079 = vmatprep.subr.mxu0 0.0
      %4080 = vmatpush1.msra.mxu0 0.0
      %4081 = vmatprep.subr.mxu0 0.0
      %4082 = vmatpush1.msra.mxu0 0.0
      %4083 = vmatprep.subr.mxu0 0.0
      %4084 = vmatpush1.msra.mxu0 0.0
      %4085 = vmatprep.subr.mxu0 0.0
      %4086 = vmatpush1.msra.mxu0 0.0
      %4087 = vmatprep.subr.mxu0 0.0
      %4088 = vmatpush1.msra.mxu0 0.0
      %4089 = vmatprep.subr.mxu0 0.0
      %4090 = vmatpush1.msra.mxu0 0.0
      %4091 = vmatprep.subr.mxu0 0.0
      %4092 = vmatpush1.msra.mxu0 0.0
      %4093 = vmatprep.subr.mxu0 0.0
      %4094 = vmatpush1.msra.mxu0 0.0
      %4095 = vmatprep.subr.mxu0 0.0
      %4096 = vmatpush1.msra.mxu0 0.0
      %4097 = vmatprep.subr.mxu0 0.0
      %4098 = vmatpush1.msra.mxu0 0.0
      %4099 = vmatprep.subr.mxu0 0.0
      %4100 = vmatpush1.msra.mxu0 0.0
      %4101 = vmatprep.subr.mxu0 0.0
      %4102 = vmatpush1.msra.mxu0 0.0
      %4103 = vmatprep.subr.mxu0 0.0
      %4104 = vmatpush1.msra.mxu0 0.0
      %4105 = vmatprep.subr.mxu0 0.0
      %4106 = vmatpush1.msra.mxu0 0.0
      %4107 = vmatprep.subr.mxu0 0.0
      %4108 = vmatpush1.msra.mxu0 0.0
      %4109 = vmatprep.subr.mxu0 0.0
      %4110 = vmatpush1.msra.mxu0 0.0
      %4111 = vmatprep.subr.mxu0 0.0
      %4112 = vmatpush1.msra.mxu0 0.0
      %4113 = vmatprep.subr.mxu0 0.0
      %4114 = vmatpush1.msra.mxu0 0.0
      %4115 = vmatprep.subr.mxu0 0.0
      %4116 = vmatpush1.msra.mxu0 0.0
      %4117 = vmatprep.subr.mxu0 0.0
      %4118 = vmatpush1.msra.mxu0 0.0
      %4119 = vmatprep.subr.mxu0 0.0
      %4120 = vmatpush1.msra.mxu0 0.0
      %4121 = vmatprep.mubr.f32.mxu0 0.0
      %4122 = vmatmul.mubr.f32.gmra.mrb[0].mxu0 %v3906
      %v4123 = vpop.f32.mrb[0].mxu0
      %v4124 = vadd.f32 0.0, %v4123
      %v4125 = vpop.f32.mrb[0].mxu0
      %4126 = vdwg.mxu0
      %v4128 = vsel %vm3827, %v3824, 0
      %4130 = vmatprep.subr.mxu0 0.0
      %4131 = vmatpush1.msra.mxu0 %v3833
      %4132 = vmatprep.subr.mxu0 0.0
      %4133 = vmatpush1.msra.mxu0 0.0
      %4134 = vmatprep.subr.mxu0 0.0
      %4135 = vmatpush1.msra.mxu0 0.0
      %4136 = vmatprep.subr.mxu0 0.0
      %4137 = vmatpush1.msra.mxu0 0.0
      %4138 = vmatprep.subr.mxu0 0.0
      %4139 = vmatpush1.msra.mxu0 0.0
      %4140 = vmatprep.subr.mxu0 0.0
      %4141 = vmatpush1.msra.mxu0 0.0
      %4142 = vmatprep.subr.mxu0 0.0
      %4143 = vmatpush1.msra.mxu0 0.0
      %4144 = vmatprep.subr.mxu0 0.0
      %4145 = vmatpush1.msra.mxu0 0.0
      %4146 = vmatprep.subr.mxu0 0.0
      %4147 = vmatpush1.msra.mxu0 0.0
      %4148 = vmatprep.subr.mxu0 0.0
      %4149 = vmatpush1.msra.mxu0 0.0
      %4150 = vmatprep.subr.mxu0 0.0
      %4151 = vmatpush1.msra.mxu0 0.0
      %4152 = vmatprep.subr.mxu0 0.0
      %4153 = vmatpush1.msra.mxu0 0.0
      %4154 = vmatprep.subr.mxu0 0.0
      %4155 = vmatpush1.msra.mxu0 0.0
      %4156 = vmatprep.subr.mxu0 0.0
      %4157 = vmatpush1.msra.mxu0 0.0
      %4158 = vmatprep.subr.mxu0 0.0
      %4159 = vmatpush1.msra.mxu0 0.0
      %4160 = vmatprep.subr.mxu0 0.0
      %4161 = vmatpush1.msra.mxu0 0.0
      %4162 = vmatprep.subr.mxu0 0.0
      %4163 = vmatpush1.msra.mxu0 0.0
      %4164 = vmatprep.subr.mxu0 0.0
      %4165 = vmatpush1.msra.mxu0 0.0
      %4166 = vmatprep.subr.mxu0 0.0
      %4167 = vmatpush1.msra.mxu0 0.0
      %4168 = vmatprep.subr.mxu0 0.0
      %4169 = vmatpush1.msra.mxu0 0.0
      %4170 = vmatprep.subr.mxu0 0.0
      %4171 = vmatpush1.msra.mxu0 0.0
      %4172 = vmatprep.subr.mxu0 0.0
      %4173 = vmatpush1.msra.mxu0 0.0
      %4174 = vmatprep.subr.mxu0 0.0
      %4175 = vmatpush1.msra.mxu0 0.0
      %4176 = vmatprep.subr.mxu0 0.0
      %4177 = vmatpush1.msra.mxu0 0.0
      %4178 = vmatprep.subr.mxu0 0.0
      %4179 = vmatpush1.msra.mxu0 0.0
      %4180 = vmatprep.subr.mxu0 0.0
      %4181 = vmatpush1.msra.mxu0 0.0
      %4182 = vmatprep.subr.mxu0 0.0
      %4183 = vmatpush1.msra.mxu0 0.0
      %4184 = vmatprep.subr.mxu0 0.0
      %4185 = vmatpush1.msra.mxu0 0.0
      %4186 = vmatprep.subr.mxu0 0.0
      %4187 = vmatpush1.msra.mxu0 0.0
      %4188 = vmatprep.subr.mxu0 0.0
      %4189 = vmatpush1.msra.mxu0 0.0
      %4190 = vmatprep.subr.mxu0 0.0
      %4191 = vmatpush1.msra.mxu0 0.0
      %4192 = vmatprep.subr.mxu0 0.0
      %4193 = vmatpush1.msra.mxu0 0.0
      %4194 = vmatprep.mubr.f32.mxu0 0.0
      %4195 = vmatmul.mubr.f32.gmra.mrb[0].mxu0 %v4128
      %v4196 = vpop.f32.mrb[0].mxu0
      %v4197 = vadd.f32 0.0, %v4196
      %v4198 = vpop.f32.mrb[0].mxu0
      %4199 = vdwg.mxu0
      %v4201 = vsel %vm3831, %v4197, 0
      %4203 = vmatprep.subr.mxu0 0.0
      %4204 = vmatpush1.msra.mxu0 %v4201
      %4205 = vmatprep.subr.mxu0 0.0
      %4206 = vmatpush1.msra.mxu0 0.0
      %4207 = vmatprep.subr.mxu0 0.0
      %4208 = vmatpush1.msra.mxu0 0.0
      %4209 = vmatprep.subr.mxu0 0.0
      %4210 = vmatpush1.msra.mxu0 0.0
      %4211 = vmatprep.subr.mxu0 0.0
      %4212 = vmatpush1.msra.mxu0 0.0
      %4213 = vmatprep.subr.mxu0 0.0
      %4214 = vmatpush1.msra.mxu0 0.0
      %4215 = vmatprep.subr.mxu0 0.0
      %4216 = vmatpush1.msra.mxu0 0.0
      %4217 = vmatprep.subr.mxu0 0.0
      %4218 = vmatpush1.msra.mxu0 0.0
      %4219 = vmatprep.subr.mxu0 0.0
      %4220 = vmatpush1.msra.mxu0 0.0
      %4221 = vmatprep.subr.mxu0 0.0
      %4222 = vmatpush1.msra.mxu0 0.0
      %4223 = vmatprep.subr.mxu0 0.0
      %4224 = vmatpush1.msra.mxu0 0.0
      %4225 = vmatprep.subr.mxu0 0.0
      %4226 = vmatpush1.msra.mxu0 0.0
      %4227 = vmatprep.subr.mxu0 0.0
      %4228 = vmatpush1.msra.mxu0 0.0
      %4229 = vmatprep.subr.mxu0 0.0
      %4230 = vmatpush1.msra.mxu0 0.0
      %4231 = vmatprep.subr.mxu0 0.0
      %4232 = vmatpush1.msra.mxu0 0.0
      %4233 = vmatprep.subr.mxu0 0.0
      %4234 = vmatpush1.msra.mxu0 0.0
      %4235 = vmatprep.subr.mxu0 0.0
      %4236 = vmatpush1.msra.mxu0 0.0
      %4237 = vmatprep.subr.mxu0 0.0
      %4238 = vmatpush1.msra.mxu0 0.0
      %4239 = vmatprep.subr.mxu0 0.0
      %4240 = vmatpush1.msra.mxu0 0.0
      %4241 = vmatprep.subr.mxu0 0.0
      %4242 = vmatpush1.msra.mxu0 0.0
      %4243 = vmatprep.subr.mxu0 0.0
      %4244 = vmatpush1.msra.mxu0 0.0
      %4245 = vmatprep.subr.mxu0 0.0
      %4246 = vmatpush1.msra.mxu0 0.0
      %4247 = vmatprep.subr.mxu0 0.0
      %4248 = vmatpush1.msra.mxu0 0.0
      %4249 = vmatprep.subr.mxu0 0.0
      %4250 = vmatpush1.msra.mxu0 0.0
      %4251 = vmatprep.subr.mxu0 0.0
      %4252 = vmatpush1.msra.mxu0 0.0
      %4253 = vmatprep.subr.mxu0 0.0
      %4254 = vmatpush1.msra.mxu0 0.0
      %4255 = vmatprep.subr.mxu0 0.0
      %4256 = vmatpush1.msra.mxu0 0.0
      %4257 = vmatprep.subr.mxu0 0.0
      %4258 = vmatpush1.msra.mxu0 0.0
      %4259 = vmatprep.subr.mxu0 0.0
      %4260 = vmatpush1.msra.mxu0 0.0
      %4261 = vmatprep.subr.mxu0 0.0
      %4262 = vmatpush1.msra.mxu0 0.0
      %4263 = vmatprep.subr.mxu0 0.0
      %4264 = vmatpush1.msra.mxu0 0.0
      %4265 = vmatprep.subr.mxu0 0.0
      %4266 = vmatpush1.msra.mxu0 0.0
      %4267 = vmatprep.mubr.f32.mxu0 0.0
      %4268 = vmatmul.mubr.f32.gmra.mrb[0].mxu0 %v3906
      %v4269 = vpop.f32.mrb[0].mxu0
      %v4270 = vadd.f32 0.0, %v4269
      %v4271 = vpop.f32.mrb[0].mxu0
      %4272 = vdwg.mxu0
      %v4274 = vsel %vm3827, %v3825, 0
      %4276 = vmatprep.subr.mxu0 0.0
      %4277 = vmatpush1.msra.mxu0 %v3833
      %4278 = vmatprep.subr.mxu0 0.0
      %4279 = vmatpush1.msra.mxu0 0.0
      %4280 = vmatprep.subr.mxu0 0.0
      %4281 = vmatpush1.msra.mxu0 0.0
      %4282 = vmatprep.subr.mxu0 0.0
      %4283 = vmatpush1.msra.mxu0 0.0
      %4284 = vmatprep.subr.mxu0 0.0
      %4285 = vmatpush1.msra.mxu0 0.0
      %4286 = vmatprep.subr.mxu0 0.0
      %4287 = vmatpush1.msra.mxu0 0.0
      %4288 = vmatprep.subr.mxu0 0.0
      %4289 = vmatpush1.msra.mxu0 0.0
      %4290 = vmatprep.subr.mxu0 0.0
      %4291 = vmatpush1.msra.mxu0 0.0
      %4292 = vmatprep.subr.mxu0 0.0
      %4293 = vmatpush1.msra.mxu0 0.0
      %4294 = vmatprep.subr.mxu0 0.0
      %4295 = vmatpush1.msra.mxu0 0.0
      %4296 = vmatprep.subr.mxu0 0.0
      %4297 = vmatpush1.msra.mxu0 0.0
      %4298 = vmatprep.subr.mxu0 0.0
      %4299 = vmatpush1.msra.mxu0 0.0
      %4300 = vmatprep.subr.mxu0 0.0
      %4301 = vmatpush1.msra.mxu0 0.0
      %4302 = vmatprep.subr.mxu0 0.0
      %4303 = vmatpush1.msra.mxu0 0.0
      %4304 = vmatprep.subr.mxu0 0.0
      %4305 = vmatpush1.msra.mxu0 0.0
      %4306 = vmatprep.subr.mxu0 0.0
      %4307 = vmatpush1.msra.mxu0 0.0
      %4308 = vmatprep.subr.mxu0 0.0
      %4309 = vmatpush1.msra.mxu0 0.0
      %4310 = vmatprep.subr.mxu0 0.0
      %4311 = vmatpush1.msra.mxu0 0.0
      %4312 = vmatprep.subr.mxu0 0.0
      %4313 = vmatpush1.msra.mxu0 0.0
      %4314 = vmatprep.subr.mxu0 0.0
      %4315 = vmatpush1.msra.mxu0 0.0
      %4316 = vmatprep.subr.mxu0 0.0
      %4317 = vmatpush1.msra.mxu0 0.0
      %4318 = vmatprep.subr.mxu0 0.0
      %4319 = vmatpush1.msra.mxu0 0.0
      %4320 = vmatprep.subr.mxu0 0.0
      %4321 = vmatpush1.msra.mxu0 0.0
      %4322 = vmatprep.subr.mxu0 0.0
      %4323 = vmatpush1.msra.mxu0 0.0
      %4324 = vmatprep.subr.mxu0 0.0
      %4325 = vmatpush1.msra.mxu0 0.0
      %4326 = vmatprep.subr.mxu0 0.0
      %4327 = vmatpush1.msra.mxu0 0.0
      %4328 = vmatprep.subr.mxu0 0.0
      %4329 = vmatpush1.msra.mxu0 0.0
      %4330 = vmatprep.subr.mxu0 0.0
      %4331 = vmatpush1.msra.mxu0 0.0
      %4332 = vmatprep.subr.mxu0 0.0
      %4333 = vmatpush1.msra.mxu0 0.0
      %4334 = vmatprep.subr.mxu0 0.0
      %4335 = vmatpush1.msra.mxu0 0.0
      %4336 = vmatprep.subr.mxu0 0.0
      %4337 = vmatpush1.msra.mxu0 0.0
      %4338 = vmatprep.subr.mxu0 0.0
      %4339 = vmatpush1.msra.mxu0 0.0
      %4340 = vmatprep.mubr.f32.mxu0 0.0
      %4341 = vmatmul.mubr.f32.gmra.mrb[0].mxu0 %v4274
      %v4342 = vpop.f32.mrb[0].mxu0
      %v4343 = vadd.f32 0.0, %v4342
      %v4344 = vpop.f32.mrb[0].mxu0
      %4345 = vdwg.mxu0
      %v4347 = vsel %vm3831, %v4343, 0
      %4349 = vmatprep.subr.mxu0 0.0
      %4350 = vmatpush1.msra.mxu0 %v4347
      %4351 = vmatprep.subr.mxu0 0.0
      %4352 = vmatpush1.msra.mxu0 0.0
      %4353 = vmatprep.subr.mxu0 0.0
      %4354 = vmatpush1.msra.mxu0 0.0
      %4355 = vmatprep.subr.mxu0 0.0
      %4356 = vmatpush1.msra.mxu0 0.0
      %4357 = vmatprep.subr.mxu0 0.0
      %4358 = vmatpush1.msra.mxu0 0.0
      %4359 = vmatprep.subr.mxu0 0.0
      %4360 = vmatpush1.msra.mxu0 0.0
      %4361 = vmatprep.subr.mxu0 0.0
      %4362 = vmatpush1.msra.mxu0 0.0
      %4363 = vmatprep.subr.mxu0 0.0
      %4364 = vmatpush1.msra.mxu0 0.0
      %4365 = vmatprep.subr.mxu0 0.0
      %4366 = vmatpush1.msra.mxu0 0.0
      %4367 = vmatprep.subr.mxu0 0.0
      %4368 = vmatpush1.msra.mxu0 0.0
      %4369 = vmatprep.subr.mxu0 0.0
      %4370 = vmatpush1.msra.mxu0 0.0
      %4371 = vmatprep.subr.mxu0 0.0
      %4372 = vmatpush1.msra.mxu0 0.0
      %4373 = vmatprep.subr.mxu0 0.0
      %4374 = vmatpush1.msra.mxu0 0.0
      %4375 = vmatprep.subr.mxu0 0.0
      %4376 = vmatpush1.msra.mxu0 0.0
      %4377 = vmatprep.subr.mxu0 0.0
      %4378 = vmatpush1.msra.mxu0 0.0
      %4379 = vmatprep.subr.mxu0 0.0
      %4380 = vmatpush1.msra.mxu0 0.0
      %4381 = vmatprep.subr.mxu0 0.0
      %4382 = vmatpush1.msra.mxu0 0.0
      %4383 = vmatprep.subr.mxu0 0.0
      %4384 = vmatpush1.msra.mxu0 0.0
      %4385 = vmatprep.subr.mxu0 0.0
      %4386 = vmatpush1.msra.mxu0 0.0
      %4387 = vmatprep.subr.mxu0 0.0
      %4388 = vmatpush1.msra.mxu0 0.0
      %4389 = vmatprep.subr.mxu0 0.0
      %4390 = vmatpush1.msra.mxu0 0.0
      %4391 = vmatprep.subr.mxu0 0.0
      %4392 = vmatpush1.msra.mxu0 0.0
      %4393 = vmatprep.subr.mxu0 0.0
      %4394 = vmatpush1.msra.mxu0 0.0
      %4395 = vmatprep.subr.mxu0 0.0
      %4396 = vmatpush1.msra.mxu0 0.0
      %4397 = vmatprep.subr.mxu0 0.0
      %4398 = vmatpush1.msra.mxu0 0.0
      %4399 = vmatprep.subr.mxu0 0.0
      %4400 = vmatpush1.msra.mxu0 0.0
      %4401 = vmatprep.subr.mxu0 0.0
      %4402 = vmatpush1.msra.mxu0 0.0
      %4403 = vmatprep.subr.mxu0 0.0
      %4404 = vmatpush1.msra.mxu0 0.0
      %4405 = vmatprep.subr.mxu0 0.0
      %4406 = vmatpush1.msra.mxu0 0.0
      %4407 = vmatprep.subr.mxu0 0.0
      %4408 = vmatpush1.msra.mxu0 0.0
      %4409 = vmatprep.subr.mxu0 0.0
      %4410 = vmatpush1.msra.mxu0 0.0
      %4411 = vmatprep.subr.mxu0 0.0
      %4412 = vmatpush1.msra.mxu0 0.0
      %4413 = vmatprep.mubr.f32.mxu0 0.0
      %4414 = vmatmul.mubr.f32.gmra.mrb[0].mxu0 %v3906
      %v4415 = vpop.f32.mrb[0].mxu0
      %v4416 = vadd.f32 0.0, %v4415
      %v4417 = vpop.f32.mrb[0].mxu0
      %4418 = vdwg.mxu0
      %v4420 = vsel %vm3827, %v3826, 0
      %4422 = vmatprep.subr.mxu0 0.0
      %4423 = vmatpush1.msra.mxu0 %v3833
      %4424 = vmatprep.subr.mxu0 0.0
      %4425 = vmatpush1.msra.mxu0 0.0
      %4426 = vmatprep.subr.mxu0 0.0
      %4427 = vmatpush1.msra.mxu0 0.0
      %4428 = vmatprep.subr.mxu0 0.0
      %4429 = vmatpush1.msra.mxu0 0.0
      %4430 = vmatprep.subr.mxu0 0.0
      %4431 = vmatpush1.msra.mxu0 0.0
      %4432 = vmatprep.subr.mxu0 0.0
      %4433 = vmatpush1.msra.mxu0 0.0
      %4434 = vmatprep.subr.mxu0 0.0
      %4435 = vmatpush1.msra.mxu0 0.0
      %4436 = vmatprep.subr.mxu0 0.0
      %4437 = vmatpush1.msra.mxu0 0.0
      %4438 = vmatprep.subr.mxu0 0.0
      %4439 = vmatpush1.msra.mxu0 0.0
      %4440 = vmatprep.subr.mxu0 0.0
      %4441 = vmatpush1.msra.mxu0 0.0
      %4442 = vmatprep.subr.mxu0 0.0
      %4443 = vmatpush1.msra.mxu0 0.0
      %4444 = vmatprep.subr.mxu0 0.0
      %4445 = vmatpush1.msra.mxu0 0.0
      %4446 = vmatprep.subr.mxu0 0.0
      %4447 = vmatpush1.msra.mxu0 0.0
      %4448 = vmatprep.subr.mxu0 0.0
      %4449 = vmatpush1.msra.mxu0 0.0
      %4450 = vmatprep.subr.mxu0 0.0
      %4451 = vmatpush1.msra.mxu0 0.0
      %4452 = vmatprep.subr.mxu0 0.0
      %4453 = vmatpush1.msra.mxu0 0.0
      %4454 = vmatprep.subr.mxu0 0.0
      %4455 = vmatpush1.msra.mxu0 0.0
      %4456 = vmatprep.subr.mxu0 0.0
      %4457 = vmatpush1.msra.mxu0 0.0
      %4458 = vmatprep.subr.mxu0 0.0
      %4459 = vmatpush1.msra.mxu0 0.0
      %4460 = vmatprep.subr.mxu0 0.0
      %4461 = vmatpush1.msra.mxu0 0.0
      %4462 = vmatprep.subr.mxu0 0.0
      %4463 = vmatpush1.msra.mxu0 0.0
      %4464 = vmatprep.subr.mxu0 0.0
      %4465 = vmatpush1.msra.mxu0 0.0
      %4466 = vmatprep.subr.mxu0 0.0
      %4467 = vmatpush1.msra.mxu0 0.0
      %4468 = vmatprep.subr.mxu0 0.0
      %4469 = vmatpush1.msra.mxu0 0.0
      %4470 = vmatprep.subr.mxu0 0.0
      %4471 = vmatpush1.msra.mxu0 0.0
      %4472 = vmatprep.subr.mxu0 0.0
      %4473 = vmatpush1.msra.mxu0 0.0
      %4474 = vmatprep.subr.mxu0 0.0
      %4475 = vmatpush1.msra.mxu0 0.0
      %4476 = vmatprep.subr.mxu0 0.0
      %4477 = vmatpush1.msra.mxu0 0.0
      %4478 = vmatprep.subr.mxu0 0.0
      %4479 = vmatpush1.msra.mxu0 0.0
      %4480 = vmatprep.subr.mxu0 0.0
      %4481 = vmatpush1.msra.mxu0 0.0
      %4482 = vmatprep.subr.mxu0 0.0
      %4483 = vmatpush1.msra.mxu0 0.0
      %4484 = vmatprep.subr.mxu0 0.0
      %4485 = vmatpush1.msra.mxu0 0.0
      %4486 = vmatprep.mubr.f32.mxu0 0.0
      %4487 = vmatmul.mubr.f32.gmra.mrb[0].mxu0 %v4420
      %v4488 = vpop.f32.mrb[0].mxu0
      %v4489 = vadd.f32 0.0, %v4488
      %v4490 = vpop.f32.mrb[0].mxu0
      %4491 = vdwg.mxu0
      %v4493 = vsel %vm3831, %v4489, 0
      %4495 = vmatprep.subr.mxu0 0.0
      %4496 = vmatpush1.msra.mxu0 %v4493
      %4497 = vmatprep.subr.mxu0 0.0
      %4498 = vmatpush1.msra.mxu0 0.0
      %4499 = vmatprep.subr.mxu0 0.0
      %4500 = vmatpush1.msra.mxu0 0.0
      %4501 = vmatprep.subr.mxu0 0.0
      %4502 = vmatpush1.msra.mxu0 0.0
      %4503 = vmatprep.subr.mxu0 0.0
      %4504 = vmatpush1.msra.mxu0 0.0
      %4505 = vmatprep.subr.mxu0 0.0
      %4506 = vmatpush1.msra.mxu0 0.0
      %4507 = vmatprep.subr.mxu0 0.0
      %4508 = vmatpush1.msra.mxu0 0.0
      %4509 = vmatprep.subr.mxu0 0.0
      %4510 = vmatpush1.msra.mxu0 0.0
      %4511 = vmatprep.subr.mxu0 0.0
      %4512 = vmatpush1.msra.mxu0 0.0
      %4513 = vmatprep.subr.mxu0 0.0
      %4514 = vmatpush1.msra.mxu0 0.0
      %4515 = vmatprep.subr.mxu0 0.0
      %4516 = vmatpush1.msra.mxu0 0.0
      %4517 = vmatprep.subr.mxu0 0.0
      %4518 = vmatpush1.msra.mxu0 0.0
      %4519 = vmatprep.subr.mxu0 0.0
      %4520 = vmatpush1.msra.mxu0 0.0
      %4521 = vmatprep.subr.mxu0 0.0
      %4522 = vmatpush1.msra.mxu0 0.0
      %4523 = vmatprep.subr.mxu0 0.0
      %4524 = vmatpush1.msra.mxu0 0.0
      %4525 = vmatprep.subr.mxu0 0.0
      %4526 = vmatpush1.msra.mxu0 0.0
      %4527 = vmatprep.subr.mxu0 0.0
      %4528 = vmatpush1.msra.mxu0 0.0
      %4529 = vmatprep.subr.mxu0 0.0
      %4530 = vmatpush1.msra.mxu0 0.0
      %4531 = vmatprep.subr.mxu0 0.0
      %4532 = vmatpush1.msra.mxu0 0.0
      %4533 = vmatprep.subr.mxu0 0.0
      %4534 = vmatpush1.msra.mxu0 0.0
      %4535 = vmatprep.subr.mxu0 0.0
      %4536 = vmatpush1.msra.mxu0 0.0
      %4537 = vmatprep.subr.mxu0 0.0
      %4538 = vmatpush1.msra.mxu0 0.0
      %4539 = vmatprep.subr.mxu0 0.0
      %4540 = vmatpush1.msra.mxu0 0.0
      %4541 = vmatprep.subr.mxu0 0.0
      %4542 = vmatpush1.msra.mxu0 0.0
      %4543 = vmatprep.subr.mxu0 0.0
      %4544 = vmatpush1.msra.mxu0 0.0
      %4545 = vmatprep.subr.mxu0 0.0
      %4546 = vmatpush1.msra.mxu0 0.0
      %4547 = vmatprep.subr.mxu0 0.0
      %4548 = vmatpush1.msra.mxu0 0.0
      %4549 = vmatprep.subr.mxu0 0.0
      %4550 = vmatpush1.msra.mxu0 0.0
      %4551 = vmatprep.subr.mxu0 0.0
      %4552 = vmatpush1.msra.mxu0 0.0
      %4553 = vmatprep.subr.mxu0 0.0
      %4554 = vmatpush1.msra.mxu0 0.0
      %4555 = vmatprep.subr.mxu0 0.0
      %4556 = vmatpush1.msra.mxu0 0.0
      %4557 = vmatprep.subr.mxu0 0.0
      %4558 = vmatpush1.msra.mxu0 0.0
      %4559 = vmatprep.mubr.f32.mxu0 0.0
      %4560 = vmatmul.mubr.f32.gmra.mrb[0].mxu0 %v3906
      %v4561 = vpop.f32.mrb[0].mxu0
      %v4562 = vadd.f32 0.0, %v4561
      %v4563 = vpop.f32.mrb[0].mxu0
      %4564 = vdwg.mxu0
      %v4565 = vmul.f32 %v3978, %v3978
      %v4566 = vsub.f32 %v4270, %v4565
      %v4567 = vmul.f32 %v4124, %v4124
      %v4568 = vsub.f32 %v4416, %v4567
      %v4569 = vmul.f32 %v3978, %v4124
      %v4570 = vsub.f32 %v4562, %v4569
      %v4571 = vmul.f32 %v4570, 2.0
      %v4572 = vadd.f32 %v4571, 0.0009
      %v4573 = vadd.f32 %v4566, %v4568
      %v4574 = vadd.f32 %v4573, 0.0009
      %v4575 = vrcp.pop %v4574
      %v4576 = vmul.f32 %v4572, %v4575
      %v4577 = vld [vmem:[%s20] sm:$0xff]
      %v4578 = vld [vmem:[%s20 + $0x8] sm:$0xff]
      %v4579 = vld [vmem:[%s20 + $0x10] sm:$0xff]
      %v4580 = vld [vmem:[%s20 + $0x18] sm:$0xff]
      %v4581 = vld [vmem:[%s21] sm:$0xf]
      %v4583 = vsel %vm3827, %v4577, 0
      %v4586 = vsel %vm3827, %v4578, 0
      %v4589 = vsel %vm3827, %v4579, 0
      %v4592 = vsel %vm3827, %v4580, 0
      %v4595 = vsel %vm3831, %v4576, 0
      %4597 = vmatprep.subr.mxu0 0.0
      %4598 = vmatpush1.msra.mxu0 %v4595
      %4599 = vmatprep.subr.mxu0 0.0
      %4600 = vmatpush1.msra.mxu0 0.0
      %4601 = vmatprep.subr.mxu0 0.0
      %4602 = vmatpush1.msra.mxu0 0.0
      %4603 = vmatprep.subr.mxu0 0.0
      %4604 = vmatpush1.msra.mxu0 0.0
      %4605 = vmatprep.subr.mxu0 0.0
      %4606 = vmatpush1.msra.mxu0 0.0
      %4607 = vmatprep.subr.mxu0 0.0
      %4608 = vmatpush1.msra.mxu0 0.0
      %4609 = vmatprep.subr.mxu0 0.0
      %4610 = vmatpush1.msra.mxu0 0.0
      %4611 = vmatprep.subr.mxu0 0.0
      %4612 = vmatpush1.msra.mxu0 0.0
      %4613 = vmatprep.subr.mxu0 0.0
      %4614 = vmatpush1.msra.mxu0 0.0
      %4615 = vmatprep.subr.mxu0 0.0
      %4616 = vmatpush1.msra.mxu0 0.0
      %4617 = vmatprep.subr.mxu0 0.0
      %4618 = vmatpush1.msra.mxu0 0.0
      %4619 = vmatprep.subr.mxu0 0.0
      %4620 = vmatpush1.msra.mxu0 0.0
      %4621 = vmatprep.subr.mxu0 0.0
      %4622 = vmatpush1.msra.mxu0 0.0
      %4623 = vmatprep.subr.mxu0 0.0
      %4624 = vmatpush1.msra.mxu0 0.0
      %4625 = vmatprep.subr.mxu0 0.0
      %4626 = vmatpush1.msra.mxu0 0.0
      %4627 = vmatprep.subr.mxu0 0.0
      %4628 = vmatpush1.msra.mxu0 0.0
      %4629 = vmatprep.subr.mxu0 0.0
      %4630 = vmatpush1.msra.mxu0 0.0
      %4631 = vmatprep.subr.mxu0 0.0
      %4632 = vmatpush1.msra.mxu0 0.0
      %4633 = vmatprep.subr.mxu0 0.0
      %4634 = vmatpush1.msra.mxu0 0.0
      %4635 = vmatprep.subr.mxu0 0.0
      %4636 = vmatpush1.msra.mxu0 0.0
      %4637 = vmatprep.subr.mxu0 0.0
      %4638 = vmatpush1.msra.mxu0 0.0
      %4639 = vmatprep.subr.mxu0 0.0
      %4640 = vmatpush1.msra.mxu0 0.0
      %4641 = vmatprep.subr.mxu0 0.0
      %4642 = vmatpush1.msra.mxu0 0.0
      %4643 = vmatprep.subr.mxu0 0.0
      %4644 = vmatpush1.msra.mxu0 0.0
      %4645 = vmatprep.subr.mxu0 0.0
      %4646 = vmatpush1.msra.mxu0 0.0
      %4647 = vmatprep.subr.mxu0 0.0
      %4648 = vmatpush1.msra.mxu0 0.0
      %4649 = vmatprep.subr.mxu0 0.0
      %4650 = vmatpush1.msra.mxu0 0.0
      %4651 = vmatprep.subr.mxu0 0.0
      %4652 = vmatpush1.msra.mxu0 0.0
      %4653 = vmatprep.subr.mxu0 0.0
      %4654 = vmatpush1.msra.mxu0 0.0
      %4655 = vmatprep.subr.mxu0 0.0
      %4656 = vmatpush1.msra.mxu0 0.0
      %4657 = vmatprep.subr.mxu0 0.0
      %4658 = vmatpush1.msra.mxu0 0.0
      %4659 = vmatprep.subr.mxu0 0.0
      %4660 = vmatpush1.msra.mxu0 0.0
      %4661 = vmatprep.mubr.f32.mxu0 0.0
      %4662 = vmatmul.mubr.f32.gmra.mrb[0].mxu0 %v4583
      %v4663 = vpop.f32.mrb[0].mxu0
      %v4664 = vadd.f32 0.0, %v4663
      %v4665 = vpop.f32.mrb[0].mxu0
      %4666 = vmatprep.mubr.f32.mxu0 0.0
      %4667 = vmatmul.mubr.f32.gmra.mrb[0].mxu0 %v4586
      %v4668 = vpop.f32.mrb[0].mxu0
      %v4669 = vadd.f32 0.0, %v4668
      %v4670 = vpop.f32.mrb[0].mxu0
      %4671 = vmatprep.mubr.f32.mxu0 0.0
      %4672 = vmatmul.mubr.f32.gmra.mrb[0].mxu0 %v4589
      %v4673 = vpop.f32.mrb[0].mxu0
      %v4674 = vadd.f32 0.0, %v4673
      %v4675 = vpop.f32.mrb[0].mxu0
      %4676 = vmatprep.mubr.f32.mxu0 0.0
      %4677 = vmatmul.mubr.f32.gmra.mrb[0].mxu0 %v4592
      %v4678 = vpop.f32.mrb[0].mxu0
      %v4679 = vadd.f32 0.0, %v4678
      %v4680 = vpop.f32.mrb[0].mxu0
      %4681 = vdwg.mxu0
      %v4683 = vsel %vm3827, %v4664, 0
      %v4686 = vsel %vm3827, %v4669, 0
      %v4689 = vsel %vm3827, %v4674, 0
      %v4692 = vsel %vm3827, %v4679, 0
      %v4695 = vsel %vm3831, %v4581, 0
      %4697 = vmatprep.subr.mxu0 0.0
      %4698 = vmatpush1.msra.mxu0 %v4695
      %4699 = vmatprep.subr.mxu0 0.0
      %4700 = vmatpush1.msra.mxu0 0.0
      %4701 = vmatprep.subr.mxu0 0.0
      %4702 = vmatpush1.msra.mxu0 0.0
      %4703 = vmatprep.subr.mxu0 0.0
      %4704 = vmatpush1.msra.mxu0 0.0
      %4705 = vmatprep.subr.mxu0 0.0
      %4706 = vmatpush1.msra.mxu0 0.0
      %4707 = vmatprep.subr.mxu0 0.0
      %4708 = vmatpush1.msra.mxu0 0.0
      %4709 = vmatprep.subr.mxu0 0.0
      %4710 = vmatpush1.msra.mxu0 0.0
      %4711 = vmatprep.subr.mxu0 0.0
      %4712 = vmatpush1.msra.mxu0 0.0
      %4713 = vmatprep.subr.mxu0 0.0
      %4714 = vmatpush1.msra.mxu0 0.0
      %4715 = vmatprep.subr.mxu0 0.0
      %4716 = vmatpush1.msra.mxu0 0.0
      %4717 = vmatprep.subr.mxu0 0.0
      %4718 = vmatpush1.msra.mxu0 0.0
      %4719 = vmatprep.subr.mxu0 0.0
      %4720 = vmatpush1.msra.mxu0 0.0
      %4721 = vmatprep.subr.mxu0 0.0
      %4722 = vmatpush1.msra.mxu0 0.0
      %4723 = vmatprep.subr.mxu0 0.0
      %4724 = vmatpush1.msra.mxu0 0.0
      %4725 = vmatprep.subr.mxu0 0.0
      %4726 = vmatpush1.msra.mxu0 0.0
      %4727 = vmatprep.subr.mxu0 0.0
      %4728 = vmatpush1.msra.mxu0 0.0
      %4729 = vmatprep.subr.mxu0 0.0
      %4730 = vmatpush1.msra.mxu0 0.0
      %4731 = vmatprep.subr.mxu0 0.0
      %4732 = vmatpush1.msra.mxu0 0.0
      %4733 = vmatprep.subr.mxu0 0.0
      %4734 = vmatpush1.msra.mxu0 0.0
      %4735 = vmatprep.subr.mxu0 0.0
      %4736 = vmatpush1.msra.mxu0 0.0
      %4737 = vmatprep.subr.mxu0 0.0
      %4738 = vmatpush1.msra.mxu0 0.0
      %4739 = vmatprep.subr.mxu0 0.0
      %4740 = vmatpush1.msra.mxu0 0.0
      %4741 = vmatprep.subr.mxu0 0.0
      %4742 = vmatpush1.msra.mxu0 0.0
      %4743 = vmatprep.subr.mxu0 0.0
      %4744 = vmatpush1.msra.mxu0 0.0
      %4745 = vmatprep.subr.mxu0 0.0
      %4746 = vmatpush1.msra.mxu0 0.0
      %4747 = vmatprep.subr.mxu0 0.0
      %4748 = vmatpush1.msra.mxu0 0.0
      %4749 = vmatprep.subr.mxu0 0.0
      %4750 = vmatpush1.msra.mxu0 0.0
      %4751 = vmatprep.subr.mxu0 0.0
      %4752 = vmatpush1.msra.mxu0 0.0
      %4753 = vmatprep.subr.mxu0 0.0
      %4754 = vmatpush1.msra.mxu0 0.0
      %4755 = vmatprep.subr.mxu0 0.0
      %4756 = vmatpush1.msra.mxu0 0.0
      %4757 = vmatprep.subr.mxu0 0.0
      %4758 = vmatpush1.msra.mxu0 0.0
      %4759 = vmatprep.subr.mxu0 0.0
      %4760 = vmatpush1.msra.mxu0 0.0
      %4761 = vmatprep.mubr.f32.mxu0 0.0
      %4762 = vmatmul.mubr.f32.gmra.mrb[0].mxu0 %v4683
      %v4763 = vpop.f32.mrb[0].mxu0
      %v4764 = vadd.f32 0.0, %v4763
      %v4765 = vpop.f32.mrb[0].mxu0
      %4766 = vmatprep.mubr.f32.mxu0 0.0
      %4767 = vmatmul.mubr.f32.gmra.mrb[0].mxu0 %v4686
      %v4768 = vpop.f32.mrb[0].mxu0
      %v4769 = vadd.f32 0.0, %v4768
      %v4770 = vpop.f32.mrb[0].mxu0
      %4771 = vmatprep.mubr.f32.mxu0 0.0
      %4772 = vmatmul.mubr.f32.gmra.mrb[0].mxu0 %v4689
      %v4773 = vpop.f32.mrb[0].mxu0
      %v4774 = vadd.f32 0.0, %v4773
      %v4775 = vpop.f32.mrb[0].mxu0
      %4776 = vmatprep.mubr.f32.mxu0 0.0
      %4777 = vmatmul.mubr.f32.gmra.mrb[0].mxu0 %v4692
      %v4778 = vpop.f32.mrb[0].mxu0
      %v4779 = vadd.f32 0.0, %v4778
      %v4780 = vpop.f32.mrb[0].mxu0
      %4781 = vdwg.mxu0
      %v4782 = vadd.f32 %v3527, %v4764
      %v4783 = vadd.f32 %v3528, %v4769
      %v4784 = vadd.f32 %v3529, %v4774
      %v4785 = vadd.f32 %v3530, %v4779
      %v4786 = vmul.f32 %v4782, 0.25
      %v4787 = vmul.f32 %v4783, 0.25
      %v4788 = vmul.f32 %v4784, 0.25
      %v4789 = vmul.f32 %v4785, 0.25
      %v4790 = vmul.f32 %v4786, %v1464
      %v4791 = vmul.f32 %v4787, %v1466
      %v4792 = vmul.f32 %v4788, %v1468
      %v4793 = vmul.f32 %v4789, %v1470
      %v4794 = vsub.f32 1.0, %v4790
      %v4795 = vsub.f32 1.0, %v4791
      %v4796 = vsub.f32 1.0, %v4792
      %v4797 = vsub.f32 1.0, %v4793
      %4798 = vst.msk [vmem:[%s703] sm:$0xff] %vm732, %v4794
      %4799 = vst.msk [vmem:[%s703 + $0x8] sm:$0xff] %vm732, %v4795
      %4800 = vst.msk [vmem:[%s703 + $0x10] sm:$0xff] %vm732, %v4796
      %4801 = vst.msk [vmem:[%s703 + $0x18] sm:$0xff] %vm732, %v4797
      %p4802 = scmp.lt.s32.totalorder %s33, 5
      %s4803 = scalar_select %p4802, %s33, 5
      %s4804 = smul.addr %s4803, 4
      %s4805 = smul.addr %s4804, 8
      %s4806 = scalar_lea.vmem %s22, %s4805
      // Predicated region
      $region109: #{msssim_forward.1} parent=107 // pred_check
        %p4807 = pneg %p523
      $region110: #{msssim_forward.1} parent=107 // pred_check_branch
        %4809 = sbr.rel (%p4807) target = $region112
      $region111: #{msssim_forward.1} parent=107 // pred_region
        _
      $region112: #{msssim_forward.1} parent=107 // pred_fallthru
        _
    $region108: #{msssim_forward.1} parent=5 // pred_fallthru
      _
    %p4810 = scmp.le.s32.totalorder 2, %s28
    // Predicated region
    $region113: #{msssim_forward.1} parent=5 // pred_check
      %p4811 = pneg %p4810
    $region114: #{msssim_forward.1} parent=5 // pred_check_branch
      %4813 = sbr.rel (%p4811) target = $region116
    $region115: #{msssim_forward.1} parent=5 // pred_region
      %s4814 = ssub.s32 %s28, 2
      // Predicated region
      $region117: #{msssim_forward.1} parent=115 // pred_check
        %p4815 = pneg %p529
      $region118: #{msssim_forward.1} parent=115 // pred_check_branch
        %4817 = sbr.rel (%p4815) target = $region120
      $region119: #{msssim_forward.1} parent=115 // pred_region
        %p4818 = scmp.lt.s32.totalorder %s34, 5
        %s4819 = scalar_select %p4818, %s34, 5
        %s4820 = smul.addr %s4819, 4
        %s4821 = smul.addr %s4820, 8
        %s4822 = scalar_lea.vmem %s22, %s4821
      $region120: #{msssim_forward.1} parent=115 // pred_fallthru
        _
    $region116: #{msssim_forward.1} parent=5 // pred_fallthru
      _
  $region6: #{msssim_forward.1} parent=0 // loop_footer
    %s32 = sadd.s32 1, %s28
  $region7: #{msssim_forward.1} parent=0 // loop_footer_branch
    %27 = sbr.rel target = $region3
  $region8: #{msssim_forward.1} parent=0 // loop_exit
    _

</llo_original>
